<compile_context>
chip_gen: v6e
topology: v6e:2x2x1
jax: 0.10.0
libtpu: 0.0.40
codegen_flags: <defaults>
</compile_context>

<pallas_src>
import jax
import jax.numpy as jnp
from jax.experimental import pallas as pl
from jax.experimental.pallas import tpu as pltpu


def _lstm_recurrent_kernel(gx_ref, whh_ref, out_ref, h_sc, c_sc):
    """One grid step = one chunk of Tc time steps of a single LSTM layer.

    gx_ref : (Tc, 4, Bb, H) f32       precomputed x @ W_ih + (b_ih + b_hh), per gate
    whh_ref: (4, H, H)      f32/bf16  per-gate recurrent weights (input-major)
    out_ref: (Tc, Bb, H)              hidden states for this time chunk
    h_sc   : (Bb, H) f32              recurrent h, carried across time chunks
    c_sc   : (Bb, H) f32              recurrent c, carried across time chunks
    """
    # Reset state at the first time chunk of every batch block.
    @pl.when(pl.program_id(1) == 0)
    def _():
        h_sc[...] = jnp.zeros_like(h_sc)
        c_sc[...] = jnp.zeros_like(c_sc)

    # Hoist the (constant, grid-invariant) per-gate weight loads out of the loop.
    w_i = whh_ref[0]
    w_f = whh_ref[1]
    w_g = whh_ref[2]
    w_o = whh_ref[3]

    tc = gx_ref.shape[0]
    h = h_sc[...]
    c = c_sc[...]

    # Fully unrolled inner time loop (Tc is a small static chunk size); the
    # recurrent state stays in vregs for the whole chunk.  Live ranges are
    # naturally short because each step depends on the previous one.
    for s in range(tc):
        hb = h.astype(whh_ref.dtype)          # MXU operand (bf16 on the fast path)
        gx = gx_ref[s]                        # (4, Bb, H) f32
        gi = gx[0] + jnp.dot(hb, w_i, preferred_element_type=jnp.float32)
        gf = gx[1] + jnp.dot(hb, w_f, preferred_element_type=jnp.float32)
        gg = gx[2] + jnp.dot(hb, w_g, preferred_element_type=jnp.float32)
        go = gx[3] + jnp.dot(hb, w_o, preferred_element_type=jnp.float32)

        i = jax.nn.sigmoid(gi)
        f = jax.nn.sigmoid(gf)
        g = jnp.tanh(gg)
        o = jax.nn.sigmoid(go)

        c = f * c + i * g
        h = o * jnp.tanh(c)
        out_ref[s] = h.astype(out_ref.dtype)

    h_sc[...] = h
    c_sc[...] = c


def _pick_time_chunk(T, cap=32):
    """Largest divisor of T not exceeding `cap` (amortizes per-grid-step cost)."""
    tc = min(T, cap)
    while T % tc != 0:
        tc -= 1
    return tc


def _pick_batch_block(B):
    """Split batch across 2 TensorCores (v7x) only when blocks stay 8-aligned."""
    if B % 16 == 0:
        return B // 2
    return B


def lstm_recurrence_pallas(gx, w_hh_g, out_dtype):
    """Run the serial LSTM recurrence.

    gx     : (T, 4, B, H) f32  precomputed input projection + bias, per gate
    w_hh_g : (4, H, H)         per-gate recurrent weights (input-major)
    """
    T, G, B, H = gx.shape
    assert G == 4
    Tc = _pick_time_chunk(T)
    Bb = _pick_batch_block(B)
    nb, nt = B // Bb, T // Tc

    return pl.pallas_call(
        _lstm_recurrent_kernel,
        out_shape=jax.ShapeDtypeStruct((T, B, H), out_dtype),
        grid_spec=pltpu.PrefetchScalarGridSpec(
            num_scalar_prefetch=0,
            grid=(nb, nt),  # (parallel batch blocks, serial time chunks)
            in_specs=[
                pl.BlockSpec((Tc, 4, Bb, H), lambda b, t: (t, 0, b, 0)),
                # Constant across the grid (index map always returns the same
                # block), so Pallas only DMAs it once.
                pl.BlockSpec((4, H, H), lambda b, t: (0, 0, 0)),
            ],
            out_specs=pl.BlockSpec((Tc, Bb, H), lambda b, t: (t, b, 0)),
            scratch_shapes=[
                pltpu.VMEM((Bb, H), jnp.float32),  # h state
                pltpu.VMEM((Bb, H), jnp.float32),  # c state
            ],
        ),
        compiler_params=pltpu.CompilerParams(
            # Batch blocks are independent (megacore on v7x); time is serial.
            dimension_semantics=("parallel", "arbitrary"),
            # Conservative budget; fits v7x's smaller (64 MiB) physical VMEM.
            vmem_limit_bytes=32 * 1024 * 1024,
        ),
    )(gx, w_hh_g)


def encoder_forward(x, params):
    """Equivalent of Encoder.forward: x (B, T, input_dim) -> (B, T, hidden_dim).

    `params` is a list of per-layer (W_ih, W_hh, b_ih, b_hh) in PyTorch layout:
      W_ih (4H, D_in), W_hh (4H, H), b_ih (4H,), b_hh (4H,), gate order [i,f,g,o].
    """
    h_tm = jnp.transpose(x, (1, 0, 2)).astype(jnp.float32)  # time-major (T, B, D)
    for (w_ih, w_hh, b_ih, b_hh) in params:
        H = w_hh.shape[1]
        d_in = w_ih.shape[1]
        # Per-gate kernel layouts.
        w_ih_t = jnp.transpose(w_ih.reshape(4, H, d_in), (2, 0, 1))   # (D_in, 4, H)
        w_hh_t = jnp.transpose(w_hh.reshape(4, H, H), (0, 2, 1))      # (4, H_in, H_out)
        bias = (b_ih + b_hh).reshape(4, H)

        # Hoisted, time-parallel input projection + bias: one MXU-friendly matmul
        # over the whole sequence (no time dependence), done by plain XLA.
        gx = jnp.einsum("tbd,dgh->tgbh", h_tm, w_ih_t,
                        preferred_element_type=jnp.float32)
        gx = gx + bias[None, :, None, :]

        # bf16 recurrent weights only when H is MXU-tile sized (fast + accurate
        # enough); exact f32 otherwise (e.g. the small test size).
        rec_dtype = jnp.bfloat16 if (H % 128 == 0) else jnp.float32

        h_tm = lstm_recurrence_pallas(
            gx.astype(jnp.float32),
            w_hh_t.astype(rec_dtype),
            out_dtype=jnp.float32,
        )
    return jnp.transpose(h_tm, (1, 0, 2))  # back to batch_first


def init_lstm_params(key, input_dim, hidden_dim, num_layers):
    """PyTorch nn.LSTM-style params: uniform(-1/sqrt(H), 1/sqrt(H)), PyTorch layout."""
    k = 1.0 / (hidden_dim ** 0.5)
    params = []
    for layer in range(num_layers):
        d_in = input_dim if layer == 0 else hidden_dim
        key, k1, k2, k3, k4 = jax.random.split(key, 5)
        w_ih = jax.random.uniform(k1, (4 * hidden_dim, d_in), jnp.float32, -k, k)
        w_hh = jax.random.uniform(k2, (4 * hidden_dim, hidden_dim), jnp.float32, -k, k)
        b_ih = jax.random.uniform(k3, (4 * hidden_dim,), jnp.float32, -k, k)
        b_hh = jax.random.uniform(k4, (4 * hidden_dim,), jnp.float32, -k, k)
        params.append((w_ih, w_hh, b_ih, b_hh))
    return params


def encoder_ref(x, params):
    """Pure-JAX f32 reference (classic LSTM equations, PyTorch gate order)."""
    h_seq = jnp.transpose(x, (1, 0, 2)).astype(jnp.float32)  # (T, B, D)
    B = h_seq.shape[1]
    for (w_ih, w_hh, b_ih, b_hh) in params:
        H = w_hh.shape[1]
        b = b_ih + b_hh

        def step(carry, x_t, w_ih=w_ih, w_hh=w_hh, b=b, H=H):
            hp, cp = carry
            gates = x_t @ w_ih.T + hp @ w_hh.T + b
            i = jax.nn.sigmoid(gates[:, 0 * H:1 * H])
            f = jax.nn.sigmoid(gates[:, 1 * H:2 * H])
            g = jnp.tanh(gates[:, 2 * H:3 * H])
            o = jax.nn.sigmoid(gates[:, 3 * H:4 * H])
            c = f * cp + i * g
            hn = o * jnp.tanh(c)
            return (hn, c), hn

        init = (jnp.zeros((B, H), jnp.float32), jnp.zeros((B, H), jnp.float32))
        _, ys = jax.lax.scan(step, init, h_seq)
        h_seq = ys
    return jnp.transpose(h_seq, (1, 0, 2))


if __name__ == "__main__":
    # Small shapes consistent with Encoder(input_dim, hidden_dim, num_layers).
    batch, seq, input_dim, hidden_dim, num_layers = 2, 8, 16, 32, 2

    root = jax.random.PRNGKey(0)
    k_x, k_p = jax.random.split(root)
    x = jax.random.normal(k_x, (batch, seq, input_dim), jnp.float32)
    params = init_lstm_params(k_p, input_dim, hidden_dim, num_layers)

    fwd = jax.jit(encoder_forward)
    out = fwd(x, params)
    out = jax.block_until_ready(out)

    ref = encoder_ref(x, params)
    assert out.shape == (batch, seq, hidden_dim)
    # f32 recurrent path at this H, so the tolerance can be tight; large-H runs
    # use bf16 weights (f32 accumulation) and would need ~2e-2.
    assert jnp.allclose(out, ref, atol=1e-2, rtol=1e-2), float(
        jnp.max(jnp.abs(out - ref)))

    print("KERNEL_OK")
</pallas_src>

<mosaic_0001>
module attributes {stable_mosaic.version = 11 : i64} {
  func.func @_lstm_recurrent_kernel(%arg0: i32, %arg1: i32, %arg2: memref<8x4x2x32xf32, #tpu.memory_space<vmem>>, %arg3: memref<4x32x32xf32, #tpu.memory_space<vmem>>, %arg4: memref<8x2x32xf32, #tpu.memory_space<vmem>>, %arg5: memref<2x32xf32, #tpu.memory_space<vmem>>, %arg6: memref<2x32xf32, #tpu.memory_space<vmem>>) attributes {dimension_semantics = [#tpu.dimension_semantics<parallel>, #tpu.dimension_semantics<arbitrary>], iteration_bounds = array<i64: 1, 1>, scalar_prefetch = 0 : i64, scratch_operands = 2 : i64, tpu.core_type = #tpu.core_type<tc>, window_params = [{transform_indices = @transform_0, window_bounds = array<i64: 8, 4, 2, 32>}, {pipeline_mode = #tpu.pipeline_mode<synchronous>, transform_indices = @transform_1, window_bounds = array<i64: 4, 32, 32>}, {transform_indices = @transform_2, window_bounds = array<i64: 8, 2, 32>}]} {
    %c0_i32 = arith.constant 0 : i32
    %0 = arith.cmpi eq, %arg1, %c0_i32 : i32
    %1 = arith.extui %0 : i1 to i32
    %c0_i32_0 = arith.constant 0 : i32
    %2 = arith.cmpi ne, %1, %c0_i32_0 : i32
    scf.if %2 {
      %cst_124 = arith.constant 0.000000e+00 : f32
      %351 = vector.broadcast %cst_124 : f32 to vector<2x32xf32>
      %c0_125 = arith.constant 0 : index
      %c0_126 = arith.constant 0 : index
      %352 = vector.load %arg5[%c0_125, %c0_126] : memref<2x32xf32, #tpu.memory_space<vmem>>, vector<2x32xf32>
      tpu.vector_store %arg5[%c0_125, %c0_126], %351 {strides = array<i32>} : memref<2x32xf32, #tpu.memory_space<vmem>>, vector<2x32xf32>,
      %cst_127 = arith.constant 0.000000e+00 : f32
      %353 = vector.broadcast %cst_127 : f32 to vector<2x32xf32>
      %c0_128 = arith.constant 0 : index
      %c0_129 = arith.constant 0 : index
      %354 = vector.load %arg6[%c0_128, %c0_129] : memref<2x32xf32, #tpu.memory_space<vmem>>, vector<2x32xf32>
      tpu.vector_store %arg6[%c0_128, %c0_129], %353 {strides = array<i32>} : memref<2x32xf32, #tpu.memory_space<vmem>>, vector<2x32xf32>,
    } else {
    }
    %c0 = arith.constant 0 : index
    %c0_1 = arith.constant 0 : index
    %c0_2 = arith.constant 0 : index
    %3 = vector.load %arg3[%c0, %c0_1, %c0_2] : memref<4x32x32xf32, #tpu.memory_space<vmem>>, vector<1x32x32xf32>
    %4 = vector.shape_cast %3 : vector<1x32x32xf32> to vector<32x32xf32>
    %c1 = arith.constant 1 : index
    %c0_3 = arith.constant 0 : index
    %c0_4 = arith.constant 0 : index
    %5 = vector.load %arg3[%c1, %c0_3, %c0_4] : memref<4x32x32xf32, #tpu.memory_space<vmem>>, vector<1x32x32xf32>
    %6 = vector.shape_cast %5 : vector<1x32x32xf32> to vector<32x32xf32>
    %c2 = arith.constant 2 : index
    %c0_5 = arith.constant 0 : index
    %c0_6 = arith.constant 0 : index
    %7 = vector.load %arg3[%c2, %c0_5, %c0_6] : memref<4x32x32xf32, #tpu.memory_space<vmem>>, vector<1x32x32xf32>
    %8 = vector.shape_cast %7 : vector<1x32x32xf32> to vector<32x32xf32>
    %c3 = arith.constant 3 : index
    %c0_7 = arith.constant 0 : index
    %c0_8 = arith.constant 0 : index
    %9 = vector.load %arg3[%c3, %c0_7, %c0_8] : memref<4x32x32xf32, #tpu.memory_space<vmem>>, vector<1x32x32xf32>
    %10 = vector.shape_cast %9 : vector<1x32x32xf32> to vector<32x32xf32>
    %c0_9 = arith.constant 0 : index
    %c0_10 = arith.constant 0 : index
    %11 = vector.load %arg5[%c0_9, %c0_10] : memref<2x32xf32, #tpu.memory_space<vmem>>, vector<2x32xf32>
    %c0_11 = arith.constant 0 : index
    %c0_12 = arith.constant 0 : index
    %12 = vector.load %arg6[%c0_11, %c0_12] : memref<2x32xf32, #tpu.memory_space<vmem>>, vector<2x32xf32>
    %c0_13 = arith.constant 0 : index
    %c0_14 = arith.constant 0 : index
    %c0_15 = arith.constant 0 : index
    %c0_16 = arith.constant 0 : index
    %13 = vector.load %arg2[%c0_13, %c0_14, %c0_15, %c0_16] : memref<8x4x2x32xf32, #tpu.memory_space<vmem>>, vector<1x4x2x32xf32>
    %14 = vector.shape_cast %13 : vector<1x4x2x32xf32> to vector<4x2x32xf32>
    %15 = vector.extract_strided_slice %14 {offsets = [0, 0, 0], sizes = [1, 2, 32], strides = [1, 1, 1]} : vector<4x2x32xf32> to vector<1x2x32xf32>
    %16 = vector.shape_cast %15 : vector<1x2x32xf32> to vector<2x32xf32>
    %cst = arith.constant dense<0.000000e+00> : vector<2x32xf32>
    %17 = tpu.matmul %11, %4, %cst {dimension_numbers = #tpu.dot_dimension_numbers<[1], [0], [0], [1], [0, 0, 1, 1], [], []>} : vector<2x32xf32>, vector<32x32xf32>, vector<2x32xf32> -> vector<2x32xf32>
    %18 = arith.addf %16, %17 : vector<2x32xf32>
    %19 = vector.extract_strided_slice %14 {offsets = [1, 0, 0], sizes = [1, 2, 32], strides = [1, 1, 1]} : vector<4x2x32xf32> to vector<1x2x32xf32>
    %20 = vector.shape_cast %19 : vector<1x2x32xf32> to vector<2x32xf32>
    %cst_17 = arith.constant dense<0.000000e+00> : vector<2x32xf32>
    %21 = tpu.matmul %11, %6, %cst_17 {dimension_numbers = #tpu.dot_dimension_numbers<[1], [0], [0], [1], [0, 0, 1, 1], [], []>} : vector<2x32xf32>, vector<32x32xf32>, vector<2x32xf32> -> vector<2x32xf32>
    %22 = arith.addf %20, %21 : vector<2x32xf32>
    %23 = vector.extract_strided_slice %14 {offsets = [2, 0, 0], sizes = [1, 2, 32], strides = [1, 1, 1]} : vector<4x2x32xf32> to vector<1x2x32xf32>
    %24 = vector.shape_cast %23 : vector<1x2x32xf32> to vector<2x32xf32>
    %cst_18 = arith.constant dense<0.000000e+00> : vector<2x32xf32>
    %25 = tpu.matmul %11, %8, %cst_18 {dimension_numbers = #tpu.dot_dimension_numbers<[1], [0], [0], [1], [0, 0, 1, 1], [], []>} : vector<2x32xf32>, vector<32x32xf32>, vector<2x32xf32> -> vector<2x32xf32>
    %26 = arith.addf %24, %25 : vector<2x32xf32>
    %27 = vector.extract_strided_slice %14 {offsets = [3, 0, 0], sizes = [1, 2, 32], strides = [1, 1, 1]} : vector<4x2x32xf32> to vector<1x2x32xf32>
    %28 = vector.shape_cast %27 : vector<1x2x32xf32> to vector<2x32xf32>
    %cst_19 = arith.constant dense<0.000000e+00> : vector<2x32xf32>
    %29 = tpu.matmul %11, %10, %cst_19 {dimension_numbers = #tpu.dot_dimension_numbers<[1], [0], [0], [1], [0, 0, 1, 1], [], []>} : vector<2x32xf32>, vector<32x32xf32>, vector<2x32xf32> -> vector<2x32xf32>
    %30 = arith.addf %28, %29 : vector<2x32xf32>
    %31 = arith.negf %18 : vector<2x32xf32>
    %32 = math.exp %31 : vector<2x32xf32>
    %cst_20 = arith.constant 1.000000e+00 : f32
    %33 = vector.broadcast %cst_20 : f32 to vector<2x32xf32>
    %34 = arith.addf %33, %32 : vector<2x32xf32>
    %35 = arith.divf %33, %34 : vector<2x32xf32>
    %36 = arith.negf %22 : vector<2x32xf32>
    %37 = math.exp %36 : vector<2x32xf32>
    %cst_21 = arith.constant 1.000000e+00 : f32
    %38 = vector.broadcast %cst_21 : f32 to vector<2x32xf32>
    %39 = arith.addf %38, %37 : vector<2x32xf32>
    %40 = arith.divf %38, %39 : vector<2x32xf32>
    %41 = math.tanh %26 : vector<2x32xf32>
    %42 = arith.negf %30 : vector<2x32xf32>
    %43 = math.exp %42 : vector<2x32xf32>
    %cst_22 = arith.constant 1.000000e+00 : f32
    %44 = vector.broadcast %cst_22 : f32 to vector<2x32xf32>
    %45 = arith.addf %44, %43 : vector<2x32xf32>
    %46 = arith.divf %44, %45 : vector<2x32xf32>
    %47 = arith.mulf %40, %12 : vector<2x32xf32>
    %48 = arith.mulf %35, %41 : vector<2x32xf32>
    %49 = arith.addf %47, %48 : vector<2x32xf32>
    %50 = math.tanh %49 : vector<2x32xf32>
    %51 = arith.mulf %46, %50 : vector<2x32xf32>
    %c0_23 = arith.constant 0 : index
    %c0_24 = arith.constant 0 : index
    %c0_25 = arith.constant 0 : index
    %52 = vector.load %arg4[%c0_23, %c0_24, %c0_25] : memref<8x2x32xf32, #tpu.memory_space<vmem>>, vector<1x2x32xf32>
    %53 = vector.shape_cast %52 : vector<1x2x32xf32> to vector<2x32xf32>
    %54 = vector.shape_cast %51 : vector<2x32xf32> to vector<1x2x32xf32>
    tpu.vector_store %arg4[%c0_23, %c0_24, %c0_25], %54 {strides = array<i32>} : memref<8x2x32xf32, #tpu.memory_space<vmem>>, vector<1x2x32xf32>,
    %c1_26 = arith.constant 1 : index
    %c0_27 = arith.constant 0 : index
    %c0_28 = arith.constant 0 : index
    %c0_29 = arith.constant 0 : index
    %55 = vector.load %arg2[%c1_26, %c0_27, %c0_28, %c0_29] : memref<8x4x2x32xf32, #tpu.memory_space<vmem>>, vector<1x4x2x32xf32>
    %56 = vector.shape_cast %55 : vector<1x4x2x32xf32> to vector<4x2x32xf32>
    %57 = vector.extract_strided_slice %56 {offsets = [0, 0, 0], sizes = [1, 2, 32], strides = [1, 1, 1]} : vector<4x2x32xf32> to vector<1x2x32xf32>
    %58 = vector.shape_cast %57 : vector<1x2x32xf32> to vector<2x32xf32>
    %cst_30 = arith.constant dense<0.000000e+00> : vector<2x32xf32>
    %59 = tpu.matmul %51, %4, %cst_30 {dimension_numbers = #tpu.dot_dimension_numbers<[1], [0], [0], [1], [0, 0, 1, 1], [], []>} : vector<2x32xf32>, vector<32x32xf32>, vector<2x32xf32> -> vector<2x32xf32>
    %60 = arith.addf %58, %59 : vector<2x32xf32>
    %61 = vector.extract_strided_slice %56 {offsets = [1, 0, 0], sizes = [1, 2, 32], strides = [1, 1, 1]} : vector<4x2x32xf32> to vector<1x2x32xf32>
    %62 = vector.shape_cast %61 : vector<1x2x32xf32> to vector<2x32xf32>
    %cst_31 = arith.constant dense<0.000000e+00> : vector<2x32xf32>
    %63 = tpu.matmul %51, %6, %cst_31 {dimension_numbers = #tpu.dot_dimension_numbers<[1], [0], [0], [1], [0, 0, 1, 1], [], []>} : vector<2x32xf32>, vector<32x32xf32>, vector<2x32xf32> -> vector<2x32xf32>
    %64 = arith.addf %62, %63 : vector<2x32xf32>
    %65 = vector.extract_strided_slice %56 {offsets = [2, 0, 0], sizes = [1, 2, 32], strides = [1, 1, 1]} : vector<4x2x32xf32> to vector<1x2x32xf32>
    %66 = vector.shape_cast %65 : vector<1x2x32xf32> to vector<2x32xf32>
    %cst_32 = arith.constant dense<0.000000e+00> : vector<2x32xf32>
    %67 = tpu.matmul %51, %8, %cst_32 {dimension_numbers = #tpu.dot_dimension_numbers<[1], [0], [0], [1], [0, 0, 1, 1], [], []>} : vector<2x32xf32>, vector<32x32xf32>, vector<2x32xf32> -> vector<2x32xf32>
    %68 = arith.addf %66, %67 : vector<2x32xf32>
    %69 = vector.extract_strided_slice %56 {offsets = [3, 0, 0], sizes = [1, 2, 32], strides = [1, 1, 1]} : vector<4x2x32xf32> to vector<1x2x32xf32>
    %70 = vector.shape_cast %69 : vector<1x2x32xf32> to vector<2x32xf32>
    %cst_33 = arith.constant dense<0.000000e+00> : vector<2x32xf32>
    %71 = tpu.matmul %51, %10, %cst_33 {dimension_numbers = #tpu.dot_dimension_numbers<[1], [0], [0], [1], [0, 0, 1, 1], [], []>} : vector<2x32xf32>, vector<32x32xf32>, vector<2x32xf32> -> vector<2x32xf32>
    %72 = arith.addf %70, %71 : vector<2x32xf32>
    %73 = arith.negf %60 : vector<2x32xf32>
    %74 = math.exp %73 : vector<2x32xf32>
    %cst_34 = arith.constant 1.000000e+00 : f32
    %75 = vector.broadcast %cst_34 : f32 to vector<2x32xf32>
    %76 = arith.addf %75, %74 : vector<2x32xf32>
    %77 = arith.divf %75, %76 : vector<2x32xf32>
    %78 = arith.negf %64 : vector<2x32xf32>
    %79 = math.exp %78 : vector<2x32xf32>
    %cst_35 = arith.constant 1.000000e+00 : f32
    %80 = vector.broadcast %cst_35 : f32 to vector<2x32xf32>
    %81 = arith.addf %80, %79 : vector<2x32xf32>
    %82 = arith.divf %80, %81 : vector<2x32xf32>
    %83 = math.tanh %68 : vector<2x32xf32>
    %84 = arith.negf %72 : vector<2x32xf32>
    %85 = math.exp %84 : vector<2x32xf32>
    %cst_36 = arith.constant 1.000000e+00 : f32
    %86 = vector.broadcast %cst_36 : f32 to vector<2x32xf32>
    %87 = arith.addf %86, %85 : vector<2x32xf32>
    %88 = arith.divf %86, %87 : vector<2x32xf32>
    %89 = arith.mulf %82, %49 : vector<2x32xf32>
    %90 = arith.mulf %77, %83 : vector<2x32xf32>
    %91 = arith.addf %89, %90 : vector<2x32xf32>
    %92 = math.tanh %91 : vector<2x32xf32>
    %93 = arith.mulf %88, %92 : vector<2x32xf32>
    %c1_37 = arith.constant 1 : index
    %c0_38 = arith.constant 0 : index
    %c0_39 = arith.constant 0 : index
    %94 = vector.load %arg4[%c1_37, %c0_38, %c0_39] : memref<8x2x32xf32, #tpu.memory_space<vmem>>, vector<1x2x32xf32>
    %95 = vector.shape_cast %94 : vector<1x2x32xf32> to vector<2x32xf32>
    %96 = vector.shape_cast %93 : vector<2x32xf32> to vector<1x2x32xf32>
    tpu.vector_store %arg4[%c1_37, %c0_38, %c0_39], %96 {strides = array<i32>} : memref<8x2x32xf32, #tpu.memory_space<vmem>>, vector<1x2x32xf32>,
    %c2_40 = arith.constant 2 : index
    %c0_41 = arith.constant 0 : index
    %c0_42 = arith.constant 0 : index
    %c0_43 = arith.constant 0 : index
    %97 = vector.load %arg2[%c2_40, %c0_41, %c0_42, %c0_43] : memref<8x4x2x32xf32, #tpu.memory_space<vmem>>, vector<1x4x2x32xf32>
    %98 = vector.shape_cast %97 : vector<1x4x2x32xf32> to vector<4x2x32xf32>
    %99 = vector.extract_strided_slice %98 {offsets = [0, 0, 0], sizes = [1, 2, 32], strides = [1, 1, 1]} : vector<4x2x32xf32> to vector<1x2x32xf32>
    %100 = vector.shape_cast %99 : vector<1x2x32xf32> to vector<2x32xf32>
    %cst_44 = arith.constant dense<0.000000e+00> : vector<2x32xf32>
    %101 = tpu.matmul %93, %4, %cst_44 {dimension_numbers = #tpu.dot_dimension_numbers<[1], [0], [0], [1], [0, 0, 1, 1], [], []>} : vector<2x32xf32>, vector<32x32xf32>, vector<2x32xf32> -> vector<2x32xf32>
    %102 = arith.addf %100, %101 : vector<2x32xf32>
    %103 = vector.extract_strided_slice %98 {offsets = [1, 0, 0], sizes = [1, 2, 32], strides = [1, 1, 1]} : vector<4x2x32xf32> to vector<1x2x32xf32>
    %104 = vector.shape_cast %103 : vector<1x2x32xf32> to vector<2x32xf32>
    %cst_45 = arith.constant dense<0.000000e+00> : vector<2x32xf32>
    %105 = tpu.matmul %93, %6, %cst_45 {dimension_numbers = #tpu.dot_dimension_numbers<[1], [0], [0], [1], [0, 0, 1, 1], [], []>} : vector<2x32xf32>, vector<32x32xf32>, vector<2x32xf32> -> vector<2x32xf32>
    %106 = arith.addf %104, %105 : vector<2x32xf32>
    %107 = vector.extract_strided_slice %98 {offsets = [2, 0, 0], sizes = [1, 2, 32], strides = [1, 1, 1]} : vector<4x2x32xf32> to vector<1x2x32xf32>
    %108 = vector.shape_cast %107 : vector<1x2x32xf32> to vector<2x32xf32>
    %cst_46 = arith.constant dense<0.000000e+00> : vector<2x32xf32>
    %109 = tpu.matmul %93, %8, %cst_46 {dimension_numbers = #tpu.dot_dimension_numbers<[1], [0], [0], [1], [0, 0, 1, 1], [], []>} : vector<2x32xf32>, vector<32x32xf32>, vector<2x32xf32> -> vector<2x32xf32>
    %110 = arith.addf %108, %109 : vector<2x32xf32>
    %111 = vector.extract_strided_slice %98 {offsets = [3, 0, 0], sizes = [1, 2, 32], strides = [1, 1, 1]} : vector<4x2x32xf32> to vector<1x2x32xf32>
    %112 = vector.shape_cast %111 : vector<1x2x32xf32> to vector<2x32xf32>
    %cst_47 = arith.constant dense<0.000000e+00> : vector<2x32xf32>
    %113 = tpu.matmul %93, %10, %cst_47 {dimension_numbers = #tpu.dot_dimension_numbers<[1], [0], [0], [1], [0, 0, 1, 1], [], []>} : vector<2x32xf32>, vector<32x32xf32>, vector<2x32xf32> -> vector<2x32xf32>
    %114 = arith.addf %112, %113 : vector<2x32xf32>
    %115 = arith.negf %102 : vector<2x32xf32>
    %116 = math.exp %115 : vector<2x32xf32>
    %cst_48 = arith.constant 1.000000e+00 : f32
    %117 = vector.broadcast %cst_48 : f32 to vector<2x32xf32>
    %118 = arith.addf %117, %116 : vector<2x32xf32>
    %119 = arith.divf %117, %118 : vector<2x32xf32>
    %120 = arith.negf %106 : vector<2x32xf32>
    %121 = math.exp %120 : vector<2x32xf32>
    %cst_49 = arith.constant 1.000000e+00 : f32
    %122 = vector.broadcast %cst_49 : f32 to vector<2x32xf32>
    %123 = arith.addf %122, %121 : vector<2x32xf32>
    %124 = arith.divf %122, %123 : vector<2x32xf32>
    %125 = math.tanh %110 : vector<2x32xf32>
    %126 = arith.negf %114 : vector<2x32xf32>
    %127 = math.exp %126 : vector<2x32xf32>
    %cst_50 = arith.constant 1.000000e+00 : f32
    %128 = vector.broadcast %cst_50 : f32 to vector<2x32xf32>
    %129 = arith.addf %128, %127 : vector<2x32xf32>
    %130 = arith.divf %128, %129 : vector<2x32xf32>
    %131 = arith.mulf %124, %91 : vector<2x32xf32>
    %132 = arith.mulf %119, %125 : vector<2x32xf32>
    %133 = arith.addf %131, %132 : vector<2x32xf32>
    %134 = math.tanh %133 : vector<2x32xf32>
    %135 = arith.mulf %130, %134 : vector<2x32xf32>
    %c2_51 = arith.constant 2 : index
    %c0_52 = arith.constant 0 : index
    %c0_53 = arith.constant 0 : index
    %136 = vector.load %arg4[%c2_51, %c0_52, %c0_53] : memref<8x2x32xf32, #tpu.memory_space<vmem>>, vector<1x2x32xf32>
    %137 = vector.shape_cast %136 : vector<1x2x32xf32> to vector<2x32xf32>
    %138 = vector.shape_cast %135 : vector<2x32xf32> to vector<1x2x32xf32>
    tpu.vector_store %arg4[%c2_51, %c0_52, %c0_53], %138 {strides = array<i32>} : memref<8x2x32xf32, #tpu.memory_space<vmem>>, vector<1x2x32xf32>,
    %c3_54 = arith.constant 3 : index
    %c0_55 = arith.constant 0 : index
    %c0_56 = arith.constant 0 : index
    %c0_57 = arith.constant 0 : index
    %139 = vector.load %arg2[%c3_54, %c0_55, %c0_56, %c0_57] : memref<8x4x2x32xf32, #tpu.memory_space<vmem>>, vector<1x4x2x32xf32>
    %140 = vector.shape_cast %139 : vector<1x4x2x32xf32> to vector<4x2x32xf32>
    %141 = vector.extract_strided_slice %140 {offsets = [0, 0, 0], sizes = [1, 2, 32], strides = [1, 1, 1]} : vector<4x2x32xf32> to vector<1x2x32xf32>
    %142 = vector.shape_cast %141 : vector<1x2x32xf32> to vector<2x32xf32>
    %cst_58 = arith.constant dense<0.000000e+00> : vector<2x32xf32>
    %143 = tpu.matmul %135, %4, %cst_58 {dimension_numbers = #tpu.dot_dimension_numbers<[1], [0], [0], [1], [0, 0, 1, 1], [], []>} : vector<2x32xf32>, vector<32x32xf32>, vector<2x32xf32> -> vector<2x32xf32>
    %144 = arith.addf %142, %143 : vector<2x32xf32>
    %145 = vector.extract_strided_slice %140 {offsets = [1, 0, 0], sizes = [1, 2, 32], strides = [1, 1, 1]} : vector<4x2x32xf32> to vector<1x2x32xf32>
    %146 = vector.shape_cast %145 : vector<1x2x32xf32> to vector<2x32xf32>
    %cst_59 = arith.constant dense<0.000000e+00> : vector<2x32xf32>
    %147 = tpu.matmul %135, %6, %cst_59 {dimension_numbers = #tpu.dot_dimension_numbers<[1], [0], [0], [1], [0, 0, 1, 1], [], []>} : vector<2x32xf32>, vector<32x32xf32>, vector<2x32xf32> -> vector<2x32xf32>
    %148 = arith.addf %146, %147 : vector<2x32xf32>
    %149 = vector.extract_strided_slice %140 {offsets = [2, 0, 0], sizes = [1, 2, 32], strides = [1, 1, 1]} : vector<4x2x32xf32> to vector<1x2x32xf32>
    %150 = vector.shape_cast %149 : vector<1x2x32xf32> to vector<2x32xf32>
    %cst_60 = arith.constant dense<0.000000e+00> : vector<2x32xf32>
    %151 = tpu.matmul %135, %8, %cst_60 {dimension_numbers = #tpu.dot_dimension_numbers<[1], [0], [0], [1], [0, 0, 1, 1], [], []>} : vector<2x32xf32>, vector<32x32xf32>, vector<2x32xf32> -> vector<2x32xf32>
    %152 = arith.addf %150, %151 : vector<2x32xf32>
    %153 = vector.extract_strided_slice %140 {offsets = [3, 0, 0], sizes = [1, 2, 32], strides = [1, 1, 1]} : vector<4x2x32xf32> to vector<1x2x32xf32>
    %154 = vector.shape_cast %153 : vector<1x2x32xf32> to vector<2x32xf32>
    %cst_61 = arith.constant dense<0.000000e+00> : vector<2x32xf32>
    %155 = tpu.matmul %135, %10, %cst_61 {dimension_numbers = #tpu.dot_dimension_numbers<[1], [0], [0], [1], [0, 0, 1, 1], [], []>} : vector<2x32xf32>, vector<32x32xf32>, vector<2x32xf32> -> vector<2x32xf32>
    %156 = arith.addf %154, %155 : vector<2x32xf32>
    %157 = arith.negf %144 : vector<2x32xf32>
    %158 = math.exp %157 : vector<2x32xf32>
    %cst_62 = arith.constant 1.000000e+00 : f32
    %159 = vector.broadcast %cst_62 : f32 to vector<2x32xf32>
    %160 = arith.addf %159, %158 : vector<2x32xf32>
    %161 = arith.divf %159, %160 : vector<2x32xf32>
    %162 = arith.negf %148 : vector<2x32xf32>
    %163 = math.exp %162 : vector<2x32xf32>
    %cst_63 = arith.constant 1.000000e+00 : f32
    %164 = vector.broadcast %cst_63 : f32 to vector<2x32xf32>
    %165 = arith.addf %164, %163 : vector<2x32xf32>
    %166 = arith.divf %164, %165 : vector<2x32xf32>
    %167 = math.tanh %152 : vector<2x32xf32>
    %168 = arith.negf %156 : vector<2x32xf32>
    %169 = math.exp %168 : vector<2x32xf32>
    %cst_64 = arith.constant 1.000000e+00 : f32
    %170 = vector.broadcast %cst_64 : f32 to vector<2x32xf32>
    %171 = arith.addf %170, %169 : vector<2x32xf32>
    %172 = arith.divf %170, %171 : vector<2x32xf32>
    %173 = arith.mulf %166, %133 : vector<2x32xf32>
    %174 = arith.mulf %161, %167 : vector<2x32xf32>
    %175 = arith.addf %173, %174 : vector<2x32xf32>
    %176 = math.tanh %175 : vector<2x32xf32>
    %177 = arith.mulf %172, %176 : vector<2x32xf32>
    %c3_65 = arith.constant 3 : index
    %c0_66 = arith.constant 0 : index
    %c0_67 = arith.constant 0 : index
    %178 = vector.load %arg4[%c3_65, %c0_66, %c0_67] : memref<8x2x32xf32, #tpu.memory_space<vmem>>, vector<1x2x32xf32>
    %179 = vector.shape_cast %178 : vector<1x2x32xf32> to vector<2x32xf32>
    %180 = vector.shape_cast %177 : vector<2x32xf32> to vector<1x2x32xf32>
    tpu.vector_store %arg4[%c3_65, %c0_66, %c0_67], %180 {strides = array<i32>} : memref<8x2x32xf32, #tpu.memory_space<vmem>>, vector<1x2x32xf32>,
    %c4 = arith.constant 4 : index
    %c0_68 = arith.constant 0 : index
    %c0_69 = arith.constant 0 : index
    %c0_70 = arith.constant 0 : index
    %181 = vector.load %arg2[%c4, %c0_68, %c0_69, %c0_70] : memref<8x4x2x32xf32, #tpu.memory_space<vmem>>, vector<1x4x2x32xf32>
    %182 = vector.shape_cast %181 : vector<1x4x2x32xf32> to vector<4x2x32xf32>
    %183 = vector.extract_strided_slice %182 {offsets = [0, 0, 0], sizes = [1, 2, 32], strides = [1, 1, 1]} : vector<4x2x32xf32> to vector<1x2x32xf32>
    %184 = vector.shape_cast %183 : vector<1x2x32xf32> to vector<2x32xf32>
    %cst_71 = arith.constant dense<0.000000e+00> : vector<2x32xf32>
    %185 = tpu.matmul %177, %4, %cst_71 {dimension_numbers = #tpu.dot_dimension_numbers<[1], [0], [0], [1], [0, 0, 1, 1], [], []>} : vector<2x32xf32>, vector<32x32xf32>, vector<2x32xf32> -> vector<2x32xf32>
    %186 = arith.addf %184, %185 : vector<2x32xf32>
    %187 = vector.extract_strided_slice %182 {offsets = [1, 0, 0], sizes = [1, 2, 32], strides = [1, 1, 1]} : vector<4x2x32xf32> to vector<1x2x32xf32>
    %188 = vector.shape_cast %187 : vector<1x2x32xf32> to vector<2x32xf32>
    %cst_72 = arith.constant dense<0.000000e+00> : vector<2x32xf32>
    %189 = tpu.matmul %177, %6, %cst_72 {dimension_numbers = #tpu.dot_dimension_numbers<[1], [0], [0], [1], [0, 0, 1, 1], [], []>} : vector<2x32xf32>, vector<32x32xf32>, vector<2x32xf32> -> vector<2x32xf32>
    %190 = arith.addf %188, %189 : vector<2x32xf32>
    %191 = vector.extract_strided_slice %182 {offsets = [2, 0, 0], sizes = [1, 2, 32], strides = [1, 1, 1]} : vector<4x2x32xf32> to vector<1x2x32xf32>
    %192 = vector.shape_cast %191 : vector<1x2x32xf32> to vector<2x32xf32>
    %cst_73 = arith.constant dense<0.000000e+00> : vector<2x32xf32>
    %193 = tpu.matmul %177, %8, %cst_73 {dimension_numbers = #tpu.dot_dimension_numbers<[1], [0], [0], [1], [0, 0, 1, 1], [], []>} : vector<2x32xf32>, vector<32x32xf32>, vector<2x32xf32> -> vector<2x32xf32>
    %194 = arith.addf %192, %193 : vector<2x32xf32>
    %195 = vector.extract_strided_slice %182 {offsets = [3, 0, 0], sizes = [1, 2, 32], strides = [1, 1, 1]} : vector<4x2x32xf32> to vector<1x2x32xf32>
    %196 = vector.shape_cast %195 : vector<1x2x32xf32> to vector<2x32xf32>
    %cst_74 = arith.constant dense<0.000000e+00> : vector<2x32xf32>
    %197 = tpu.matmul %177, %10, %cst_74 {dimension_numbers = #tpu.dot_dimension_numbers<[1], [0], [0], [1], [0, 0, 1, 1], [], []>} : vector<2x32xf32>, vector<32x32xf32>, vector<2x32xf32> -> vector<2x32xf32>
    %198 = arith.addf %196, %197 : vector<2x32xf32>
    %199 = arith.negf %186 : vector<2x32xf32>
    %200 = math.exp %199 : vector<2x32xf32>
    %cst_75 = arith.constant 1.000000e+00 : f32
    %201 = vector.broadcast %cst_75 : f32 to vector<2x32xf32>
    %202 = arith.addf %201, %200 : vector<2x32xf32>
    %203 = arith.divf %201, %202 : vector<2x32xf32>
    %204 = arith.negf %190 : vector<2x32xf32>
    %205 = math.exp %204 : vector<2x32xf32>
    %cst_76 = arith.constant 1.000000e+00 : f32
    %206 = vector.broadcast %cst_76 : f32 to vector<2x32xf32>
    %207 = arith.addf %206, %205 : vector<2x32xf32>
    %208 = arith.divf %206, %207 : vector<2x32xf32>
    %209 = math.tanh %194 : vector<2x32xf32>
    %210 = arith.negf %198 : vector<2x32xf32>
    %211 = math.exp %210 : vector<2x32xf32>
    %cst_77 = arith.constant 1.000000e+00 : f32
    %212 = vector.broadcast %cst_77 : f32 to vector<2x32xf32>
    %213 = arith.addf %212, %211 : vector<2x32xf32>
    %214 = arith.divf %212, %213 : vector<2x32xf32>
    %215 = arith.mulf %208, %175 : vector<2x32xf32>
    %216 = arith.mulf %203, %209 : vector<2x32xf32>
    %217 = arith.addf %215, %216 : vector<2x32xf32>
    %218 = math.tanh %217 : vector<2x32xf32>
    %219 = arith.mulf %214, %218 : vector<2x32xf32>
    %c4_78 = arith.constant 4 : index
    %c0_79 = arith.constant 0 : index
    %c0_80 = arith.constant 0 : index
    %220 = vector.load %arg4[%c4_78, %c0_79, %c0_80] : memref<8x2x32xf32, #tpu.memory_space<vmem>>, vector<1x2x32xf32>
    %221 = vector.shape_cast %220 : vector<1x2x32xf32> to vector<2x32xf32>
    %222 = vector.shape_cast %219 : vector<2x32xf32> to vector<1x2x32xf32>
    tpu.vector_store %arg4[%c4_78, %c0_79, %c0_80], %222 {strides = array<i32>} : memref<8x2x32xf32, #tpu.memory_space<vmem>>, vector<1x2x32xf32>,
    %c5 = arith.constant 5 : index
    %c0_81 = arith.constant 0 : index
    %c0_82 = arith.constant 0 : index
    %c0_83 = arith.constant 0 : index
    %223 = vector.load %arg2[%c5, %c0_81, %c0_82, %c0_83] : memref<8x4x2x32xf32, #tpu.memory_space<vmem>>, vector<1x4x2x32xf32>
    %224 = vector.shape_cast %223 : vector<1x4x2x32xf32> to vector<4x2x32xf32>
    %225 = vector.extract_strided_slice %224 {offsets = [0, 0, 0], sizes = [1, 2, 32], strides = [1, 1, 1]} : vector<4x2x32xf32> to vector<1x2x32xf32>
    %226 = vector.shape_cast %225 : vector<1x2x32xf32> to vector<2x32xf32>
    %cst_84 = arith.constant dense<0.000000e+00> : vector<2x32xf32>
    %227 = tpu.matmul %219, %4, %cst_84 {dimension_numbers = #tpu.dot_dimension_numbers<[1], [0], [0], [1], [0, 0, 1, 1], [], []>} : vector<2x32xf32>, vector<32x32xf32>, vector<2x32xf32> -> vector<2x32xf32>
    %228 = arith.addf %226, %227 : vector<2x32xf32>
    %229 = vector.extract_strided_slice %224 {offsets = [1, 0, 0], sizes = [1, 2, 32], strides = [1, 1, 1]} : vector<4x2x32xf32> to vector<1x2x32xf32>
    %230 = vector.shape_cast %229 : vector<1x2x32xf32> to vector<2x32xf32>
    %cst_85 = arith.constant dense<0.000000e+00> : vector<2x32xf32>
    %231 = tpu.matmul %219, %6, %cst_85 {dimension_numbers = #tpu.dot_dimension_numbers<[1], [0], [0], [1], [0, 0, 1, 1], [], []>} : vector<2x32xf32>, vector<32x32xf32>, vector<2x32xf32> -> vector<2x32xf32>
    %232 = arith.addf %230, %231 : vector<2x32xf32>
    %233 = vector.extract_strided_slice %224 {offsets = [2, 0, 0], sizes = [1, 2, 32], strides = [1, 1, 1]} : vector<4x2x32xf32> to vector<1x2x32xf32>
    %234 = vector.shape_cast %233 : vector<1x2x32xf32> to vector<2x32xf32>
    %cst_86 = arith.constant dense<0.000000e+00> : vector<2x32xf32>
    %235 = tpu.matmul %219, %8, %cst_86 {dimension_numbers = #tpu.dot_dimension_numbers<[1], [0], [0], [1], [0, 0, 1, 1], [], []>} : vector<2x32xf32>, vector<32x32xf32>, vector<2x32xf32> -> vector<2x32xf32>
    %236 = arith.addf %234, %235 : vector<2x32xf32>
    %237 = vector.extract_strided_slice %224 {offsets = [3, 0, 0], sizes = [1, 2, 32], strides = [1, 1, 1]} : vector<4x2x32xf32> to vector<1x2x32xf32>
    %238 = vector.shape_cast %237 : vector<1x2x32xf32> to vector<2x32xf32>
    %cst_87 = arith.constant dense<0.000000e+00> : vector<2x32xf32>
    %239 = tpu.matmul %219, %10, %cst_87 {dimension_numbers = #tpu.dot_dimension_numbers<[1], [0], [0], [1], [0, 0, 1, 1], [], []>} : vector<2x32xf32>, vector<32x32xf32>, vector<2x32xf32> -> vector<2x32xf32>
    %240 = arith.addf %238, %239 : vector<2x32xf32>
    %241 = arith.negf %228 : vector<2x32xf32>
    %242 = math.exp %241 : vector<2x32xf32>
    %cst_88 = arith.constant 1.000000e+00 : f32
    %243 = vector.broadcast %cst_88 : f32 to vector<2x32xf32>
    %244 = arith.addf %243, %242 : vector<2x32xf32>
    %245 = arith.divf %243, %244 : vector<2x32xf32>
    %246 = arith.negf %232 : vector<2x32xf32>
    %247 = math.exp %246 : vector<2x32xf32>
    %cst_89 = arith.constant 1.000000e+00 : f32
    %248 = vector.broadcast %cst_89 : f32 to vector<2x32xf32>
    %249 = arith.addf %248, %247 : vector<2x32xf32>
    %250 = arith.divf %248, %249 : vector<2x32xf32>
    %251 = math.tanh %236 : vector<2x32xf32>
    %252 = arith.negf %240 : vector<2x32xf32>
    %253 = math.exp %252 : vector<2x32xf32>
    %cst_90 = arith.constant 1.000000e+00 : f32
    %254 = vector.broadcast %cst_90 : f32 to vector<2x32xf32>
    %255 = arith.addf %254, %253 : vector<2x32xf32>
    %256 = arith.divf %254, %255 : vector<2x32xf32>
    %257 = arith.mulf %250, %217 : vector<2x32xf32>
    %258 = arith.mulf %245, %251 : vector<2x32xf32>
    %259 = arith.addf %257, %258 : vector<2x32xf32>
    %260 = math.tanh %259 : vector<2x32xf32>
    %261 = arith.mulf %256, %260 : vector<2x32xf32>
    %c5_91 = arith.constant 5 : index
    %c0_92 = arith.constant 0 : index
    %c0_93 = arith.constant 0 : index
    %262 = vector.load %arg4[%c5_91, %c0_92, %c0_93] : memref<8x2x32xf32, #tpu.memory_space<vmem>>, vector<1x2x32xf32>
    %263 = vector.shape_cast %262 : vector<1x2x32xf32> to vector<2x32xf32>
    %264 = vector.shape_cast %261 : vector<2x32xf32> to vector<1x2x32xf32>
    tpu.vector_store %arg4[%c5_91, %c0_92, %c0_93], %264 {strides = array<i32>} : memref<8x2x32xf32, #tpu.memory_space<vmem>>, vector<1x2x32xf32>,
    %c6 = arith.constant 6 : index
    %c0_94 = arith.constant 0 : index
    %c0_95 = arith.constant 0 : index
    %c0_96 = arith.constant 0 : index
    %265 = vector.load %arg2[%c6, %c0_94, %c0_95, %c0_96] : memref<8x4x2x32xf32, #tpu.memory_space<vmem>>, vector<1x4x2x32xf32>
    %266 = vector.shape_cast %265 : vector<1x4x2x32xf32> to vector<4x2x32xf32>
    %267 = vector.extract_strided_slice %266 {offsets = [0, 0, 0], sizes = [1, 2, 32], strides = [1, 1, 1]} : vector<4x2x32xf32> to vector<1x2x32xf32>
    %268 = vector.shape_cast %267 : vector<1x2x32xf32> to vector<2x32xf32>
    %cst_97 = arith.constant dense<0.000000e+00> : vector<2x32xf32>
    %269 = tpu.matmul %261, %4, %cst_97 {dimension_numbers = #tpu.dot_dimension_numbers<[1], [0], [0], [1], [0, 0, 1, 1], [], []>} : vector<2x32xf32>, vector<32x32xf32>, vector<2x32xf32> -> vector<2x32xf32>
    %270 = arith.addf %268, %269 : vector<2x32xf32>
    %271 = vector.extract_strided_slice %266 {offsets = [1, 0, 0], sizes = [1, 2, 32], strides = [1, 1, 1]} : vector<4x2x32xf32> to vector<1x2x32xf32>
    %272 = vector.shape_cast %271 : vector<1x2x32xf32> to vector<2x32xf32>
    %cst_98 = arith.constant dense<0.000000e+00> : vector<2x32xf32>
    %273 = tpu.matmul %261, %6, %cst_98 {dimension_numbers = #tpu.dot_dimension_numbers<[1], [0], [0], [1], [0, 0, 1, 1], [], []>} : vector<2x32xf32>, vector<32x32xf32>, vector<2x32xf32> -> vector<2x32xf32>
    %274 = arith.addf %272, %273 : vector<2x32xf32>
    %275 = vector.extract_strided_slice %266 {offsets = [2, 0, 0], sizes = [1, 2, 32], strides = [1, 1, 1]} : vector<4x2x32xf32> to vector<1x2x32xf32>
    %276 = vector.shape_cast %275 : vector<1x2x32xf32> to vector<2x32xf32>
    %cst_99 = arith.constant dense<0.000000e+00> : vector<2x32xf32>
    %277 = tpu.matmul %261, %8, %cst_99 {dimension_numbers = #tpu.dot_dimension_numbers<[1], [0], [0], [1], [0, 0, 1, 1], [], []>} : vector<2x32xf32>, vector<32x32xf32>, vector<2x32xf32> -> vector<2x32xf32>
    %278 = arith.addf %276, %277 : vector<2x32xf32>
    %279 = vector.extract_strided_slice %266 {offsets = [3, 0, 0], sizes = [1, 2, 32], strides = [1, 1, 1]} : vector<4x2x32xf32> to vector<1x2x32xf32>
    %280 = vector.shape_cast %279 : vector<1x2x32xf32> to vector<2x32xf32>
    %cst_100 = arith.constant dense<0.000000e+00> : vector<2x32xf32>
    %281 = tpu.matmul %261, %10, %cst_100 {dimension_numbers = #tpu.dot_dimension_numbers<[1], [0], [0], [1], [0, 0, 1, 1], [], []>} : vector<2x32xf32>, vector<32x32xf32>, vector<2x32xf32> -> vector<2x32xf32>
    %282 = arith.addf %280, %281 : vector<2x32xf32>
    %283 = arith.negf %270 : vector<2x32xf32>
    %284 = math.exp %283 : vector<2x32xf32>
    %cst_101 = arith.constant 1.000000e+00 : f32
    %285 = vector.broadcast %cst_101 : f32 to vector<2x32xf32>
    %286 = arith.addf %285, %284 : vector<2x32xf32>
    %287 = arith.divf %285, %286 : vector<2x32xf32>
    %288 = arith.negf %274 : vector<2x32xf32>
    %289 = math.exp %288 : vector<2x32xf32>
    %cst_102 = arith.constant 1.000000e+00 : f32
    %290 = vector.broadcast %cst_102 : f32 to vector<2x32xf32>
    %291 = arith.addf %290, %289 : vector<2x32xf32>
    %292 = arith.divf %290, %291 : vector<2x32xf32>
    %293 = math.tanh %278 : vector<2x32xf32>
    %294 = arith.negf %282 : vector<2x32xf32>
    %295 = math.exp %294 : vector<2x32xf32>
    %cst_103 = arith.constant 1.000000e+00 : f32
    %296 = vector.broadcast %cst_103 : f32 to vector<2x32xf32>
    %297 = arith.addf %296, %295 : vector<2x32xf32>
    %298 = arith.divf %296, %297 : vector<2x32xf32>
    %299 = arith.mulf %292, %259 : vector<2x32xf32>
    %300 = arith.mulf %287, %293 : vector<2x32xf32>
    %301 = arith.addf %299, %300 : vector<2x32xf32>
    %302 = math.tanh %301 : vector<2x32xf32>
    %303 = arith.mulf %298, %302 : vector<2x32xf32>
    %c6_104 = arith.constant 6 : index
    %c0_105 = arith.constant 0 : index
    %c0_106 = arith.constant 0 : index
    %304 = vector.load %arg4[%c6_104, %c0_105, %c0_106] : memref<8x2x32xf32, #tpu.memory_space<vmem>>, vector<1x2x32xf32>
    %305 = vector.shape_cast %304 : vector<1x2x32xf32> to vector<2x32xf32>
    %306 = vector.shape_cast %303 : vector<2x32xf32> to vector<1x2x32xf32>
    tpu.vector_store %arg4[%c6_104, %c0_105, %c0_106], %306 {strides = array<i32>} : memref<8x2x32xf32, #tpu.memory_space<vmem>>, vector<1x2x32xf32>,
    %c7 = arith.constant 7 : index
    %c0_107 = arith.constant 0 : index
    %c0_108 = arith.constant 0 : index
    %c0_109 = arith.constant 0 : index
    %307 = vector.load %arg2[%c7, %c0_107, %c0_108, %c0_109] : memref<8x4x2x32xf32, #tpu.memory_space<vmem>>, vector<1x4x2x32xf32>
    %308 = vector.shape_cast %307 : vector<1x4x2x32xf32> to vector<4x2x32xf32>
    %309 = vector.extract_strided_slice %308 {offsets = [0, 0, 0], sizes = [1, 2, 32], strides = [1, 1, 1]} : vector<4x2x32xf32> to vector<1x2x32xf32>
    %310 = vector.shape_cast %309 : vector<1x2x32xf32> to vector<2x32xf32>
    %cst_110 = arith.constant dense<0.000000e+00> : vector<2x32xf32>
    %311 = tpu.matmul %303, %4, %cst_110 {dimension_numbers = #tpu.dot_dimension_numbers<[1], [0], [0], [1], [0, 0, 1, 1], [], []>} : vector<2x32xf32>, vector<32x32xf32>, vector<2x32xf32> -> vector<2x32xf32>
    %312 = arith.addf %310, %311 : vector<2x32xf32>
    %313 = vector.extract_strided_slice %308 {offsets = [1, 0, 0], sizes = [1, 2, 32], strides = [1, 1, 1]} : vector<4x2x32xf32> to vector<1x2x32xf32>
    %314 = vector.shape_cast %313 : vector<1x2x32xf32> to vector<2x32xf32>
    %cst_111 = arith.constant dense<0.000000e+00> : vector<2x32xf32>
    %315 = tpu.matmul %303, %6, %cst_111 {dimension_numbers = #tpu.dot_dimension_numbers<[1], [0], [0], [1], [0, 0, 1, 1], [], []>} : vector<2x32xf32>, vector<32x32xf32>, vector<2x32xf32> -> vector<2x32xf32>
    %316 = arith.addf %314, %315 : vector<2x32xf32>
    %317 = vector.extract_strided_slice %308 {offsets = [2, 0, 0], sizes = [1, 2, 32], strides = [1, 1, 1]} : vector<4x2x32xf32> to vector<1x2x32xf32>
    %318 = vector.shape_cast %317 : vector<1x2x32xf32> to vector<2x32xf32>
    %cst_112 = arith.constant dense<0.000000e+00> : vector<2x32xf32>
    %319 = tpu.matmul %303, %8, %cst_112 {dimension_numbers = #tpu.dot_dimension_numbers<[1], [0], [0], [1], [0, 0, 1, 1], [], []>} : vector<2x32xf32>, vector<32x32xf32>, vector<2x32xf32> -> vector<2x32xf32>
    %320 = arith.addf %318, %319 : vector<2x32xf32>
    %321 = vector.extract_strided_slice %308 {offsets = [3, 0, 0], sizes = [1, 2, 32], strides = [1, 1, 1]} : vector<4x2x32xf32> to vector<1x2x32xf32>
    %322 = vector.shape_cast %321 : vector<1x2x32xf32> to vector<2x32xf32>
    %cst_113 = arith.constant dense<0.000000e+00> : vector<2x32xf32>
    %323 = tpu.matmul %303, %10, %cst_113 {dimension_numbers = #tpu.dot_dimension_numbers<[1], [0], [0], [1], [0, 0, 1, 1], [], []>} : vector<2x32xf32>, vector<32x32xf32>, vector<2x32xf32> -> vector<2x32xf32>
    %324 = arith.addf %322, %323 : vector<2x32xf32>
    %325 = arith.negf %312 : vector<2x32xf32>
    %326 = math.exp %325 : vector<2x32xf32>
    %cst_114 = arith.constant 1.000000e+00 : f32
    %327 = vector.broadcast %cst_114 : f32 to vector<2x32xf32>
    %328 = arith.addf %327, %326 : vector<2x32xf32>
    %329 = arith.divf %327, %328 : vector<2x32xf32>
    %330 = arith.negf %316 : vector<2x32xf32>
    %331 = math.exp %330 : vector<2x32xf32>
    %cst_115 = arith.constant 1.000000e+00 : f32
    %332 = vector.broadcast %cst_115 : f32 to vector<2x32xf32>
    %333 = arith.addf %332, %331 : vector<2x32xf32>
    %334 = arith.divf %332, %333 : vector<2x32xf32>
    %335 = math.tanh %320 : vector<2x32xf32>
    %336 = arith.negf %324 : vector<2x32xf32>
    %337 = math.exp %336 : vector<2x32xf32>
    %cst_116 = arith.constant 1.000000e+00 : f32
    %338 = vector.broadcast %cst_116 : f32 to vector<2x32xf32>
    %339 = arith.addf %338, %337 : vector<2x32xf32>
    %340 = arith.divf %338, %339 : vector<2x32xf32>
    %341 = arith.mulf %334, %301 : vector<2x32xf32>
    %342 = arith.mulf %329, %335 : vector<2x32xf32>
    %343 = arith.addf %341, %342 : vector<2x32xf32>
    %344 = math.tanh %343 : vector<2x32xf32>
    %345 = arith.mulf %340, %344 : vector<2x32xf32>
    %c7_117 = arith.constant 7 : index
    %c0_118 = arith.constant 0 : index
    %c0_119 = arith.constant 0 : index
    %346 = vector.load %arg4[%c7_117, %c0_118, %c0_119] : memref<8x2x32xf32, #tpu.memory_space<vmem>>, vector<1x2x32xf32>
    %347 = vector.shape_cast %346 : vector<1x2x32xf32> to vector<2x32xf32>
    %348 = vector.shape_cast %345 : vector<2x32xf32> to vector<1x2x32xf32>
    tpu.vector_store %arg4[%c7_117, %c0_118, %c0_119], %348 {strides = array<i32>} : memref<8x2x32xf32, #tpu.memory_space<vmem>>, vector<1x2x32xf32>,
    %c0_120 = arith.constant 0 : index
    %c0_121 = arith.constant 0 : index
    %349 = vector.load %arg5[%c0_120, %c0_121] : memref<2x32xf32, #tpu.memory_space<vmem>>, vector<2x32xf32>
    tpu.vector_store %arg5[%c0_120, %c0_121], %345 {strides = array<i32>} : memref<2x32xf32, #tpu.memory_space<vmem>>, vector<2x32xf32>,
    %c0_122 = arith.constant 0 : index
    %c0_123 = arith.constant 0 : index
    %350 = vector.load %arg6[%c0_122, %c0_123] : memref<2x32xf32, #tpu.memory_space<vmem>>, vector<2x32xf32>
    tpu.vector_store %arg6[%c0_122, %c0_123], %343 {strides = array<i32>} : memref<2x32xf32, #tpu.memory_space<vmem>>, vector<2x32xf32>,
    return
  }
  func.func @transform_0(%arg0: i32, %arg1: i32) -> (i32, i32, i32, i32) {
    %c0_i32 = arith.constant 0 : i32
    %c0_i32_0 = arith.constant 0 : i32
    %c0_i32_1 = arith.constant 0 : i32
    return %arg1, %c0_i32, %arg0, %c0_i32_0 : i32, i32, i32, i32
  }
  func.func @transform_1(%arg0: i32, %arg1: i32) -> (i32, i32, i32) {
    %c0_i32 = arith.constant 0 : i32
    %c0_i32_0 = arith.constant 0 : i32
    %c0_i32_1 = arith.constant 0 : i32
    %c0_i32_2 = arith.constant 0 : i32
    return %c0_i32, %c0_i32_0, %c0_i32_1 : i32, i32, i32
  }
  func.func @transform_2(%arg0: i32, %arg1: i32) -> (i32, i32, i32) {
    %c0_i32 = arith.constant 0 : i32
    %c0_i32_0 = arith.constant 0 : i32
    return %arg1, %arg0, %c0_i32 : i32, i32, i32
  }
}

</mosaic_0001>

<llo_original>
// kernel: encoder_forward.2
$region0: #{encoder_forward.2}
  #allocation0 [shape = 'u32[]', space=smem, size = 0x4, offset = 0x4, fixed_abs, tag = 'smem constant byte address 0x4 - core index']
  #allocation1 [shape = 'u32[144,128]{1,0:T(1,128)}', space=vmem, size = 0x12000, scoped, tag = 'internal scratch']
  #allocation2 [shape = 'f32[2,32]{1,0:T(2,128)}', space=vmem, size = 0x400, scoped, tag = 'scratch operand']
  #allocation3 [shape = 'f32[2,32]{1,0:T(2,128)}', space=vmem, size = 0x400, scoped, tag = 'scratch operand']
  %s0 = inlined_call_operand.vmem [shape: f32[8,4,2,32], index: 0, kind: input, shape index: {}]
  %s1 = inlined_call_operand.vmem [shape: f32[4,32,32], index: 1, kind: input, shape index: {}]
  %s2 = inlined_call_operand.vmem [shape: f32[8,2,32], index: 2, kind: output, shape index: {}]
  %s3 = sld [smem:[#allocation0]]
  $region22: #{encoder_forward.2} parent=0
    _
  %s5 = ssub.s32 1, %s3
  %s6 = scalar_select 0, %s5, %s3
  // Predicated region
  $region2: #{encoder_forward.2} parent=0 // pred_check
    _
  $region3: #{encoder_forward.2} parent=0 // pred_check_branch
    %8 = sbr.rel (0) target = $region5
  $region4: #{encoder_forward.2} parent=0 // pred_region
    _
  $region5: #{encoder_forward.2} parent=0 // pred_fallthru
    _
  // Predicated region
  $region6: #{encoder_forward.2} parent=0 // pred_check
    _
  $region7: #{encoder_forward.2} parent=0 // pred_check_branch
    %10 = sbr.rel (0) target = $region9
  $region8: #{encoder_forward.2} parent=0 // pred_region
    _
  $region9: #{encoder_forward.2} parent=0 // pred_fallthru
    _
  %p11 = scmp.eq.s32.totalorder 0, 0
  // Predicated region
  $region10: #{encoder_forward.2} parent=0 // pred_check
    %p12 = pneg %p11
  $region11: #{encoder_forward.2} parent=0 // pred_check_branch
    %14 = sbr.rel (%p12) target = $region13
  $region12: #{encoder_forward.2} parent=0 // pred_region
    %vm15 = vcmask 254976
    %16 = vst.msk [vmem:[#allocation2] sm:$0x3] %vm15, 0.0
    %17 = vst.msk [vmem:[#allocation3] sm:$0x3] %vm15, 0.0
  $region13: #{encoder_forward.2} parent=0 // pred_fallthru
    _
  %v18 = vld [vmem:[%s1] sm:$0xff]
  %v19 = vld [vmem:[%s1 + $0x8] sm:$0xff]
  %v20 = vld [vmem:[%s1 + $0x10] sm:$0xff]
  %v21 = vld [vmem:[%s1 + $0x18] sm:$0xff]
  %s22 = scalar_lea.vmem %s1, 32
  %v23 = vld [vmem:[%s22] sm:$0xff]
  %v24 = vld [vmem:[%s22 + $0x8] sm:$0xff]
  %v25 = vld [vmem:[%s22 + $0x10] sm:$0xff]
  %v26 = vld [vmem:[%s22 + $0x18] sm:$0xff]
  %s27 = scalar_lea.vmem %s1, 64
  %v28 = vld [vmem:[%s27] sm:$0xff]
  %v29 = vld [vmem:[%s27 + $0x8] sm:$0xff]
  %v30 = vld [vmem:[%s27 + $0x10] sm:$0xff]
  %v31 = vld [vmem:[%s27 + $0x18] sm:$0xff]
  %s32 = scalar_lea.vmem %s1, 96
  %v33 = vld [vmem:[%s32] sm:$0xff]
  %v34 = vld [vmem:[%s32 + $0x8] sm:$0xff]
  %v35 = vld [vmem:[%s32 + $0x10] sm:$0xff]
  %v36 = vld [vmem:[%s32 + $0x18] sm:$0xff]
  %v37 = vld [vmem:[#allocation2] sm:$0x3]
  %v38 = vld [vmem:[#allocation3] sm:$0x3]
  %v39 = vld [vmem:[%s0] sm:$0x3]
  %v40 = vld [vmem:[%s0 + $0x2] sm:$0x3]
  %v41 = vld [vmem:[%s0 + $0x4] sm:$0x3]
  %v42 = vld [vmem:[%s0 + $0x6] sm:$0x3]
  %vm43 = vcmask 261120
  %v45 = vsel %vm43, %v37, 0
  %47 = vmatprep.subr.mxu0 0.0
  %48 = vmatpush1.msra.mxu0 0.0
  %49 = vmatprep.subr.mxu0 0.0
  %50 = vmatpush1.msra.mxu0 0.0
  %51 = vmatprep.subr.mxu0 0.0
  %52 = vmatpush1.msra.mxu0 0.0
  %53 = vmatprep.subr.mxu0 0.0
  %54 = vmatpush1.msra.mxu0 0.0
  %55 = vmatprep.subr.mxu0 0.0
  %56 = vmatpush1.msra.mxu0 0.0
  %57 = vmatprep.subr.mxu0 0.0
  %58 = vmatpush1.msra.mxu0 0.0
  %59 = vmatprep.subr.mxu0 0.0
  %60 = vmatpush1.msra.mxu0 0.0
  %61 = vmatprep.subr.mxu0 0.0
  %62 = vmatpush1.msra.mxu0 0.0
  %63 = vmatprep.subr.mxu0 0.0
  %64 = vmatpush1.msra.mxu0 0.0
  %65 = vmatprep.subr.mxu0 0.0
  %66 = vmatpush1.msra.mxu0 0.0
  %67 = vmatprep.subr.mxu0 0.0
  %68 = vmatpush1.msra.mxu0 0.0
  %69 = vmatprep.subr.mxu0 0.0
  %70 = vmatpush1.msra.mxu0 0.0
  %71 = vmatprep.subr.mxu0 0.0
  %72 = vmatpush1.msra.mxu0 %v21
  %73 = vmatprep.subr.mxu0 0.0
  %74 = vmatpush1.msra.mxu0 %v20
  %75 = vmatprep.subr.mxu0 0.0
  %76 = vmatpush1.msra.mxu0 %v19
  %77 = vmatprep.subr.mxu0 0.0
  %78 = vmatpush1.msra.mxu0 %v18
  %79 = vmatprep.subr.mxu0 0.0
  %80 = vmatpush2.msra.mxu0 0.0
  %81 = vmatprep.subr.mxu0 0.0
  %82 = vmatpush2.msra.mxu0 0.0
  %83 = vmatprep.subr.mxu0 0.0
  %84 = vmatpush2.msra.mxu0 0.0
  %85 = vmatprep.subr.mxu0 0.0
  %86 = vmatpush2.msra.mxu0 0.0
  %87 = vmatprep.subr.mxu0 0.0
  %88 = vmatpush2.msra.mxu0 0.0
  %89 = vmatprep.subr.mxu0 0.0
  %90 = vmatpush2.msra.mxu0 0.0
  %91 = vmatprep.subr.mxu0 0.0
  %92 = vmatpush2.msra.mxu0 0.0
  %93 = vmatprep.subr.mxu0 0.0
  %94 = vmatpush2.msra.mxu0 0.0
  %95 = vmatprep.subr.mxu0 0.0
  %96 = vmatpush2.msra.mxu0 0.0
  %97 = vmatprep.subr.mxu0 0.0
  %98 = vmatpush2.msra.mxu0 0.0
  %99 = vmatprep.subr.mxu0 0.0
  %100 = vmatpush2.msra.mxu0 0.0
  %101 = vmatprep.subr.mxu0 0.0
  %102 = vmatpush2.msra.mxu0 0.0
  %103 = vmatprep.subr.mxu0 0.0
  %104 = vmatpush2.msra.mxu0 0.0
  %105 = vmatprep.subr.mxu0 0.0
  %106 = vmatpush2.msra.mxu0 0.0
  %107 = vmatprep.subr.mxu0 0.0
  %108 = vmatpush2.msra.mxu0 0.0
  %109 = vmatprep.subr.mxu0 0.0
  %110 = vmatpush2.msra.mxu0 0.0
  %111 = vmatprep.mubr.f32.mxu0 0.0
  %112 = vmatmul.mubr.f32.gmra.mxu0 %v45
  %v113 = vpop.f32.mrf.mxu0
  %v114 = vadd.f32 0.0, %v113
  %v115 = vpop.f32.mrf.mxu0
  %116 = vdwg.mxu0
  %v117 = vadd.f32 %v39, %v114
  %118 = vmatprep.subr.mxu0 0.0
  %119 = vmatpush1.msra.mxu0 0.0
  %120 = vmatprep.subr.mxu0 0.0
  %121 = vmatpush1.msra.mxu0 0.0
  %122 = vmatprep.subr.mxu0 0.0
  %123 = vmatpush1.msra.mxu0 0.0
  %124 = vmatprep.subr.mxu0 0.0
  %125 = vmatpush1.msra.mxu0 0.0
  %126 = vmatprep.subr.mxu0 0.0
  %127 = vmatpush1.msra.mxu0 0.0
  %128 = vmatprep.subr.mxu0 0.0
  %129 = vmatpush1.msra.mxu0 0.0
  %130 = vmatprep.subr.mxu0 0.0
  %131 = vmatpush1.msra.mxu0 0.0
  %132 = vmatprep.subr.mxu0 0.0
  %133 = vmatpush1.msra.mxu0 0.0
  %134 = vmatprep.subr.mxu0 0.0
  %135 = vmatpush1.msra.mxu0 0.0
  %136 = vmatprep.subr.mxu0 0.0
  %137 = vmatpush1.msra.mxu0 0.0
  %138 = vmatprep.subr.mxu0 0.0
  %139 = vmatpush1.msra.mxu0 0.0
  %140 = vmatprep.subr.mxu0 0.0
  %141 = vmatpush1.msra.mxu0 0.0
  %142 = vmatprep.subr.mxu0 0.0
  %143 = vmatpush1.msra.mxu0 %v26
  %144 = vmatprep.subr.mxu0 0.0
  %145 = vmatpush1.msra.mxu0 %v25
  %146 = vmatprep.subr.mxu0 0.0
  %147 = vmatpush1.msra.mxu0 %v24
  %148 = vmatprep.subr.mxu0 0.0
  %149 = vmatpush1.msra.mxu0 %v23
  %150 = vmatprep.subr.mxu0 0.0
  %151 = vmatpush2.msra.mxu0 0.0
  %152 = vmatprep.subr.mxu0 0.0
  %153 = vmatpush2.msra.mxu0 0.0
  %154 = vmatprep.subr.mxu0 0.0
  %155 = vmatpush2.msra.mxu0 0.0
  %156 = vmatprep.subr.mxu0 0.0
  %157 = vmatpush2.msra.mxu0 0.0
  %158 = vmatprep.subr.mxu0 0.0
  %159 = vmatpush2.msra.mxu0 0.0
  %160 = vmatprep.subr.mxu0 0.0
  %161 = vmatpush2.msra.mxu0 0.0
  %162 = vmatprep.subr.mxu0 0.0
  %163 = vmatpush2.msra.mxu0 0.0
  %164 = vmatprep.subr.mxu0 0.0
  %165 = vmatpush2.msra.mxu0 0.0
  %166 = vmatprep.subr.mxu0 0.0
  %167 = vmatpush2.msra.mxu0 0.0
  %168 = vmatprep.subr.mxu0 0.0
  %169 = vmatpush2.msra.mxu0 0.0
  %170 = vmatprep.subr.mxu0 0.0
  %171 = vmatpush2.msra.mxu0 0.0
  %172 = vmatprep.subr.mxu0 0.0
  %173 = vmatpush2.msra.mxu0 0.0
  %174 = vmatprep.subr.mxu0 0.0
  %175 = vmatpush2.msra.mxu0 0.0
  %176 = vmatprep.subr.mxu0 0.0
  %177 = vmatpush2.msra.mxu0 0.0
  %178 = vmatprep.subr.mxu0 0.0
  %179 = vmatpush2.msra.mxu0 0.0
  %180 = vmatprep.subr.mxu0 0.0
  %181 = vmatpush2.msra.mxu0 0.0
  %182 = vmatprep.mubr.f32.mxu0 0.0
  %183 = vmatmul.mubr.f32.gmra.mxu0 %v45
  %v184 = vpop.f32.mrf.mxu0
  %v185 = vadd.f32 0.0, %v184
  %v186 = vpop.f32.mrf.mxu0
  %187 = vdwg.mxu0
  %v188 = vadd.f32 %v40, %v185
  %189 = vmatprep.subr.mxu0 0.0
  %190 = vmatpush1.msra.mxu0 0.0
  %191 = vmatprep.subr.mxu0 0.0
  %192 = vmatpush1.msra.mxu0 0.0
  %193 = vmatprep.subr.mxu0 0.0
  %194 = vmatpush1.msra.mxu0 0.0
  %195 = vmatprep.subr.mxu0 0.0
  %196 = vmatpush1.msra.mxu0 0.0
  %197 = vmatprep.subr.mxu0 0.0
  %198 = vmatpush1.msra.mxu0 0.0
  %199 = vmatprep.subr.mxu0 0.0
  %200 = vmatpush1.msra.mxu0 0.0
  %201 = vmatprep.subr.mxu0 0.0
  %202 = vmatpush1.msra.mxu0 0.0
  %203 = vmatprep.subr.mxu0 0.0
  %204 = vmatpush1.msra.mxu0 0.0
  %205 = vmatprep.subr.mxu0 0.0
  %206 = vmatpush1.msra.mxu0 0.0
  %207 = vmatprep.subr.mxu0 0.0
  %208 = vmatpush1.msra.mxu0 0.0
  %209 = vmatprep.subr.mxu0 0.0
  %210 = vmatpush1.msra.mxu0 0.0
  %211 = vmatprep.subr.mxu0 0.0
  %212 = vmatpush1.msra.mxu0 0.0
  %213 = vmatprep.subr.mxu0 0.0
  %214 = vmatpush1.msra.mxu0 %v31
  %215 = vmatprep.subr.mxu0 0.0
  %216 = vmatpush1.msra.mxu0 %v30
  %217 = vmatprep.subr.mxu0 0.0
  %218 = vmatpush1.msra.mxu0 %v29
  %219 = vmatprep.subr.mxu0 0.0
  %220 = vmatpush1.msra.mxu0 %v28
  %221 = vmatprep.subr.mxu0 0.0
  %222 = vmatpush2.msra.mxu0 0.0
  %223 = vmatprep.subr.mxu0 0.0
  %224 = vmatpush2.msra.mxu0 0.0
  %225 = vmatprep.subr.mxu0 0.0
  %226 = vmatpush2.msra.mxu0 0.0
  %227 = vmatprep.subr.mxu0 0.0
  %228 = vmatpush2.msra.mxu0 0.0
  %229 = vmatprep.subr.mxu0 0.0
  %230 = vmatpush2.msra.mxu0 0.0
  %231 = vmatprep.subr.mxu0 0.0
  %232 = vmatpush2.msra.mxu0 0.0
  %233 = vmatprep.subr.mxu0 0.0
  %234 = vmatpush2.msra.mxu0 0.0
  %235 = vmatprep.subr.mxu0 0.0
  %236 = vmatpush2.msra.mxu0 0.0
  %237 = vmatprep.subr.mxu0 0.0
  %238 = vmatpush2.msra.mxu0 0.0
  %239 = vmatprep.subr.mxu0 0.0
  %240 = vmatpush2.msra.mxu0 0.0
  %241 = vmatprep.subr.mxu0 0.0
  %242 = vmatpush2.msra.mxu0 0.0
  %243 = vmatprep.subr.mxu0 0.0
  %244 = vmatpush2.msra.mxu0 0.0
  %245 = vmatprep.subr.mxu0 0.0
  %246 = vmatpush2.msra.mxu0 0.0
  %247 = vmatprep.subr.mxu0 0.0
  %248 = vmatpush2.msra.mxu0 0.0
  %249 = vmatprep.subr.mxu0 0.0
  %250 = vmatpush2.msra.mxu0 0.0
  %251 = vmatprep.subr.mxu0 0.0
  %252 = vmatpush2.msra.mxu0 0.0
  %253 = vmatprep.mubr.f32.mxu0 0.0
  %254 = vmatmul.mubr.f32.gmra.mxu0 %v45
  %v255 = vpop.f32.mrf.mxu0
  %v256 = vadd.f32 0.0, %v255
  %v257 = vpop.f32.mrf.mxu0
  %258 = vdwg.mxu0
  %v259 = vadd.f32 %v41, %v256
  %260 = vmatprep.subr.mxu0 0.0
  %261 = vmatpush1.msra.mxu0 0.0
  %262 = vmatprep.subr.mxu0 0.0
  %263 = vmatpush1.msra.mxu0 0.0
  %264 = vmatprep.subr.mxu0 0.0
  %265 = vmatpush1.msra.mxu0 0.0
  %266 = vmatprep.subr.mxu0 0.0
  %267 = vmatpush1.msra.mxu0 0.0
  %268 = vmatprep.subr.mxu0 0.0
  %269 = vmatpush1.msra.mxu0 0.0
  %270 = vmatprep.subr.mxu0 0.0
  %271 = vmatpush1.msra.mxu0 0.0
  %272 = vmatprep.subr.mxu0 0.0
  %273 = vmatpush1.msra.mxu0 0.0
  %274 = vmatprep.subr.mxu0 0.0
  %275 = vmatpush1.msra.mxu0 0.0
  %276 = vmatprep.subr.mxu0 0.0
  %277 = vmatpush1.msra.mxu0 0.0
  %278 = vmatprep.subr.mxu0 0.0
  %279 = vmatpush1.msra.mxu0 0.0
  %280 = vmatprep.subr.mxu0 0.0
  %281 = vmatpush1.msra.mxu0 0.0
  %282 = vmatprep.subr.mxu0 0.0
  %283 = vmatpush1.msra.mxu0 0.0
  %284 = vmatprep.subr.mxu0 0.0
  %285 = vmatpush1.msra.mxu0 %v36
  %286 = vmatprep.subr.mxu0 0.0
  %287 = vmatpush1.msra.mxu0 %v35
  %288 = vmatprep.subr.mxu0 0.0
  %289 = vmatpush1.msra.mxu0 %v34
  %290 = vmatprep.subr.mxu0 0.0
  %291 = vmatpush1.msra.mxu0 %v33
  %292 = vmatprep.subr.mxu0 0.0
  %293 = vmatpush2.msra.mxu0 0.0
  %294 = vmatprep.subr.mxu0 0.0
  %295 = vmatpush2.msra.mxu0 0.0
  %296 = vmatprep.subr.mxu0 0.0
  %297 = vmatpush2.msra.mxu0 0.0
  %298 = vmatprep.subr.mxu0 0.0
  %299 = vmatpush2.msra.mxu0 0.0
  %300 = vmatprep.subr.mxu0 0.0
  %301 = vmatpush2.msra.mxu0 0.0
  %302 = vmatprep.subr.mxu0 0.0
  %303 = vmatpush2.msra.mxu0 0.0
  %304 = vmatprep.subr.mxu0 0.0
  %305 = vmatpush2.msra.mxu0 0.0
  %306 = vmatprep.subr.mxu0 0.0
  %307 = vmatpush2.msra.mxu0 0.0
  %308 = vmatprep.subr.mxu0 0.0
  %309 = vmatpush2.msra.mxu0 0.0
  %310 = vmatprep.subr.mxu0 0.0
  %311 = vmatpush2.msra.mxu0 0.0
  %312 = vmatprep.subr.mxu0 0.0
  %313 = vmatpush2.msra.mxu0 0.0
  %314 = vmatprep.subr.mxu0 0.0
  %315 = vmatpush2.msra.mxu0 0.0
  %316 = vmatprep.subr.mxu0 0.0
  %317 = vmatpush2.msra.mxu0 0.0
  %318 = vmatprep.subr.mxu0 0.0
  %319 = vmatpush2.msra.mxu0 0.0
  %320 = vmatprep.subr.mxu0 0.0
  %321 = vmatpush2.msra.mxu0 0.0
  %322 = vmatprep.subr.mxu0 0.0
  %323 = vmatpush2.msra.mxu0 0.0
  %324 = vmatprep.mubr.f32.mxu0 0.0
  %325 = vmatmul.mubr.f32.gmra.mxu0 %v45
  %v326 = vpop.f32.mrf.mxu0
  %v327 = vadd.f32 0.0, %v326
  %v328 = vpop.f32.mrf.mxu0
  %329 = vdwg.mxu0
  %v330 = vadd.f32 %v42, %v327
  %v331 = vxor.u32 %v117, 2147483648
  %v332 = vmul.f32 %v331, 1.442695
  %v333 = vpow.pop %v332
  %v334 = vadd.f32 %v333, 1.0
  %v335 = vrcp.pop %v334
  %v336 = vmul.f32 1.0, %v335
  %v337 = vxor.u32 %v188, 2147483648
  %v338 = vmul.f32 %v337, 1.442695
  %v339 = vpow.pop %v338
  %v340 = vadd.f32 %v339, 1.0
  %v341 = vrcp.pop %v340
  %v342 = vmul.f32 1.0, %v341
  %v343 = vtanh.pop %v259
  %v344 = vxor.u32 %v330, 2147483648
  %v345 = vmul.f32 %v344, 1.442695
  %v346 = vpow.pop %v345
  %v347 = vadd.f32 %v346, 1.0
  %v348 = vrcp.pop %v347
  %v349 = vmul.f32 1.0, %v348
  %v350 = vmul.f32 %v342, %v38
  %v351 = vmul.f32 %v336, %v343
  %v352 = vadd.f32 %v350, %v351
  %v353 = vtanh.pop %v352
  %v354 = vmul.f32 %v349, %v353
  %vm355 = vcmask 254976
  %356 = vst.msk [vmem:[%s2] sm:$0x3] %vm355, %v354
  %s357 = scalar_lea.vmem %s0, 8
  %v358 = vld [vmem:[%s357] sm:$0x3]
  %v359 = vld [vmem:[%s357 + $0x2] sm:$0x3]
  %v360 = vld [vmem:[%s357 + $0x4] sm:$0x3]
  %v361 = vld [vmem:[%s357 + $0x6] sm:$0x3]
  %v363 = vsel %vm43, %v354, 0
  %365 = vmatprep.subr.mxu0 0.0
  %366 = vmatpush1.msra.mxu0 0.0
  %367 = vmatprep.subr.mxu0 0.0
  %368 = vmatpush1.msra.mxu0 0.0
  %369 = vmatprep.subr.mxu0 0.0
  %370 = vmatpush1.msra.mxu0 0.0
  %371 = vmatprep.subr.mxu0 0.0
  %372 = vmatpush1.msra.mxu0 0.0
  %373 = vmatprep.subr.mxu0 0.0
  %374 = vmatpush1.msra.mxu0 0.0
  %375 = vmatprep.subr.mxu0 0.0
  %376 = vmatpush1.msra.mxu0 0.0
  %377 = vmatprep.subr.mxu0 0.0
  %378 = vmatpush1.msra.mxu0 0.0
  %379 = vmatprep.subr.mxu0 0.0
  %380 = vmatpush1.msra.mxu0 0.0
  %381 = vmatprep.subr.mxu0 0.0
  %382 = vmatpush1.msra.mxu0 0.0
  %383 = vmatprep.subr.mxu0 0.0
  %384 = vmatpush1.msra.mxu0 0.0
  %385 = vmatprep.subr.mxu0 0.0
  %386 = vmatpush1.msra.mxu0 0.0
  %387 = vmatprep.subr.mxu0 0.0
  %388 = vmatpush1.msra.mxu0 0.0
  %389 = vmatprep.subr.mxu0 0.0
  %390 = vmatpush1.msra.mxu0 %v21
  %391 = vmatprep.subr.mxu0 0.0
  %392 = vmatpush1.msra.mxu0 %v20
  %393 = vmatprep.subr.mxu0 0.0
  %394 = vmatpush1.msra.mxu0 %v19
  %395 = vmatprep.subr.mxu0 0.0
  %396 = vmatpush1.msra.mxu0 %v18
  %397 = vmatprep.subr.mxu0 0.0
  %398 = vmatpush2.msra.mxu0 0.0
  %399 = vmatprep.subr.mxu0 0.0
  %400 = vmatpush2.msra.mxu0 0.0
  %401 = vmatprep.subr.mxu0 0.0
  %402 = vmatpush2.msra.mxu0 0.0
  %403 = vmatprep.subr.mxu0 0.0
  %404 = vmatpush2.msra.mxu0 0.0
  %405 = vmatprep.subr.mxu0 0.0
  %406 = vmatpush2.msra.mxu0 0.0
  %407 = vmatprep.subr.mxu0 0.0
  %408 = vmatpush2.msra.mxu0 0.0
  %409 = vmatprep.subr.mxu0 0.0
  %410 = vmatpush2.msra.mxu0 0.0
  %411 = vmatprep.subr.mxu0 0.0
  %412 = vmatpush2.msra.mxu0 0.0
  %413 = vmatprep.subr.mxu0 0.0
  %414 = vmatpush2.msra.mxu0 0.0
  %415 = vmatprep.subr.mxu0 0.0
  %416 = vmatpush2.msra.mxu0 0.0
  %417 = vmatprep.subr.mxu0 0.0
  %418 = vmatpush2.msra.mxu0 0.0
  %419 = vmatprep.subr.mxu0 0.0
  %420 = vmatpush2.msra.mxu0 0.0
  %421 = vmatprep.subr.mxu0 0.0
  %422 = vmatpush2.msra.mxu0 0.0
  %423 = vmatprep.subr.mxu0 0.0
  %424 = vmatpush2.msra.mxu0 0.0
  %425 = vmatprep.subr.mxu0 0.0
  %426 = vmatpush2.msra.mxu0 0.0
  %427 = vmatprep.subr.mxu0 0.0
  %428 = vmatpush2.msra.mxu0 0.0
  %429 = vmatprep.mubr.f32.mxu0 0.0
  %430 = vmatmul.mubr.f32.gmra.mxu0 %v363
  %v431 = vpop.f32.mrf.mxu0
  %v432 = vadd.f32 0.0, %v431
  %v433 = vpop.f32.mrf.mxu0
  %434 = vdwg.mxu0
  %v435 = vadd.f32 %v358, %v432
  %436 = vmatprep.subr.mxu0 0.0
  %437 = vmatpush1.msra.mxu0 0.0
  %438 = vmatprep.subr.mxu0 0.0
  %439 = vmatpush1.msra.mxu0 0.0
  %440 = vmatprep.subr.mxu0 0.0
  %441 = vmatpush1.msra.mxu0 0.0
  %442 = vmatprep.subr.mxu0 0.0
  %443 = vmatpush1.msra.mxu0 0.0
  %444 = vmatprep.subr.mxu0 0.0
  %445 = vmatpush1.msra.mxu0 0.0
  %446 = vmatprep.subr.mxu0 0.0
  %447 = vmatpush1.msra.mxu0 0.0
  %448 = vmatprep.subr.mxu0 0.0
  %449 = vmatpush1.msra.mxu0 0.0
  %450 = vmatprep.subr.mxu0 0.0
  %451 = vmatpush1.msra.mxu0 0.0
  %452 = vmatprep.subr.mxu0 0.0
  %453 = vmatpush1.msra.mxu0 0.0
  %454 = vmatprep.subr.mxu0 0.0
  %455 = vmatpush1.msra.mxu0 0.0
  %456 = vmatprep.subr.mxu0 0.0
  %457 = vmatpush1.msra.mxu0 0.0
  %458 = vmatprep.subr.mxu0 0.0
  %459 = vmatpush1.msra.mxu0 0.0
  %460 = vmatprep.subr.mxu0 0.0
  %461 = vmatpush1.msra.mxu0 %v26
  %462 = vmatprep.subr.mxu0 0.0
  %463 = vmatpush1.msra.mxu0 %v25
  %464 = vmatprep.subr.mxu0 0.0
  %465 = vmatpush1.msra.mxu0 %v24
  %466 = vmatprep.subr.mxu0 0.0
  %467 = vmatpush1.msra.mxu0 %v23
  %468 = vmatprep.subr.mxu0 0.0
  %469 = vmatpush2.msra.mxu0 0.0
  %470 = vmatprep.subr.mxu0 0.0
  %471 = vmatpush2.msra.mxu0 0.0
  %472 = vmatprep.subr.mxu0 0.0
  %473 = vmatpush2.msra.mxu0 0.0
  %474 = vmatprep.subr.mxu0 0.0
  %475 = vmatpush2.msra.mxu0 0.0
  %476 = vmatprep.subr.mxu0 0.0
  %477 = vmatpush2.msra.mxu0 0.0
  %478 = vmatprep.subr.mxu0 0.0
  %479 = vmatpush2.msra.mxu0 0.0
  %480 = vmatprep.subr.mxu0 0.0
  %481 = vmatpush2.msra.mxu0 0.0
  %482 = vmatprep.subr.mxu0 0.0
  %483 = vmatpush2.msra.mxu0 0.0
  %484 = vmatprep.subr.mxu0 0.0
  %485 = vmatpush2.msra.mxu0 0.0
  %486 = vmatprep.subr.mxu0 0.0
  %487 = vmatpush2.msra.mxu0 0.0
  %488 = vmatprep.subr.mxu0 0.0
  %489 = vmatpush2.msra.mxu0 0.0
  %490 = vmatprep.subr.mxu0 0.0
  %491 = vmatpush2.msra.mxu0 0.0
  %492 = vmatprep.subr.mxu0 0.0
  %493 = vmatpush2.msra.mxu0 0.0
  %494 = vmatprep.subr.mxu0 0.0
  %495 = vmatpush2.msra.mxu0 0.0
  %496 = vmatprep.subr.mxu0 0.0
  %497 = vmatpush2.msra.mxu0 0.0
  %498 = vmatprep.subr.mxu0 0.0
  %499 = vmatpush2.msra.mxu0 0.0
  %500 = vmatprep.mubr.f32.mxu0 0.0
  %501 = vmatmul.mubr.f32.gmra.mxu0 %v363
  %v502 = vpop.f32.mrf.mxu0
  %v503 = vadd.f32 0.0, %v502
  %v504 = vpop.f32.mrf.mxu0
  %505 = vdwg.mxu0
  %v506 = vadd.f32 %v359, %v503
  %507 = vmatprep.subr.mxu0 0.0
  %508 = vmatpush1.msra.mxu0 0.0
  %509 = vmatprep.subr.mxu0 0.0
  %510 = vmatpush1.msra.mxu0 0.0
  %511 = vmatprep.subr.mxu0 0.0
  %512 = vmatpush1.msra.mxu0 0.0
  %513 = vmatprep.subr.mxu0 0.0
  %514 = vmatpush1.msra.mxu0 0.0
  %515 = vmatprep.subr.mxu0 0.0
  %516 = vmatpush1.msra.mxu0 0.0
  %517 = vmatprep.subr.mxu0 0.0
  %518 = vmatpush1.msra.mxu0 0.0
  %519 = vmatprep.subr.mxu0 0.0
  %520 = vmatpush1.msra.mxu0 0.0
  %521 = vmatprep.subr.mxu0 0.0
  %522 = vmatpush1.msra.mxu0 0.0
  %523 = vmatprep.subr.mxu0 0.0
  %524 = vmatpush1.msra.mxu0 0.0
  %525 = vmatprep.subr.mxu0 0.0
  %526 = vmatpush1.msra.mxu0 0.0
  %527 = vmatprep.subr.mxu0 0.0
  %528 = vmatpush1.msra.mxu0 0.0
  %529 = vmatprep.subr.mxu0 0.0
  %530 = vmatpush1.msra.mxu0 0.0
  %531 = vmatprep.subr.mxu0 0.0
  %532 = vmatpush1.msra.mxu0 %v31
  %533 = vmatprep.subr.mxu0 0.0
  %534 = vmatpush1.msra.mxu0 %v30
  %535 = vmatprep.subr.mxu0 0.0
  %536 = vmatpush1.msra.mxu0 %v29
  %537 = vmatprep.subr.mxu0 0.0
  %538 = vmatpush1.msra.mxu0 %v28
  %539 = vmatprep.subr.mxu0 0.0
  %540 = vmatpush2.msra.mxu0 0.0
  %541 = vmatprep.subr.mxu0 0.0
  %542 = vmatpush2.msra.mxu0 0.0
  %543 = vmatprep.subr.mxu0 0.0
  %544 = vmatpush2.msra.mxu0 0.0
  %545 = vmatprep.subr.mxu0 0.0
  %546 = vmatpush2.msra.mxu0 0.0
  %547 = vmatprep.subr.mxu0 0.0
  %548 = vmatpush2.msra.mxu0 0.0
  %549 = vmatprep.subr.mxu0 0.0
  %550 = vmatpush2.msra.mxu0 0.0
  %551 = vmatprep.subr.mxu0 0.0
  %552 = vmatpush2.msra.mxu0 0.0
  %553 = vmatprep.subr.mxu0 0.0
  %554 = vmatpush2.msra.mxu0 0.0
  %555 = vmatprep.subr.mxu0 0.0
  %556 = vmatpush2.msra.mxu0 0.0
  %557 = vmatprep.subr.mxu0 0.0
  %558 = vmatpush2.msra.mxu0 0.0
  %559 = vmatprep.subr.mxu0 0.0
  %560 = vmatpush2.msra.mxu0 0.0
  %561 = vmatprep.subr.mxu0 0.0
  %562 = vmatpush2.msra.mxu0 0.0
  %563 = vmatprep.subr.mxu0 0.0
  %564 = vmatpush2.msra.mxu0 0.0
  %565 = vmatprep.subr.mxu0 0.0
  %566 = vmatpush2.msra.mxu0 0.0
  %567 = vmatprep.subr.mxu0 0.0
  %568 = vmatpush2.msra.mxu0 0.0
  %569 = vmatprep.subr.mxu0 0.0
  %570 = vmatpush2.msra.mxu0 0.0
  %571 = vmatprep.mubr.f32.mxu0 0.0
  %572 = vmatmul.mubr.f32.gmra.mxu0 %v363
  %v573 = vpop.f32.mrf.mxu0
  %v574 = vadd.f32 0.0, %v573
  %v575 = vpop.f32.mrf.mxu0
  %576 = vdwg.mxu0
  %v577 = vadd.f32 %v360, %v574
  %578 = vmatprep.subr.mxu0 0.0
  %579 = vmatpush1.msra.mxu0 0.0
  %580 = vmatprep.subr.mxu0 0.0
  %581 = vmatpush1.msra.mxu0 0.0
  %582 = vmatprep.subr.mxu0 0.0
  %583 = vmatpush1.msra.mxu0 0.0
  %584 = vmatprep.subr.mxu0 0.0
  %585 = vmatpush1.msra.mxu0 0.0
  %586 = vmatprep.subr.mxu0 0.0
  %587 = vmatpush1.msra.mxu0 0.0
  %588 = vmatprep.subr.mxu0 0.0
  %589 = vmatpush1.msra.mxu0 0.0
  %590 = vmatprep.subr.mxu0 0.0
  %591 = vmatpush1.msra.mxu0 0.0
  %592 = vmatprep.subr.mxu0 0.0
  %593 = vmatpush1.msra.mxu0 0.0
  %594 = vmatprep.subr.mxu0 0.0
  %595 = vmatpush1.msra.mxu0 0.0
  %596 = vmatprep.subr.mxu0 0.0
  %597 = vmatpush1.msra.mxu0 0.0
  %598 = vmatprep.subr.mxu0 0.0
  %599 = vmatpush1.msra.mxu0 0.0
  %600 = vmatprep.subr.mxu0 0.0
  %601 = vmatpush1.msra.mxu0 0.0
  %602 = vmatprep.subr.mxu0 0.0
  %603 = vmatpush1.msra.mxu0 %v36
  %604 = vmatprep.subr.mxu0 0.0
  %605 = vmatpush1.msra.mxu0 %v35
  %606 = vmatprep.subr.mxu0 0.0
  %607 = vmatpush1.msra.mxu0 %v34
  %608 = vmatprep.subr.mxu0 0.0
  %609 = vmatpush1.msra.mxu0 %v33
  %610 = vmatprep.subr.mxu0 0.0
  %611 = vmatpush2.msra.mxu0 0.0
  %612 = vmatprep.subr.mxu0 0.0
  %613 = vmatpush2.msra.mxu0 0.0
  %614 = vmatprep.subr.mxu0 0.0
  %615 = vmatpush2.msra.mxu0 0.0
  %616 = vmatprep.subr.mxu0 0.0
  %617 = vmatpush2.msra.mxu0 0.0
  %618 = vmatprep.subr.mxu0 0.0
  %619 = vmatpush2.msra.mxu0 0.0
  %620 = vmatprep.subr.mxu0 0.0
  %621 = vmatpush2.msra.mxu0 0.0
  %622 = vmatprep.subr.mxu0 0.0
  %623 = vmatpush2.msra.mxu0 0.0
  %624 = vmatprep.subr.mxu0 0.0
  %625 = vmatpush2.msra.mxu0 0.0
  %626 = vmatprep.subr.mxu0 0.0
  %627 = vmatpush2.msra.mxu0 0.0
  %628 = vmatprep.subr.mxu0 0.0
  %629 = vmatpush2.msra.mxu0 0.0
  %630 = vmatprep.subr.mxu0 0.0
  %631 = vmatpush2.msra.mxu0 0.0
  %632 = vmatprep.subr.mxu0 0.0
  %633 = vmatpush2.msra.mxu0 0.0
  %634 = vmatprep.subr.mxu0 0.0
  %635 = vmatpush2.msra.mxu0 0.0
  %636 = vmatprep.subr.mxu0 0.0
  %637 = vmatpush2.msra.mxu0 0.0
  %638 = vmatprep.subr.mxu0 0.0
  %639 = vmatpush2.msra.mxu0 0.0
  %640 = vmatprep.subr.mxu0 0.0
  %641 = vmatpush2.msra.mxu0 0.0
  %642 = vmatprep.mubr.f32.mxu0 0.0
  %643 = vmatmul.mubr.f32.gmra.mxu0 %v363
  %v644 = vpop.f32.mrf.mxu0
  %v645 = vadd.f32 0.0, %v644
  %v646 = vpop.f32.mrf.mxu0
  %647 = vdwg.mxu0
  %v648 = vadd.f32 %v361, %v645
  %v649 = vxor.u32 %v435, 2147483648
  %v650 = vmul.f32 %v649, 1.442695
  %v651 = vpow.pop %v650
  %v652 = vadd.f32 %v651, 1.0
  %v653 = vrcp.pop %v652
  %v654 = vmul.f32 1.0, %v653
  %v655 = vxor.u32 %v506, 2147483648
  %v656 = vmul.f32 %v655, 1.442695
  %v657 = vpow.pop %v656
  %v658 = vadd.f32 %v657, 1.0
  %v659 = vrcp.pop %v658
  %v660 = vmul.f32 1.0, %v659
  %v661 = vtanh.pop %v577
  %v662 = vxor.u32 %v648, 2147483648
  %v663 = vmul.f32 %v662, 1.442695
  %v664 = vpow.pop %v663
  %v665 = vadd.f32 %v664, 1.0
  %v666 = vrcp.pop %v665
  %v667 = vmul.f32 1.0, %v666
  %v668 = vmul.f32 %v660, %v352
  %v669 = vmul.f32 %v654, %v661
  %v670 = vadd.f32 %v668, %v669
  %v671 = vtanh.pop %v670
  %v672 = vmul.f32 %v667, %v671
  %s673 = scalar_lea.vmem %s2, 2
  %674 = vst.msk [vmem:[%s673] sm:$0x3] %vm355, %v672
  %s675 = scalar_lea.vmem %s0, 16
  %v676 = vld [vmem:[%s675] sm:$0x3]
  %v677 = vld [vmem:[%s675 + $0x2] sm:$0x3]
  %v678 = vld [vmem:[%s675 + $0x4] sm:$0x3]
  %v679 = vld [vmem:[%s675 + $0x6] sm:$0x3]
  %v681 = vsel %vm43, %v672, 0
  %683 = vmatprep.subr.mxu0 0.0
  %684 = vmatpush1.msra.mxu0 0.0
  %685 = vmatprep.subr.mxu0 0.0
  %686 = vmatpush1.msra.mxu0 0.0
  %687 = vmatprep.subr.mxu0 0.0
  %688 = vmatpush1.msra.mxu0 0.0
  %689 = vmatprep.subr.mxu0 0.0
  %690 = vmatpush1.msra.mxu0 0.0
  %691 = vmatprep.subr.mxu0 0.0
  %692 = vmatpush1.msra.mxu0 0.0
  %693 = vmatprep.subr.mxu0 0.0
  %694 = vmatpush1.msra.mxu0 0.0
  %695 = vmatprep.subr.mxu0 0.0
  %696 = vmatpush1.msra.mxu0 0.0
  %697 = vmatprep.subr.mxu0 0.0
  %698 = vmatpush1.msra.mxu0 0.0
  %699 = vmatprep.subr.mxu0 0.0
  %700 = vmatpush1.msra.mxu0 0.0
  %701 = vmatprep.subr.mxu0 0.0
  %702 = vmatpush1.msra.mxu0 0.0
  %703 = vmatprep.subr.mxu0 0.0
  %704 = vmatpush1.msra.mxu0 0.0
  %705 = vmatprep.subr.mxu0 0.0
  %706 = vmatpush1.msra.mxu0 0.0
  %707 = vmatprep.subr.mxu0 0.0
  %708 = vmatpush1.msra.mxu0 %v21
  %709 = vmatprep.subr.mxu0 0.0
  %710 = vmatpush1.msra.mxu0 %v20
  %711 = vmatprep.subr.mxu0 0.0
  %712 = vmatpush1.msra.mxu0 %v19
  %713 = vmatprep.subr.mxu0 0.0
  %714 = vmatpush1.msra.mxu0 %v18
  %715 = vmatprep.subr.mxu0 0.0
  %716 = vmatpush2.msra.mxu0 0.0
  %717 = vmatprep.subr.mxu0 0.0
  %718 = vmatpush2.msra.mxu0 0.0
  %719 = vmatprep.subr.mxu0 0.0
  %720 = vmatpush2.msra.mxu0 0.0
  %721 = vmatprep.subr.mxu0 0.0
  %722 = vmatpush2.msra.mxu0 0.0
  %723 = vmatprep.subr.mxu0 0.0
  %724 = vmatpush2.msra.mxu0 0.0
  %725 = vmatprep.subr.mxu0 0.0
  %726 = vmatpush2.msra.mxu0 0.0
  %727 = vmatprep.subr.mxu0 0.0
  %728 = vmatpush2.msra.mxu0 0.0
  %729 = vmatprep.subr.mxu0 0.0
  %730 = vmatpush2.msra.mxu0 0.0
  %731 = vmatprep.subr.mxu0 0.0
  %732 = vmatpush2.msra.mxu0 0.0
  %733 = vmatprep.subr.mxu0 0.0
  %734 = vmatpush2.msra.mxu0 0.0
  %735 = vmatprep.subr.mxu0 0.0
  %736 = vmatpush2.msra.mxu0 0.0
  %737 = vmatprep.subr.mxu0 0.0
  %738 = vmatpush2.msra.mxu0 0.0
  %739 = vmatprep.subr.mxu0 0.0
  %740 = vmatpush2.msra.mxu0 0.0
  %741 = vmatprep.subr.mxu0 0.0
  %742 = vmatpush2.msra.mxu0 0.0
  %743 = vmatprep.subr.mxu0 0.0
  %744 = vmatpush2.msra.mxu0 0.0
  %745 = vmatprep.subr.mxu0 0.0
  %746 = vmatpush2.msra.mxu0 0.0
  %747 = vmatprep.mubr.f32.mxu0 0.0
  %748 = vmatmul.mubr.f32.gmra.mxu0 %v681
  %v749 = vpop.f32.mrf.mxu0
  %v750 = vadd.f32 0.0, %v749
  %v751 = vpop.f32.mrf.mxu0
  %752 = vdwg.mxu0
  %v753 = vadd.f32 %v676, %v750
  %754 = vmatprep.subr.mxu0 0.0
  %755 = vmatpush1.msra.mxu0 0.0
  %756 = vmatprep.subr.mxu0 0.0
  %757 = vmatpush1.msra.mxu0 0.0
  %758 = vmatprep.subr.mxu0 0.0
  %759 = vmatpush1.msra.mxu0 0.0
  %760 = vmatprep.subr.mxu0 0.0
  %761 = vmatpush1.msra.mxu0 0.0
  %762 = vmatprep.subr.mxu0 0.0
  %763 = vmatpush1.msra.mxu0 0.0
  %764 = vmatprep.subr.mxu0 0.0
  %765 = vmatpush1.msra.mxu0 0.0
  %766 = vmatprep.subr.mxu0 0.0
  %767 = vmatpush1.msra.mxu0 0.0
  %768 = vmatprep.subr.mxu0 0.0
  %769 = vmatpush1.msra.mxu0 0.0
  %770 = vmatprep.subr.mxu0 0.0
  %771 = vmatpush1.msra.mxu0 0.0
  %772 = vmatprep.subr.mxu0 0.0
  %773 = vmatpush1.msra.mxu0 0.0
  %774 = vmatprep.subr.mxu0 0.0
  %775 = vmatpush1.msra.mxu0 0.0
  %776 = vmatprep.subr.mxu0 0.0
  %777 = vmatpush1.msra.mxu0 0.0
  %778 = vmatprep.subr.mxu0 0.0
  %779 = vmatpush1.msra.mxu0 %v26
  %780 = vmatprep.subr.mxu0 0.0
  %781 = vmatpush1.msra.mxu0 %v25
  %782 = vmatprep.subr.mxu0 0.0
  %783 = vmatpush1.msra.mxu0 %v24
  %784 = vmatprep.subr.mxu0 0.0
  %785 = vmatpush1.msra.mxu0 %v23
  %786 = vmatprep.subr.mxu0 0.0
  %787 = vmatpush2.msra.mxu0 0.0
  %788 = vmatprep.subr.mxu0 0.0
  %789 = vmatpush2.msra.mxu0 0.0
  %790 = vmatprep.subr.mxu0 0.0
  %791 = vmatpush2.msra.mxu0 0.0
  %792 = vmatprep.subr.mxu0 0.0
  %793 = vmatpush2.msra.mxu0 0.0
  %794 = vmatprep.subr.mxu0 0.0
  %795 = vmatpush2.msra.mxu0 0.0
  %796 = vmatprep.subr.mxu0 0.0
  %797 = vmatpush2.msra.mxu0 0.0
  %798 = vmatprep.subr.mxu0 0.0
  %799 = vmatpush2.msra.mxu0 0.0
  %800 = vmatprep.subr.mxu0 0.0
  %801 = vmatpush2.msra.mxu0 0.0
  %802 = vmatprep.subr.mxu0 0.0
  %803 = vmatpush2.msra.mxu0 0.0
  %804 = vmatprep.subr.mxu0 0.0
  %805 = vmatpush2.msra.mxu0 0.0
  %806 = vmatprep.subr.mxu0 0.0
  %807 = vmatpush2.msra.mxu0 0.0
  %808 = vmatprep.subr.mxu0 0.0
  %809 = vmatpush2.msra.mxu0 0.0
  %810 = vmatprep.subr.mxu0 0.0
  %811 = vmatpush2.msra.mxu0 0.0
  %812 = vmatprep.subr.mxu0 0.0
  %813 = vmatpush2.msra.mxu0 0.0
  %814 = vmatprep.subr.mxu0 0.0
  %815 = vmatpush2.msra.mxu0 0.0
  %816 = vmatprep.subr.mxu0 0.0
  %817 = vmatpush2.msra.mxu0 0.0
  %818 = vmatprep.mubr.f32.mxu0 0.0
  %819 = vmatmul.mubr.f32.gmra.mxu0 %v681
  %v820 = vpop.f32.mrf.mxu0
  %v821 = vadd.f32 0.0, %v820
  %v822 = vpop.f32.mrf.mxu0
  %823 = vdwg.mxu0
  %v824 = vadd.f32 %v677, %v821
  %825 = vmatprep.subr.mxu0 0.0
  %826 = vmatpush1.msra.mxu0 0.0
  %827 = vmatprep.subr.mxu0 0.0
  %828 = vmatpush1.msra.mxu0 0.0
  %829 = vmatprep.subr.mxu0 0.0
  %830 = vmatpush1.msra.mxu0 0.0
  %831 = vmatprep.subr.mxu0 0.0
  %832 = vmatpush1.msra.mxu0 0.0
  %833 = vmatprep.subr.mxu0 0.0
  %834 = vmatpush1.msra.mxu0 0.0
  %835 = vmatprep.subr.mxu0 0.0
  %836 = vmatpush1.msra.mxu0 0.0
  %837 = vmatprep.subr.mxu0 0.0
  %838 = vmatpush1.msra.mxu0 0.0
  %839 = vmatprep.subr.mxu0 0.0
  %840 = vmatpush1.msra.mxu0 0.0
  %841 = vmatprep.subr.mxu0 0.0
  %842 = vmatpush1.msra.mxu0 0.0
  %843 = vmatprep.subr.mxu0 0.0
  %844 = vmatpush1.msra.mxu0 0.0
  %845 = vmatprep.subr.mxu0 0.0
  %846 = vmatpush1.msra.mxu0 0.0
  %847 = vmatprep.subr.mxu0 0.0
  %848 = vmatpush1.msra.mxu0 0.0
  %849 = vmatprep.subr.mxu0 0.0
  %850 = vmatpush1.msra.mxu0 %v31
  %851 = vmatprep.subr.mxu0 0.0
  %852 = vmatpush1.msra.mxu0 %v30
  %853 = vmatprep.subr.mxu0 0.0
  %854 = vmatpush1.msra.mxu0 %v29
  %855 = vmatprep.subr.mxu0 0.0
  %856 = vmatpush1.msra.mxu0 %v28
  %857 = vmatprep.subr.mxu0 0.0
  %858 = vmatpush2.msra.mxu0 0.0
  %859 = vmatprep.subr.mxu0 0.0
  %860 = vmatpush2.msra.mxu0 0.0
  %861 = vmatprep.subr.mxu0 0.0
  %862 = vmatpush2.msra.mxu0 0.0
  %863 = vmatprep.subr.mxu0 0.0
  %864 = vmatpush2.msra.mxu0 0.0
  %865 = vmatprep.subr.mxu0 0.0
  %866 = vmatpush2.msra.mxu0 0.0
  %867 = vmatprep.subr.mxu0 0.0
  %868 = vmatpush2.msra.mxu0 0.0
  %869 = vmatprep.subr.mxu0 0.0
  %870 = vmatpush2.msra.mxu0 0.0
  %871 = vmatprep.subr.mxu0 0.0
  %872 = vmatpush2.msra.mxu0 0.0
  %873 = vmatprep.subr.mxu0 0.0
  %874 = vmatpush2.msra.mxu0 0.0
  %875 = vmatprep.subr.mxu0 0.0
  %876 = vmatpush2.msra.mxu0 0.0
  %877 = vmatprep.subr.mxu0 0.0
  %878 = vmatpush2.msra.mxu0 0.0
  %879 = vmatprep.subr.mxu0 0.0
  %880 = vmatpush2.msra.mxu0 0.0
  %881 = vmatprep.subr.mxu0 0.0
  %882 = vmatpush2.msra.mxu0 0.0
  %883 = vmatprep.subr.mxu0 0.0
  %884 = vmatpush2.msra.mxu0 0.0
  %885 = vmatprep.subr.mxu0 0.0
  %886 = vmatpush2.msra.mxu0 0.0
  %887 = vmatprep.subr.mxu0 0.0
  %888 = vmatpush2.msra.mxu0 0.0
  %889 = vmatprep.mubr.f32.mxu0 0.0
  %890 = vmatmul.mubr.f32.gmra.mxu0 %v681
  %v891 = vpop.f32.mrf.mxu0
  %v892 = vadd.f32 0.0, %v891
  %v893 = vpop.f32.mrf.mxu0
  %894 = vdwg.mxu0
  %v895 = vadd.f32 %v678, %v892
  %896 = vmatprep.subr.mxu0 0.0
  %897 = vmatpush1.msra.mxu0 0.0
  %898 = vmatprep.subr.mxu0 0.0
  %899 = vmatpush1.msra.mxu0 0.0
  %900 = vmatprep.subr.mxu0 0.0
  %901 = vmatpush1.msra.mxu0 0.0
  %902 = vmatprep.subr.mxu0 0.0
  %903 = vmatpush1.msra.mxu0 0.0
  %904 = vmatprep.subr.mxu0 0.0
  %905 = vmatpush1.msra.mxu0 0.0
  %906 = vmatprep.subr.mxu0 0.0
  %907 = vmatpush1.msra.mxu0 0.0
  %908 = vmatprep.subr.mxu0 0.0
  %909 = vmatpush1.msra.mxu0 0.0
  %910 = vmatprep.subr.mxu0 0.0
  %911 = vmatpush1.msra.mxu0 0.0
  %912 = vmatprep.subr.mxu0 0.0
  %913 = vmatpush1.msra.mxu0 0.0
  %914 = vmatprep.subr.mxu0 0.0
  %915 = vmatpush1.msra.mxu0 0.0
  %916 = vmatprep.subr.mxu0 0.0
  %917 = vmatpush1.msra.mxu0 0.0
  %918 = vmatprep.subr.mxu0 0.0
  %919 = vmatpush1.msra.mxu0 0.0
  %920 = vmatprep.subr.mxu0 0.0
  %921 = vmatpush1.msra.mxu0 %v36
  %922 = vmatprep.subr.mxu0 0.0
  %923 = vmatpush1.msra.mxu0 %v35
  %924 = vmatprep.subr.mxu0 0.0
  %925 = vmatpush1.msra.mxu0 %v34
  %926 = vmatprep.subr.mxu0 0.0
  %927 = vmatpush1.msra.mxu0 %v33
  %928 = vmatprep.subr.mxu0 0.0
  %929 = vmatpush2.msra.mxu0 0.0
  %930 = vmatprep.subr.mxu0 0.0
  %931 = vmatpush2.msra.mxu0 0.0
  %932 = vmatprep.subr.mxu0 0.0
  %933 = vmatpush2.msra.mxu0 0.0
  %934 = vmatprep.subr.mxu0 0.0
  %935 = vmatpush2.msra.mxu0 0.0
  %936 = vmatprep.subr.mxu0 0.0
  %937 = vmatpush2.msra.mxu0 0.0
  %938 = vmatprep.subr.mxu0 0.0
  %939 = vmatpush2.msra.mxu0 0.0
  %940 = vmatprep.subr.mxu0 0.0
  %941 = vmatpush2.msra.mxu0 0.0
  %942 = vmatprep.subr.mxu0 0.0
  %943 = vmatpush2.msra.mxu0 0.0
  %944 = vmatprep.subr.mxu0 0.0
  %945 = vmatpush2.msra.mxu0 0.0
  %946 = vmatprep.subr.mxu0 0.0
  %947 = vmatpush2.msra.mxu0 0.0
  %948 = vmatprep.subr.mxu0 0.0
  %949 = vmatpush2.msra.mxu0 0.0
  %950 = vmatprep.subr.mxu0 0.0
  %951 = vmatpush2.msra.mxu0 0.0
  %952 = vmatprep.subr.mxu0 0.0
  %953 = vmatpush2.msra.mxu0 0.0
  %954 = vmatprep.subr.mxu0 0.0
  %955 = vmatpush2.msra.mxu0 0.0
  %956 = vmatprep.subr.mxu0 0.0
  %957 = vmatpush2.msra.mxu0 0.0
  %958 = vmatprep.subr.mxu0 0.0
  %959 = vmatpush2.msra.mxu0 0.0
  %960 = vmatprep.mubr.f32.mxu0 0.0
  %961 = vmatmul.mubr.f32.gmra.mxu0 %v681
  %v962 = vpop.f32.mrf.mxu0
  %v963 = vadd.f32 0.0, %v962
  %v964 = vpop.f32.mrf.mxu0
  %965 = vdwg.mxu0
  %v966 = vadd.f32 %v679, %v963
  %v967 = vxor.u32 %v753, 2147483648
  %v968 = vmul.f32 %v967, 1.442695
  %v969 = vpow.pop %v968
  %v970 = vadd.f32 %v969, 1.0
  %v971 = vrcp.pop %v970
  %v972 = vmul.f32 1.0, %v971
  %v973 = vxor.u32 %v824, 2147483648
  %v974 = vmul.f32 %v973, 1.442695
  %v975 = vpow.pop %v974
  %v976 = vadd.f32 %v975, 1.0
  %v977 = vrcp.pop %v976
  %v978 = vmul.f32 1.0, %v977
  %v979 = vtanh.pop %v895
  %v980 = vxor.u32 %v966, 2147483648
  %v981 = vmul.f32 %v980, 1.442695
  %v982 = vpow.pop %v981
  %v983 = vadd.f32 %v982, 1.0
  %v984 = vrcp.pop %v983
  %v985 = vmul.f32 1.0, %v984
  %v986 = vmul.f32 %v978, %v670
  %v987 = vmul.f32 %v972, %v979
  %v988 = vadd.f32 %v986, %v987
  %v989 = vtanh.pop %v988
  %v990 = vmul.f32 %v985, %v989
  %s991 = scalar_lea.vmem %s2, 4
  %992 = vst.msk [vmem:[%s991] sm:$0x3] %vm355, %v990
  %s993 = scalar_lea.vmem %s0, 24
  %v994 = vld [vmem:[%s993] sm:$0x3]
  %v995 = vld [vmem:[%s993 + $0x2] sm:$0x3]
  %v996 = vld [vmem:[%s993 + $0x4] sm:$0x3]
  %v997 = vld [vmem:[%s993 + $0x6] sm:$0x3]
  %v999 = vsel %vm43, %v990, 0
  %1001 = vmatprep.subr.mxu0 0.0
  %1002 = vmatpush1.msra.mxu0 0.0
  %1003 = vmatprep.subr.mxu0 0.0
  %1004 = vmatpush1.msra.mxu0 0.0
  %1005 = vmatprep.subr.mxu0 0.0
  %1006 = vmatpush1.msra.mxu0 0.0
  %1007 = vmatprep.subr.mxu0 0.0
  %1008 = vmatpush1.msra.mxu0 0.0
  %1009 = vmatprep.subr.mxu0 0.0
  %1010 = vmatpush1.msra.mxu0 0.0
  %1011 = vmatprep.subr.mxu0 0.0
  %1012 = vmatpush1.msra.mxu0 0.0
  %1013 = vmatprep.subr.mxu0 0.0
  %1014 = vmatpush1.msra.mxu0 0.0
  %1015 = vmatprep.subr.mxu0 0.0
  %1016 = vmatpush1.msra.mxu0 0.0
  %1017 = vmatprep.subr.mxu0 0.0
  %1018 = vmatpush1.msra.mxu0 0.0
  %1019 = vmatprep.subr.mxu0 0.0
  %1020 = vmatpush1.msra.mxu0 0.0
  %1021 = vmatprep.subr.mxu0 0.0
  %1022 = vmatpush1.msra.mxu0 0.0
  %1023 = vmatprep.subr.mxu0 0.0
  %1024 = vmatpush1.msra.mxu0 0.0
  %1025 = vmatprep.subr.mxu0 0.0
  %1026 = vmatpush1.msra.mxu0 %v21
  %1027 = vmatprep.subr.mxu0 0.0
  %1028 = vmatpush1.msra.mxu0 %v20
  %1029 = vmatprep.subr.mxu0 0.0
  %1030 = vmatpush1.msra.mxu0 %v19
  %1031 = vmatprep.subr.mxu0 0.0
  %1032 = vmatpush1.msra.mxu0 %v18
  %1033 = vmatprep.subr.mxu0 0.0
  %1034 = vmatpush2.msra.mxu0 0.0
  %1035 = vmatprep.subr.mxu0 0.0
  %1036 = vmatpush2.msra.mxu0 0.0
  %1037 = vmatprep.subr.mxu0 0.0
  %1038 = vmatpush2.msra.mxu0 0.0
  %1039 = vmatprep.subr.mxu0 0.0
  %1040 = vmatpush2.msra.mxu0 0.0
  %1041 = vmatprep.subr.mxu0 0.0
  %1042 = vmatpush2.msra.mxu0 0.0
  %1043 = vmatprep.subr.mxu0 0.0
  %1044 = vmatpush2.msra.mxu0 0.0
  %1045 = vmatprep.subr.mxu0 0.0
  %1046 = vmatpush2.msra.mxu0 0.0
  %1047 = vmatprep.subr.mxu0 0.0
  %1048 = vmatpush2.msra.mxu0 0.0
  %1049 = vmatprep.subr.mxu0 0.0
  %1050 = vmatpush2.msra.mxu0 0.0
  %1051 = vmatprep.subr.mxu0 0.0
  %1052 = vmatpush2.msra.mxu0 0.0
  %1053 = vmatprep.subr.mxu0 0.0
  %1054 = vmatpush2.msra.mxu0 0.0
  %1055 = vmatprep.subr.mxu0 0.0
  %1056 = vmatpush2.msra.mxu0 0.0
  %1057 = vmatprep.subr.mxu0 0.0
  %1058 = vmatpush2.msra.mxu0 0.0
  %1059 = vmatprep.subr.mxu0 0.0
  %1060 = vmatpush2.msra.mxu0 0.0
  %1061 = vmatprep.subr.mxu0 0.0
  %1062 = vmatpush2.msra.mxu0 0.0
  %1063 = vmatprep.subr.mxu0 0.0
  %1064 = vmatpush2.msra.mxu0 0.0
  %1065 = vmatprep.mubr.f32.mxu0 0.0
  %1066 = vmatmul.mubr.f32.gmra.mxu0 %v999
  %v1067 = vpop.f32.mrf.mxu0
  %v1068 = vadd.f32 0.0, %v1067
  %v1069 = vpop.f32.mrf.mxu0
  %1070 = vdwg.mxu0
  %v1071 = vadd.f32 %v994, %v1068
  %1072 = vmatprep.subr.mxu0 0.0
  %1073 = vmatpush1.msra.mxu0 0.0
  %1074 = vmatprep.subr.mxu0 0.0
  %1075 = vmatpush1.msra.mxu0 0.0
  %1076 = vmatprep.subr.mxu0 0.0
  %1077 = vmatpush1.msra.mxu0 0.0
  %1078 = vmatprep.subr.mxu0 0.0
  %1079 = vmatpush1.msra.mxu0 0.0
  %1080 = vmatprep.subr.mxu0 0.0
  %1081 = vmatpush1.msra.mxu0 0.0
  %1082 = vmatprep.subr.mxu0 0.0
  %1083 = vmatpush1.msra.mxu0 0.0
  %1084 = vmatprep.subr.mxu0 0.0
  %1085 = vmatpush1.msra.mxu0 0.0
  %1086 = vmatprep.subr.mxu0 0.0
  %1087 = vmatpush1.msra.mxu0 0.0
  %1088 = vmatprep.subr.mxu0 0.0
  %1089 = vmatpush1.msra.mxu0 0.0
  %1090 = vmatprep.subr.mxu0 0.0
  %1091 = vmatpush1.msra.mxu0 0.0
  %1092 = vmatprep.subr.mxu0 0.0
  %1093 = vmatpush1.msra.mxu0 0.0
  %1094 = vmatprep.subr.mxu0 0.0
  %1095 = vmatpush1.msra.mxu0 0.0
  %1096 = vmatprep.subr.mxu0 0.0
  %1097 = vmatpush1.msra.mxu0 %v26
  %1098 = vmatprep.subr.mxu0 0.0
  %1099 = vmatpush1.msra.mxu0 %v25
  %1100 = vmatprep.subr.mxu0 0.0
  %1101 = vmatpush1.msra.mxu0 %v24
  %1102 = vmatprep.subr.mxu0 0.0
  %1103 = vmatpush1.msra.mxu0 %v23
  %1104 = vmatprep.subr.mxu0 0.0
  %1105 = vmatpush2.msra.mxu0 0.0
  %1106 = vmatprep.subr.mxu0 0.0
  %1107 = vmatpush2.msra.mxu0 0.0
  %1108 = vmatprep.subr.mxu0 0.0
  %1109 = vmatpush2.msra.mxu0 0.0
  %1110 = vmatprep.subr.mxu0 0.0
  %1111 = vmatpush2.msra.mxu0 0.0
  %1112 = vmatprep.subr.mxu0 0.0
  %1113 = vmatpush2.msra.mxu0 0.0
  %1114 = vmatprep.subr.mxu0 0.0
  %1115 = vmatpush2.msra.mxu0 0.0
  %1116 = vmatprep.subr.mxu0 0.0
  %1117 = vmatpush2.msra.mxu0 0.0
  %1118 = vmatprep.subr.mxu0 0.0
  %1119 = vmatpush2.msra.mxu0 0.0
  %1120 = vmatprep.subr.mxu0 0.0
  %1121 = vmatpush2.msra.mxu0 0.0
  %1122 = vmatprep.subr.mxu0 0.0
  %1123 = vmatpush2.msra.mxu0 0.0
  %1124 = vmatprep.subr.mxu0 0.0
  %1125 = vmatpush2.msra.mxu0 0.0
  %1126 = vmatprep.subr.mxu0 0.0
  %1127 = vmatpush2.msra.mxu0 0.0
  %1128 = vmatprep.subr.mxu0 0.0
  %1129 = vmatpush2.msra.mxu0 0.0
  %1130 = vmatprep.subr.mxu0 0.0
  %1131 = vmatpush2.msra.mxu0 0.0
  %1132 = vmatprep.subr.mxu0 0.0
  %1133 = vmatpush2.msra.mxu0 0.0
  %1134 = vmatprep.subr.mxu0 0.0
  %1135 = vmatpush2.msra.mxu0 0.0
  %1136 = vmatprep.mubr.f32.mxu0 0.0
  %1137 = vmatmul.mubr.f32.gmra.mxu0 %v999
  %v1138 = vpop.f32.mrf.mxu0
  %v1139 = vadd.f32 0.0, %v1138
  %v1140 = vpop.f32.mrf.mxu0
  %1141 = vdwg.mxu0
  %v1142 = vadd.f32 %v995, %v1139
  %1143 = vmatprep.subr.mxu0 0.0
  %1144 = vmatpush1.msra.mxu0 0.0
  %1145 = vmatprep.subr.mxu0 0.0
  %1146 = vmatpush1.msra.mxu0 0.0
  %1147 = vmatprep.subr.mxu0 0.0
  %1148 = vmatpush1.msra.mxu0 0.0
  %1149 = vmatprep.subr.mxu0 0.0
  %1150 = vmatpush1.msra.mxu0 0.0
  %1151 = vmatprep.subr.mxu0 0.0
  %1152 = vmatpush1.msra.mxu0 0.0
  %1153 = vmatprep.subr.mxu0 0.0
  %1154 = vmatpush1.msra.mxu0 0.0
  %1155 = vmatprep.subr.mxu0 0.0
  %1156 = vmatpush1.msra.mxu0 0.0
  %1157 = vmatprep.subr.mxu0 0.0
  %1158 = vmatpush1.msra.mxu0 0.0
  %1159 = vmatprep.subr.mxu0 0.0
  %1160 = vmatpush1.msra.mxu0 0.0
  %1161 = vmatprep.subr.mxu0 0.0
  %1162 = vmatpush1.msra.mxu0 0.0
  %1163 = vmatprep.subr.mxu0 0.0
  %1164 = vmatpush1.msra.mxu0 0.0
  %1165 = vmatprep.subr.mxu0 0.0
  %1166 = vmatpush1.msra.mxu0 0.0
  %1167 = vmatprep.subr.mxu0 0.0
  %1168 = vmatpush1.msra.mxu0 %v31
  %1169 = vmatprep.subr.mxu0 0.0
  %1170 = vmatpush1.msra.mxu0 %v30
  %1171 = vmatprep.subr.mxu0 0.0
  %1172 = vmatpush1.msra.mxu0 %v29
  %1173 = vmatprep.subr.mxu0 0.0
  %1174 = vmatpush1.msra.mxu0 %v28
  %1175 = vmatprep.subr.mxu0 0.0
  %1176 = vmatpush2.msra.mxu0 0.0
  %1177 = vmatprep.subr.mxu0 0.0
  %1178 = vmatpush2.msra.mxu0 0.0
  %1179 = vmatprep.subr.mxu0 0.0
  %1180 = vmatpush2.msra.mxu0 0.0
  %1181 = vmatprep.subr.mxu0 0.0
  %1182 = vmatpush2.msra.mxu0 0.0
  %1183 = vmatprep.subr.mxu0 0.0
  %1184 = vmatpush2.msra.mxu0 0.0
  %1185 = vmatprep.subr.mxu0 0.0
  %1186 = vmatpush2.msra.mxu0 0.0
  %1187 = vmatprep.subr.mxu0 0.0
  %1188 = vmatpush2.msra.mxu0 0.0
  %1189 = vmatprep.subr.mxu0 0.0
  %1190 = vmatpush2.msra.mxu0 0.0
  %1191 = vmatprep.subr.mxu0 0.0
  %1192 = vmatpush2.msra.mxu0 0.0
  %1193 = vmatprep.subr.mxu0 0.0
  %1194 = vmatpush2.msra.mxu0 0.0
  %1195 = vmatprep.subr.mxu0 0.0
  %1196 = vmatpush2.msra.mxu0 0.0
  %1197 = vmatprep.subr.mxu0 0.0
  %1198 = vmatpush2.msra.mxu0 0.0
  %1199 = vmatprep.subr.mxu0 0.0
  %1200 = vmatpush2.msra.mxu0 0.0
  %1201 = vmatprep.subr.mxu0 0.0
  %1202 = vmatpush2.msra.mxu0 0.0
  %1203 = vmatprep.subr.mxu0 0.0
  %1204 = vmatpush2.msra.mxu0 0.0
  %1205 = vmatprep.subr.mxu0 0.0
  %1206 = vmatpush2.msra.mxu0 0.0
  %1207 = vmatprep.mubr.f32.mxu0 0.0
  %1208 = vmatmul.mubr.f32.gmra.mxu0 %v999
  %v1209 = vpop.f32.mrf.mxu0
  %v1210 = vadd.f32 0.0, %v1209
  %v1211 = vpop.f32.mrf.mxu0
  %1212 = vdwg.mxu0
  %v1213 = vadd.f32 %v996, %v1210
  %1214 = vmatprep.subr.mxu0 0.0
  %1215 = vmatpush1.msra.mxu0 0.0
  %1216 = vmatprep.subr.mxu0 0.0
  %1217 = vmatpush1.msra.mxu0 0.0
  %1218 = vmatprep.subr.mxu0 0.0
  %1219 = vmatpush1.msra.mxu0 0.0
  %1220 = vmatprep.subr.mxu0 0.0
  %1221 = vmatpush1.msra.mxu0 0.0
  %1222 = vmatprep.subr.mxu0 0.0
  %1223 = vmatpush1.msra.mxu0 0.0
  %1224 = vmatprep.subr.mxu0 0.0
  %1225 = vmatpush1.msra.mxu0 0.0
  %1226 = vmatprep.subr.mxu0 0.0
  %1227 = vmatpush1.msra.mxu0 0.0
  %1228 = vmatprep.subr.mxu0 0.0
  %1229 = vmatpush1.msra.mxu0 0.0
  %1230 = vmatprep.subr.mxu0 0.0
  %1231 = vmatpush1.msra.mxu0 0.0
  %1232 = vmatprep.subr.mxu0 0.0
  %1233 = vmatpush1.msra.mxu0 0.0
  %1234 = vmatprep.subr.mxu0 0.0
  %1235 = vmatpush1.msra.mxu0 0.0
  %1236 = vmatprep.subr.mxu0 0.0
  %1237 = vmatpush1.msra.mxu0 0.0
  %1238 = vmatprep.subr.mxu0 0.0
  %1239 = vmatpush1.msra.mxu0 %v36
  %1240 = vmatprep.subr.mxu0 0.0
  %1241 = vmatpush1.msra.mxu0 %v35
  %1242 = vmatprep.subr.mxu0 0.0
  %1243 = vmatpush1.msra.mxu0 %v34
  %1244 = vmatprep.subr.mxu0 0.0
  %1245 = vmatpush1.msra.mxu0 %v33
  %1246 = vmatprep.subr.mxu0 0.0
  %1247 = vmatpush2.msra.mxu0 0.0
  %1248 = vmatprep.subr.mxu0 0.0
  %1249 = vmatpush2.msra.mxu0 0.0
  %1250 = vmatprep.subr.mxu0 0.0
  %1251 = vmatpush2.msra.mxu0 0.0
  %1252 = vmatprep.subr.mxu0 0.0
  %1253 = vmatpush2.msra.mxu0 0.0
  %1254 = vmatprep.subr.mxu0 0.0
  %1255 = vmatpush2.msra.mxu0 0.0
  %1256 = vmatprep.subr.mxu0 0.0
  %1257 = vmatpush2.msra.mxu0 0.0
  %1258 = vmatprep.subr.mxu0 0.0
  %1259 = vmatpush2.msra.mxu0 0.0
  %1260 = vmatprep.subr.mxu0 0.0
  %1261 = vmatpush2.msra.mxu0 0.0
  %1262 = vmatprep.subr.mxu0 0.0
  %1263 = vmatpush2.msra.mxu0 0.0
  %1264 = vmatprep.subr.mxu0 0.0
  %1265 = vmatpush2.msra.mxu0 0.0
  %1266 = vmatprep.subr.mxu0 0.0
  %1267 = vmatpush2.msra.mxu0 0.0
  %1268 = vmatprep.subr.mxu0 0.0
  %1269 = vmatpush2.msra.mxu0 0.0
  %1270 = vmatprep.subr.mxu0 0.0
  %1271 = vmatpush2.msra.mxu0 0.0
  %1272 = vmatprep.subr.mxu0 0.0
  %1273 = vmatpush2.msra.mxu0 0.0
  %1274 = vmatprep.subr.mxu0 0.0
  %1275 = vmatpush2.msra.mxu0 0.0
  %1276 = vmatprep.subr.mxu0 0.0
  %1277 = vmatpush2.msra.mxu0 0.0
  %1278 = vmatprep.mubr.f32.mxu0 0.0
  %1279 = vmatmul.mubr.f32.gmra.mxu0 %v999
  %v1280 = vpop.f32.mrf.mxu0
  %v1281 = vadd.f32 0.0, %v1280
  %v1282 = vpop.f32.mrf.mxu0
  %1283 = vdwg.mxu0
  %v1284 = vadd.f32 %v997, %v1281
  %v1285 = vxor.u32 %v1071, 2147483648
  %v1286 = vmul.f32 %v1285, 1.442695
  %v1287 = vpow.pop %v1286
  %v1288 = vadd.f32 %v1287, 1.0
  %v1289 = vrcp.pop %v1288
  %v1290 = vmul.f32 1.0, %v1289
  %v1291 = vxor.u32 %v1142, 2147483648
  %v1292 = vmul.f32 %v1291, 1.442695
  %v1293 = vpow.pop %v1292
  %v1294 = vadd.f32 %v1293, 1.0
  %v1295 = vrcp.pop %v1294
  %v1296 = vmul.f32 1.0, %v1295
  %v1297 = vtanh.pop %v1213
  %v1298 = vxor.u32 %v1284, 2147483648
  %v1299 = vmul.f32 %v1298, 1.442695
  %v1300 = vpow.pop %v1299
  %v1301 = vadd.f32 %v1300, 1.0
  %v1302 = vrcp.pop %v1301
  %v1303 = vmul.f32 1.0, %v1302
  %v1304 = vmul.f32 %v1296, %v988
  %v1305 = vmul.f32 %v1290, %v1297
  %v1306 = vadd.f32 %v1304, %v1305
  %v1307 = vtanh.pop %v1306
  %v1308 = vmul.f32 %v1303, %v1307
  %s1309 = scalar_lea.vmem %s2, 6
  %1310 = vst.msk [vmem:[%s1309] sm:$0x3] %vm355, %v1308
  %s1311 = scalar_lea.vmem %s0, 32
  %v1312 = vld [vmem:[%s1311] sm:$0x3]
  %v1313 = vld [vmem:[%s1311 + $0x2] sm:$0x3]
  %v1314 = vld [vmem:[%s1311 + $0x4] sm:$0x3]
  %v1315 = vld [vmem:[%s1311 + $0x6] sm:$0x3]
  %v1317 = vsel %vm43, %v1308, 0
  %1319 = vmatprep.subr.mxu0 0.0
  %1320 = vmatpush1.msra.mxu0 0.0
  %1321 = vmatprep.subr.mxu0 0.0
  %1322 = vmatpush1.msra.mxu0 0.0
  %1323 = vmatprep.subr.mxu0 0.0
  %1324 = vmatpush1.msra.mxu0 0.0
  %1325 = vmatprep.subr.mxu0 0.0
  %1326 = vmatpush1.msra.mxu0 0.0
  %1327 = vmatprep.subr.mxu0 0.0
  %1328 = vmatpush1.msra.mxu0 0.0
  %1329 = vmatprep.subr.mxu0 0.0
  %1330 = vmatpush1.msra.mxu0 0.0
  %1331 = vmatprep.subr.mxu0 0.0
  %1332 = vmatpush1.msra.mxu0 0.0
  %1333 = vmatprep.subr.mxu0 0.0
  %1334 = vmatpush1.msra.mxu0 0.0
  %1335 = vmatprep.subr.mxu0 0.0
  %1336 = vmatpush1.msra.mxu0 0.0
  %1337 = vmatprep.subr.mxu0 0.0
  %1338 = vmatpush1.msra.mxu0 0.0
  %1339 = vmatprep.subr.mxu0 0.0
  %1340 = vmatpush1.msra.mxu0 0.0
  %1341 = vmatprep.subr.mxu0 0.0
  %1342 = vmatpush1.msra.mxu0 0.0
  %1343 = vmatprep.subr.mxu0 0.0
  %1344 = vmatpush1.msra.mxu0 %v21
  %1345 = vmatprep.subr.mxu0 0.0
  %1346 = vmatpush1.msra.mxu0 %v20
  %1347 = vmatprep.subr.mxu0 0.0
  %1348 = vmatpush1.msra.mxu0 %v19
  %1349 = vmatprep.subr.mxu0 0.0
  %1350 = vmatpush1.msra.mxu0 %v18
  %1351 = vmatprep.subr.mxu0 0.0
  %1352 = vmatpush2.msra.mxu0 0.0
  %1353 = vmatprep.subr.mxu0 0.0
  %1354 = vmatpush2.msra.mxu0 0.0
  %1355 = vmatprep.subr.mxu0 0.0
  %1356 = vmatpush2.msra.mxu0 0.0
  %1357 = vmatprep.subr.mxu0 0.0
  %1358 = vmatpush2.msra.mxu0 0.0
  %1359 = vmatprep.subr.mxu0 0.0
  %1360 = vmatpush2.msra.mxu0 0.0
  %1361 = vmatprep.subr.mxu0 0.0
  %1362 = vmatpush2.msra.mxu0 0.0
  %1363 = vmatprep.subr.mxu0 0.0
  %1364 = vmatpush2.msra.mxu0 0.0
  %1365 = vmatprep.subr.mxu0 0.0
  %1366 = vmatpush2.msra.mxu0 0.0
  %1367 = vmatprep.subr.mxu0 0.0
  %1368 = vmatpush2.msra.mxu0 0.0
  %1369 = vmatprep.subr.mxu0 0.0
  %1370 = vmatpush2.msra.mxu0 0.0
  %1371 = vmatprep.subr.mxu0 0.0
  %1372 = vmatpush2.msra.mxu0 0.0
  %1373 = vmatprep.subr.mxu0 0.0
  %1374 = vmatpush2.msra.mxu0 0.0
  %1375 = vmatprep.subr.mxu0 0.0
  %1376 = vmatpush2.msra.mxu0 0.0
  %1377 = vmatprep.subr.mxu0 0.0
  %1378 = vmatpush2.msra.mxu0 0.0
  %1379 = vmatprep.subr.mxu0 0.0
  %1380 = vmatpush2.msra.mxu0 0.0
  %1381 = vmatprep.subr.mxu0 0.0
  %1382 = vmatpush2.msra.mxu0 0.0
  %1383 = vmatprep.mubr.f32.mxu0 0.0
  %1384 = vmatmul.mubr.f32.gmra.mxu0 %v1317
  %v1385 = vpop.f32.mrf.mxu0
  %v1386 = vadd.f32 0.0, %v1385
  %v1387 = vpop.f32.mrf.mxu0
  %1388 = vdwg.mxu0
  %v1389 = vadd.f32 %v1312, %v1386
  %1390 = vmatprep.subr.mxu0 0.0
  %1391 = vmatpush1.msra.mxu0 0.0
  %1392 = vmatprep.subr.mxu0 0.0
  %1393 = vmatpush1.msra.mxu0 0.0
  %1394 = vmatprep.subr.mxu0 0.0
  %1395 = vmatpush1.msra.mxu0 0.0
  %1396 = vmatprep.subr.mxu0 0.0
  %1397 = vmatpush1.msra.mxu0 0.0
  %1398 = vmatprep.subr.mxu0 0.0
  %1399 = vmatpush1.msra.mxu0 0.0
  %1400 = vmatprep.subr.mxu0 0.0
  %1401 = vmatpush1.msra.mxu0 0.0
  %1402 = vmatprep.subr.mxu0 0.0
  %1403 = vmatpush1.msra.mxu0 0.0
  %1404 = vmatprep.subr.mxu0 0.0
  %1405 = vmatpush1.msra.mxu0 0.0
  %1406 = vmatprep.subr.mxu0 0.0
  %1407 = vmatpush1.msra.mxu0 0.0
  %1408 = vmatprep.subr.mxu0 0.0
  %1409 = vmatpush1.msra.mxu0 0.0
  %1410 = vmatprep.subr.mxu0 0.0
  %1411 = vmatpush1.msra.mxu0 0.0
  %1412 = vmatprep.subr.mxu0 0.0
  %1413 = vmatpush1.msra.mxu0 0.0
  %1414 = vmatprep.subr.mxu0 0.0
  %1415 = vmatpush1.msra.mxu0 %v26
  %1416 = vmatprep.subr.mxu0 0.0
  %1417 = vmatpush1.msra.mxu0 %v25
  %1418 = vmatprep.subr.mxu0 0.0
  %1419 = vmatpush1.msra.mxu0 %v24
  %1420 = vmatprep.subr.mxu0 0.0
  %1421 = vmatpush1.msra.mxu0 %v23
  %1422 = vmatprep.subr.mxu0 0.0
  %1423 = vmatpush2.msra.mxu0 0.0
  %1424 = vmatprep.subr.mxu0 0.0
  %1425 = vmatpush2.msra.mxu0 0.0
  %1426 = vmatprep.subr.mxu0 0.0
  %1427 = vmatpush2.msra.mxu0 0.0
  %1428 = vmatprep.subr.mxu0 0.0
  %1429 = vmatpush2.msra.mxu0 0.0
  %1430 = vmatprep.subr.mxu0 0.0
  %1431 = vmatpush2.msra.mxu0 0.0
  %1432 = vmatprep.subr.mxu0 0.0
  %1433 = vmatpush2.msra.mxu0 0.0
  %1434 = vmatprep.subr.mxu0 0.0
  %1435 = vmatpush2.msra.mxu0 0.0
  %1436 = vmatprep.subr.mxu0 0.0
  %1437 = vmatpush2.msra.mxu0 0.0
  %1438 = vmatprep.subr.mxu0 0.0
  %1439 = vmatpush2.msra.mxu0 0.0
  %1440 = vmatprep.subr.mxu0 0.0
  %1441 = vmatpush2.msra.mxu0 0.0
  %1442 = vmatprep.subr.mxu0 0.0
  %1443 = vmatpush2.msra.mxu0 0.0
  %1444 = vmatprep.subr.mxu0 0.0
  %1445 = vmatpush2.msra.mxu0 0.0
  %1446 = vmatprep.subr.mxu0 0.0
  %1447 = vmatpush2.msra.mxu0 0.0
  %1448 = vmatprep.subr.mxu0 0.0
  %1449 = vmatpush2.msra.mxu0 0.0
  %1450 = vmatprep.subr.mxu0 0.0
  %1451 = vmatpush2.msra.mxu0 0.0
  %1452 = vmatprep.subr.mxu0 0.0
  %1453 = vmatpush2.msra.mxu0 0.0
  %1454 = vmatprep.mubr.f32.mxu0 0.0
  %1455 = vmatmul.mubr.f32.gmra.mxu0 %v1317
  %v1456 = vpop.f32.mrf.mxu0
  %v1457 = vadd.f32 0.0, %v1456
  %v1458 = vpop.f32.mrf.mxu0
  %1459 = vdwg.mxu0
  %v1460 = vadd.f32 %v1313, %v1457
  %1461 = vmatprep.subr.mxu0 0.0
  %1462 = vmatpush1.msra.mxu0 0.0
  %1463 = vmatprep.subr.mxu0 0.0
  %1464 = vmatpush1.msra.mxu0 0.0
  %1465 = vmatprep.subr.mxu0 0.0
  %1466 = vmatpush1.msra.mxu0 0.0
  %1467 = vmatprep.subr.mxu0 0.0
  %1468 = vmatpush1.msra.mxu0 0.0
  %1469 = vmatprep.subr.mxu0 0.0
  %1470 = vmatpush1.msra.mxu0 0.0
  %1471 = vmatprep.subr.mxu0 0.0
  %1472 = vmatpush1.msra.mxu0 0.0
  %1473 = vmatprep.subr.mxu0 0.0
  %1474 = vmatpush1.msra.mxu0 0.0
  %1475 = vmatprep.subr.mxu0 0.0
  %1476 = vmatpush1.msra.mxu0 0.0
  %1477 = vmatprep.subr.mxu0 0.0
  %1478 = vmatpush1.msra.mxu0 0.0
  %1479 = vmatprep.subr.mxu0 0.0
  %1480 = vmatpush1.msra.mxu0 0.0
  %1481 = vmatprep.subr.mxu0 0.0
  %1482 = vmatpush1.msra.mxu0 0.0
  %1483 = vmatprep.subr.mxu0 0.0
  %1484 = vmatpush1.msra.mxu0 0.0
  %1485 = vmatprep.subr.mxu0 0.0
  %1486 = vmatpush1.msra.mxu0 %v31
  %1487 = vmatprep.subr.mxu0 0.0
  %1488 = vmatpush1.msra.mxu0 %v30
  %1489 = vmatprep.subr.mxu0 0.0
  %1490 = vmatpush1.msra.mxu0 %v29
  %1491 = vmatprep.subr.mxu0 0.0
  %1492 = vmatpush1.msra.mxu0 %v28
  %1493 = vmatprep.subr.mxu0 0.0
  %1494 = vmatpush2.msra.mxu0 0.0
  %1495 = vmatprep.subr.mxu0 0.0
  %1496 = vmatpush2.msra.mxu0 0.0
  %1497 = vmatprep.subr.mxu0 0.0
  %1498 = vmatpush2.msra.mxu0 0.0
  %1499 = vmatprep.subr.mxu0 0.0
  %1500 = vmatpush2.msra.mxu0 0.0
  %1501 = vmatprep.subr.mxu0 0.0
  %1502 = vmatpush2.msra.mxu0 0.0
  %1503 = vmatprep.subr.mxu0 0.0
  %1504 = vmatpush2.msra.mxu0 0.0
  %1505 = vmatprep.subr.mxu0 0.0
  %1506 = vmatpush2.msra.mxu0 0.0
  %1507 = vmatprep.subr.mxu0 0.0
  %1508 = vmatpush2.msra.mxu0 0.0
  %1509 = vmatprep.subr.mxu0 0.0
  %1510 = vmatpush2.msra.mxu0 0.0
  %1511 = vmatprep.subr.mxu0 0.0
  %1512 = vmatpush2.msra.mxu0 0.0
  %1513 = vmatprep.subr.mxu0 0.0
  %1514 = vmatpush2.msra.mxu0 0.0
  %1515 = vmatprep.subr.mxu0 0.0
  %1516 = vmatpush2.msra.mxu0 0.0
  %1517 = vmatprep.subr.mxu0 0.0
  %1518 = vmatpush2.msra.mxu0 0.0
  %1519 = vmatprep.subr.mxu0 0.0
  %1520 = vmatpush2.msra.mxu0 0.0
  %1521 = vmatprep.subr.mxu0 0.0
  %1522 = vmatpush2.msra.mxu0 0.0
  %1523 = vmatprep.subr.mxu0 0.0
  %1524 = vmatpush2.msra.mxu0 0.0
  %1525 = vmatprep.mubr.f32.mxu0 0.0
  %1526 = vmatmul.mubr.f32.gmra.mxu0 %v1317
  %v1527 = vpop.f32.mrf.mxu0
  %v1528 = vadd.f32 0.0, %v1527
  %v1529 = vpop.f32.mrf.mxu0
  %1530 = vdwg.mxu0
  %v1531 = vadd.f32 %v1314, %v1528
  %1532 = vmatprep.subr.mxu0 0.0
  %1533 = vmatpush1.msra.mxu0 0.0
  %1534 = vmatprep.subr.mxu0 0.0
  %1535 = vmatpush1.msra.mxu0 0.0
  %1536 = vmatprep.subr.mxu0 0.0
  %1537 = vmatpush1.msra.mxu0 0.0
  %1538 = vmatprep.subr.mxu0 0.0
  %1539 = vmatpush1.msra.mxu0 0.0
  %1540 = vmatprep.subr.mxu0 0.0
  %1541 = vmatpush1.msra.mxu0 0.0
  %1542 = vmatprep.subr.mxu0 0.0
  %1543 = vmatpush1.msra.mxu0 0.0
  %1544 = vmatprep.subr.mxu0 0.0
  %1545 = vmatpush1.msra.mxu0 0.0
  %1546 = vmatprep.subr.mxu0 0.0
  %1547 = vmatpush1.msra.mxu0 0.0
  %1548 = vmatprep.subr.mxu0 0.0
  %1549 = vmatpush1.msra.mxu0 0.0
  %1550 = vmatprep.subr.mxu0 0.0
  %1551 = vmatpush1.msra.mxu0 0.0
  %1552 = vmatprep.subr.mxu0 0.0
  %1553 = vmatpush1.msra.mxu0 0.0
  %1554 = vmatprep.subr.mxu0 0.0
  %1555 = vmatpush1.msra.mxu0 0.0
  %1556 = vmatprep.subr.mxu0 0.0
  %1557 = vmatpush1.msra.mxu0 %v36
  %1558 = vmatprep.subr.mxu0 0.0
  %1559 = vmatpush1.msra.mxu0 %v35
  %1560 = vmatprep.subr.mxu0 0.0
  %1561 = vmatpush1.msra.mxu0 %v34
  %1562 = vmatprep.subr.mxu0 0.0
  %1563 = vmatpush1.msra.mxu0 %v33
  %1564 = vmatprep.subr.mxu0 0.0
  %1565 = vmatpush2.msra.mxu0 0.0
  %1566 = vmatprep.subr.mxu0 0.0
  %1567 = vmatpush2.msra.mxu0 0.0
  %1568 = vmatprep.subr.mxu0 0.0
  %1569 = vmatpush2.msra.mxu0 0.0
  %1570 = vmatprep.subr.mxu0 0.0
  %1571 = vmatpush2.msra.mxu0 0.0
  %1572 = vmatprep.subr.mxu0 0.0
  %1573 = vmatpush2.msra.mxu0 0.0
  %1574 = vmatprep.subr.mxu0 0.0
  %1575 = vmatpush2.msra.mxu0 0.0
  %1576 = vmatprep.subr.mxu0 0.0
  %1577 = vmatpush2.msra.mxu0 0.0
  %1578 = vmatprep.subr.mxu0 0.0
  %1579 = vmatpush2.msra.mxu0 0.0
  %1580 = vmatprep.subr.mxu0 0.0
  %1581 = vmatpush2.msra.mxu0 0.0
  %1582 = vmatprep.subr.mxu0 0.0
  %1583 = vmatpush2.msra.mxu0 0.0
  %1584 = vmatprep.subr.mxu0 0.0
  %1585 = vmatpush2.msra.mxu0 0.0
  %1586 = vmatprep.subr.mxu0 0.0
  %1587 = vmatpush2.msra.mxu0 0.0
  %1588 = vmatprep.subr.mxu0 0.0
  %1589 = vmatpush2.msra.mxu0 0.0
  %1590 = vmatprep.subr.mxu0 0.0
  %1591 = vmatpush2.msra.mxu0 0.0
  %1592 = vmatprep.subr.mxu0 0.0
  %1593 = vmatpush2.msra.mxu0 0.0
  %1594 = vmatprep.subr.mxu0 0.0
  %1595 = vmatpush2.msra.mxu0 0.0
  %1596 = vmatprep.mubr.f32.mxu0 0.0
  %1597 = vmatmul.mubr.f32.gmra.mxu0 %v1317
  %v1598 = vpop.f32.mrf.mxu0
  %v1599 = vadd.f32 0.0, %v1598
  %v1600 = vpop.f32.mrf.mxu0
  %1601 = vdwg.mxu0
  %v1602 = vadd.f32 %v1315, %v1599
  %v1603 = vxor.u32 %v1389, 2147483648
  %v1604 = vmul.f32 %v1603, 1.442695
  %v1605 = vpow.pop %v1604
  %v1606 = vadd.f32 %v1605, 1.0
  %v1607 = vrcp.pop %v1606
  %v1608 = vmul.f32 1.0, %v1607
  %v1609 = vxor.u32 %v1460, 2147483648
  %v1610 = vmul.f32 %v1609, 1.442695
  %v1611 = vpow.pop %v1610
  %v1612 = vadd.f32 %v1611, 1.0
  %v1613 = vrcp.pop %v1612
  %v1614 = vmul.f32 1.0, %v1613
  %v1615 = vtanh.pop %v1531
  %v1616 = vxor.u32 %v1602, 2147483648
  %v1617 = vmul.f32 %v1616, 1.442695
  %v1618 = vpow.pop %v1617
  %v1619 = vadd.f32 %v1618, 1.0
  %v1620 = vrcp.pop %v1619
  %v1621 = vmul.f32 1.0, %v1620
  %v1622 = vmul.f32 %v1614, %v1306
  %v1623 = vmul.f32 %v1608, %v1615
  %v1624 = vadd.f32 %v1622, %v1623
  %v1625 = vtanh.pop %v1624
  %v1626 = vmul.f32 %v1621, %v1625
  %s1627 = scalar_lea.vmem %s2, 8
  %1628 = vst.msk [vmem:[%s1627] sm:$0x3] %vm355, %v1626
  %s1629 = scalar_lea.vmem %s0, 40
  %v1630 = vld [vmem:[%s1629] sm:$0x3]
  %v1631 = vld [vmem:[%s1629 + $0x2] sm:$0x3]
  %v1632 = vld [vmem:[%s1629 + $0x4] sm:$0x3]
  %v1633 = vld [vmem:[%s1629 + $0x6] sm:$0x3]
  %v1635 = vsel %vm43, %v1626, 0
  %1637 = vmatprep.subr.mxu0 0.0
  %1638 = vmatpush1.msra.mxu0 0.0
  %1639 = vmatprep.subr.mxu0 0.0
  %1640 = vmatpush1.msra.mxu0 0.0
  %1641 = vmatprep.subr.mxu0 0.0
  %1642 = vmatpush1.msra.mxu0 0.0
  %1643 = vmatprep.subr.mxu0 0.0
  %1644 = vmatpush1.msra.mxu0 0.0
  %1645 = vmatprep.subr.mxu0 0.0
  %1646 = vmatpush1.msra.mxu0 0.0
  %1647 = vmatprep.subr.mxu0 0.0
  %1648 = vmatpush1.msra.mxu0 0.0
  %1649 = vmatprep.subr.mxu0 0.0
  %1650 = vmatpush1.msra.mxu0 0.0
  %1651 = vmatprep.subr.mxu0 0.0
  %1652 = vmatpush1.msra.mxu0 0.0
  %1653 = vmatprep.subr.mxu0 0.0
  %1654 = vmatpush1.msra.mxu0 0.0
  %1655 = vmatprep.subr.mxu0 0.0
  %1656 = vmatpush1.msra.mxu0 0.0
  %1657 = vmatprep.subr.mxu0 0.0
  %1658 = vmatpush1.msra.mxu0 0.0
  %1659 = vmatprep.subr.mxu0 0.0
  %1660 = vmatpush1.msra.mxu0 0.0
  %1661 = vmatprep.subr.mxu0 0.0
  %1662 = vmatpush1.msra.mxu0 %v21
  %1663 = vmatprep.subr.mxu0 0.0
  %1664 = vmatpush1.msra.mxu0 %v20
  %1665 = vmatprep.subr.mxu0 0.0
  %1666 = vmatpush1.msra.mxu0 %v19
  %1667 = vmatprep.subr.mxu0 0.0
  %1668 = vmatpush1.msra.mxu0 %v18
  %1669 = vmatprep.subr.mxu0 0.0
  %1670 = vmatpush2.msra.mxu0 0.0
  %1671 = vmatprep.subr.mxu0 0.0
  %1672 = vmatpush2.msra.mxu0 0.0
  %1673 = vmatprep.subr.mxu0 0.0
  %1674 = vmatpush2.msra.mxu0 0.0
  %1675 = vmatprep.subr.mxu0 0.0
  %1676 = vmatpush2.msra.mxu0 0.0
  %1677 = vmatprep.subr.mxu0 0.0
  %1678 = vmatpush2.msra.mxu0 0.0
  %1679 = vmatprep.subr.mxu0 0.0
  %1680 = vmatpush2.msra.mxu0 0.0
  %1681 = vmatprep.subr.mxu0 0.0
  %1682 = vmatpush2.msra.mxu0 0.0
  %1683 = vmatprep.subr.mxu0 0.0
  %1684 = vmatpush2.msra.mxu0 0.0
  %1685 = vmatprep.subr.mxu0 0.0
  %1686 = vmatpush2.msra.mxu0 0.0
  %1687 = vmatprep.subr.mxu0 0.0
  %1688 = vmatpush2.msra.mxu0 0.0
  %1689 = vmatprep.subr.mxu0 0.0
  %1690 = vmatpush2.msra.mxu0 0.0
  %1691 = vmatprep.subr.mxu0 0.0
  %1692 = vmatpush2.msra.mxu0 0.0
  %1693 = vmatprep.subr.mxu0 0.0
  %1694 = vmatpush2.msra.mxu0 0.0
  %1695 = vmatprep.subr.mxu0 0.0
  %1696 = vmatpush2.msra.mxu0 0.0
  %1697 = vmatprep.subr.mxu0 0.0
  %1698 = vmatpush2.msra.mxu0 0.0
  %1699 = vmatprep.subr.mxu0 0.0
  %1700 = vmatpush2.msra.mxu0 0.0
  %1701 = vmatprep.mubr.f32.mxu0 0.0
  %1702 = vmatmul.mubr.f32.gmra.mxu0 %v1635
  %v1703 = vpop.f32.mrf.mxu0
  %v1704 = vadd.f32 0.0, %v1703
  %v1705 = vpop.f32.mrf.mxu0
  %1706 = vdwg.mxu0
  %v1707 = vadd.f32 %v1630, %v1704
  %1708 = vmatprep.subr.mxu0 0.0
  %1709 = vmatpush1.msra.mxu0 0.0
  %1710 = vmatprep.subr.mxu0 0.0
  %1711 = vmatpush1.msra.mxu0 0.0
  %1712 = vmatprep.subr.mxu0 0.0
  %1713 = vmatpush1.msra.mxu0 0.0
  %1714 = vmatprep.subr.mxu0 0.0
  %1715 = vmatpush1.msra.mxu0 0.0
  %1716 = vmatprep.subr.mxu0 0.0
  %1717 = vmatpush1.msra.mxu0 0.0
  %1718 = vmatprep.subr.mxu0 0.0
  %1719 = vmatpush1.msra.mxu0 0.0
  %1720 = vmatprep.subr.mxu0 0.0
  %1721 = vmatpush1.msra.mxu0 0.0
  %1722 = vmatprep.subr.mxu0 0.0
  %1723 = vmatpush1.msra.mxu0 0.0
  %1724 = vmatprep.subr.mxu0 0.0
  %1725 = vmatpush1.msra.mxu0 0.0
  %1726 = vmatprep.subr.mxu0 0.0
  %1727 = vmatpush1.msra.mxu0 0.0
  %1728 = vmatprep.subr.mxu0 0.0
  %1729 = vmatpush1.msra.mxu0 0.0
  %1730 = vmatprep.subr.mxu0 0.0
  %1731 = vmatpush1.msra.mxu0 0.0
  %1732 = vmatprep.subr.mxu0 0.0
  %1733 = vmatpush1.msra.mxu0 %v26
  %1734 = vmatprep.subr.mxu0 0.0
  %1735 = vmatpush1.msra.mxu0 %v25
  %1736 = vmatprep.subr.mxu0 0.0
  %1737 = vmatpush1.msra.mxu0 %v24
  %1738 = vmatprep.subr.mxu0 0.0
  %1739 = vmatpush1.msra.mxu0 %v23
  %1740 = vmatprep.subr.mxu0 0.0
  %1741 = vmatpush2.msra.mxu0 0.0
  %1742 = vmatprep.subr.mxu0 0.0
  %1743 = vmatpush2.msra.mxu0 0.0
  %1744 = vmatprep.subr.mxu0 0.0
  %1745 = vmatpush2.msra.mxu0 0.0
  %1746 = vmatprep.subr.mxu0 0.0
  %1747 = vmatpush2.msra.mxu0 0.0
  %1748 = vmatprep.subr.mxu0 0.0
  %1749 = vmatpush2.msra.mxu0 0.0
  %1750 = vmatprep.subr.mxu0 0.0
  %1751 = vmatpush2.msra.mxu0 0.0
  %1752 = vmatprep.subr.mxu0 0.0
  %1753 = vmatpush2.msra.mxu0 0.0
  %1754 = vmatprep.subr.mxu0 0.0
  %1755 = vmatpush2.msra.mxu0 0.0
  %1756 = vmatprep.subr.mxu0 0.0
  %1757 = vmatpush2.msra.mxu0 0.0
  %1758 = vmatprep.subr.mxu0 0.0
  %1759 = vmatpush2.msra.mxu0 0.0
  %1760 = vmatprep.subr.mxu0 0.0
  %1761 = vmatpush2.msra.mxu0 0.0
  %1762 = vmatprep.subr.mxu0 0.0
  %1763 = vmatpush2.msra.mxu0 0.0
  %1764 = vmatprep.subr.mxu0 0.0
  %1765 = vmatpush2.msra.mxu0 0.0
  %1766 = vmatprep.subr.mxu0 0.0
  %1767 = vmatpush2.msra.mxu0 0.0
  %1768 = vmatprep.subr.mxu0 0.0
  %1769 = vmatpush2.msra.mxu0 0.0
  %1770 = vmatprep.subr.mxu0 0.0
  %1771 = vmatpush2.msra.mxu0 0.0
  %1772 = vmatprep.mubr.f32.mxu0 0.0
  %1773 = vmatmul.mubr.f32.gmra.mxu0 %v1635
  %v1774 = vpop.f32.mrf.mxu0
  %v1775 = vadd.f32 0.0, %v1774
  %v1776 = vpop.f32.mrf.mxu0
  %1777 = vdwg.mxu0
  %v1778 = vadd.f32 %v1631, %v1775
  %1779 = vmatprep.subr.mxu0 0.0
  %1780 = vmatpush1.msra.mxu0 0.0
  %1781 = vmatprep.subr.mxu0 0.0
  %1782 = vmatpush1.msra.mxu0 0.0
  %1783 = vmatprep.subr.mxu0 0.0
  %1784 = vmatpush1.msra.mxu0 0.0
  %1785 = vmatprep.subr.mxu0 0.0
  %1786 = vmatpush1.msra.mxu0 0.0
  %1787 = vmatprep.subr.mxu0 0.0
  %1788 = vmatpush1.msra.mxu0 0.0
  %1789 = vmatprep.subr.mxu0 0.0
  %1790 = vmatpush1.msra.mxu0 0.0
  %1791 = vmatprep.subr.mxu0 0.0
  %1792 = vmatpush1.msra.mxu0 0.0
  %1793 = vmatprep.subr.mxu0 0.0
  %1794 = vmatpush1.msra.mxu0 0.0
  %1795 = vmatprep.subr.mxu0 0.0
  %1796 = vmatpush1.msra.mxu0 0.0
  %1797 = vmatprep.subr.mxu0 0.0
  %1798 = vmatpush1.msra.mxu0 0.0
  %1799 = vmatprep.subr.mxu0 0.0
  %1800 = vmatpush1.msra.mxu0 0.0
  %1801 = vmatprep.subr.mxu0 0.0
  %1802 = vmatpush1.msra.mxu0 0.0
  %1803 = vmatprep.subr.mxu0 0.0
  %1804 = vmatpush1.msra.mxu0 %v31
  %1805 = vmatprep.subr.mxu0 0.0
  %1806 = vmatpush1.msra.mxu0 %v30
  %1807 = vmatprep.subr.mxu0 0.0
  %1808 = vmatpush1.msra.mxu0 %v29
  %1809 = vmatprep.subr.mxu0 0.0
  %1810 = vmatpush1.msra.mxu0 %v28
  %1811 = vmatprep.subr.mxu0 0.0
  %1812 = vmatpush2.msra.mxu0 0.0
  %1813 = vmatprep.subr.mxu0 0.0
  %1814 = vmatpush2.msra.mxu0 0.0
  %1815 = vmatprep.subr.mxu0 0.0
  %1816 = vmatpush2.msra.mxu0 0.0
  %1817 = vmatprep.subr.mxu0 0.0
  %1818 = vmatpush2.msra.mxu0 0.0
  %1819 = vmatprep.subr.mxu0 0.0
  %1820 = vmatpush2.msra.mxu0 0.0
  %1821 = vmatprep.subr.mxu0 0.0
  %1822 = vmatpush2.msra.mxu0 0.0
  %1823 = vmatprep.subr.mxu0 0.0
  %1824 = vmatpush2.msra.mxu0 0.0
  %1825 = vmatprep.subr.mxu0 0.0
  %1826 = vmatpush2.msra.mxu0 0.0
  %1827 = vmatprep.subr.mxu0 0.0
  %1828 = vmatpush2.msra.mxu0 0.0
  %1829 = vmatprep.subr.mxu0 0.0
  %1830 = vmatpush2.msra.mxu0 0.0
  %1831 = vmatprep.subr.mxu0 0.0
  %1832 = vmatpush2.msra.mxu0 0.0
  %1833 = vmatprep.subr.mxu0 0.0
  %1834 = vmatpush2.msra.mxu0 0.0
  %1835 = vmatprep.subr.mxu0 0.0
  %1836 = vmatpush2.msra.mxu0 0.0
  %1837 = vmatprep.subr.mxu0 0.0
  %1838 = vmatpush2.msra.mxu0 0.0
  %1839 = vmatprep.subr.mxu0 0.0
  %1840 = vmatpush2.msra.mxu0 0.0
  %1841 = vmatprep.subr.mxu0 0.0
  %1842 = vmatpush2.msra.mxu0 0.0
  %1843 = vmatprep.mubr.f32.mxu0 0.0
  %1844 = vmatmul.mubr.f32.gmra.mxu0 %v1635
  %v1845 = vpop.f32.mrf.mxu0
  %v1846 = vadd.f32 0.0, %v1845
  %v1847 = vpop.f32.mrf.mxu0
  %1848 = vdwg.mxu0
  %v1849 = vadd.f32 %v1632, %v1846
  %1850 = vmatprep.subr.mxu0 0.0
  %1851 = vmatpush1.msra.mxu0 0.0
  %1852 = vmatprep.subr.mxu0 0.0
  %1853 = vmatpush1.msra.mxu0 0.0
  %1854 = vmatprep.subr.mxu0 0.0
  %1855 = vmatpush1.msra.mxu0 0.0
  %1856 = vmatprep.subr.mxu0 0.0
  %1857 = vmatpush1.msra.mxu0 0.0
  %1858 = vmatprep.subr.mxu0 0.0
  %1859 = vmatpush1.msra.mxu0 0.0
  %1860 = vmatprep.subr.mxu0 0.0
  %1861 = vmatpush1.msra.mxu0 0.0
  %1862 = vmatprep.subr.mxu0 0.0
  %1863 = vmatpush1.msra.mxu0 0.0
  %1864 = vmatprep.subr.mxu0 0.0
  %1865 = vmatpush1.msra.mxu0 0.0
  %1866 = vmatprep.subr.mxu0 0.0
  %1867 = vmatpush1.msra.mxu0 0.0
  %1868 = vmatprep.subr.mxu0 0.0
  %1869 = vmatpush1.msra.mxu0 0.0
  %1870 = vmatprep.subr.mxu0 0.0
  %1871 = vmatpush1.msra.mxu0 0.0
  %1872 = vmatprep.subr.mxu0 0.0
  %1873 = vmatpush1.msra.mxu0 0.0
  %1874 = vmatprep.subr.mxu0 0.0
  %1875 = vmatpush1.msra.mxu0 %v36
  %1876 = vmatprep.subr.mxu0 0.0
  %1877 = vmatpush1.msra.mxu0 %v35
  %1878 = vmatprep.subr.mxu0 0.0
  %1879 = vmatpush1.msra.mxu0 %v34
  %1880 = vmatprep.subr.mxu0 0.0
  %1881 = vmatpush1.msra.mxu0 %v33
  %1882 = vmatprep.subr.mxu0 0.0
  %1883 = vmatpush2.msra.mxu0 0.0
  %1884 = vmatprep.subr.mxu0 0.0
  %1885 = vmatpush2.msra.mxu0 0.0
  %1886 = vmatprep.subr.mxu0 0.0
  %1887 = vmatpush2.msra.mxu0 0.0
  %1888 = vmatprep.subr.mxu0 0.0
  %1889 = vmatpush2.msra.mxu0 0.0
  %1890 = vmatprep.subr.mxu0 0.0
  %1891 = vmatpush2.msra.mxu0 0.0
  %1892 = vmatprep.subr.mxu0 0.0
  %1893 = vmatpush2.msra.mxu0 0.0
  %1894 = vmatprep.subr.mxu0 0.0
  %1895 = vmatpush2.msra.mxu0 0.0
  %1896 = vmatprep.subr.mxu0 0.0
  %1897 = vmatpush2.msra.mxu0 0.0
  %1898 = vmatprep.subr.mxu0 0.0
  %1899 = vmatpush2.msra.mxu0 0.0
  %1900 = vmatprep.subr.mxu0 0.0
  %1901 = vmatpush2.msra.mxu0 0.0
  %1902 = vmatprep.subr.mxu0 0.0
  %1903 = vmatpush2.msra.mxu0 0.0
  %1904 = vmatprep.subr.mxu0 0.0
  %1905 = vmatpush2.msra.mxu0 0.0
  %1906 = vmatprep.subr.mxu0 0.0
  %1907 = vmatpush2.msra.mxu0 0.0
  %1908 = vmatprep.subr.mxu0 0.0
  %1909 = vmatpush2.msra.mxu0 0.0
  %1910 = vmatprep.subr.mxu0 0.0
  %1911 = vmatpush2.msra.mxu0 0.0
  %1912 = vmatprep.subr.mxu0 0.0
  %1913 = vmatpush2.msra.mxu0 0.0
  %1914 = vmatprep.mubr.f32.mxu0 0.0
  %1915 = vmatmul.mubr.f32.gmra.mxu0 %v1635
  %v1916 = vpop.f32.mrf.mxu0
  %v1917 = vadd.f32 0.0, %v1916
  %v1918 = vpop.f32.mrf.mxu0
  %1919 = vdwg.mxu0
  %v1920 = vadd.f32 %v1633, %v1917
  %v1921 = vxor.u32 %v1707, 2147483648
  %v1922 = vmul.f32 %v1921, 1.442695
  %v1923 = vpow.pop %v1922
  %v1924 = vadd.f32 %v1923, 1.0
  %v1925 = vrcp.pop %v1924
  %v1926 = vmul.f32 1.0, %v1925
  %v1927 = vxor.u32 %v1778, 2147483648
  %v1928 = vmul.f32 %v1927, 1.442695
  %v1929 = vpow.pop %v1928
  %v1930 = vadd.f32 %v1929, 1.0
  %v1931 = vrcp.pop %v1930
  %v1932 = vmul.f32 1.0, %v1931
  %v1933 = vtanh.pop %v1849
  %v1934 = vxor.u32 %v1920, 2147483648
  %v1935 = vmul.f32 %v1934, 1.442695
  %v1936 = vpow.pop %v1935
  %v1937 = vadd.f32 %v1936, 1.0
  %v1938 = vrcp.pop %v1937
  %v1939 = vmul.f32 1.0, %v1938
  %v1940 = vmul.f32 %v1932, %v1624
  %v1941 = vmul.f32 %v1926, %v1933
  %v1942 = vadd.f32 %v1940, %v1941
  %v1943 = vtanh.pop %v1942
  %v1944 = vmul.f32 %v1939, %v1943
  %s1945 = scalar_lea.vmem %s2, 10
  %1946 = vst.msk [vmem:[%s1945] sm:$0x3] %vm355, %v1944
  %s1947 = scalar_lea.vmem %s0, 48
  %v1948 = vld [vmem:[%s1947] sm:$0x3]
  %v1949 = vld [vmem:[%s1947 + $0x2] sm:$0x3]
  %v1950 = vld [vmem:[%s1947 + $0x4] sm:$0x3]
  %v1951 = vld [vmem:[%s1947 + $0x6] sm:$0x3]
  %v1953 = vsel %vm43, %v1944, 0
  %1955 = vmatprep.subr.mxu0 0.0
  %1956 = vmatpush1.msra.mxu0 0.0
  %1957 = vmatprep.subr.mxu0 0.0
  %1958 = vmatpush1.msra.mxu0 0.0
  %1959 = vmatprep.subr.mxu0 0.0
  %1960 = vmatpush1.msra.mxu0 0.0
  %1961 = vmatprep.subr.mxu0 0.0
  %1962 = vmatpush1.msra.mxu0 0.0
  %1963 = vmatprep.subr.mxu0 0.0
  %1964 = vmatpush1.msra.mxu0 0.0
  %1965 = vmatprep.subr.mxu0 0.0
  %1966 = vmatpush1.msra.mxu0 0.0
  %1967 = vmatprep.subr.mxu0 0.0
  %1968 = vmatpush1.msra.mxu0 0.0
  %1969 = vmatprep.subr.mxu0 0.0
  %1970 = vmatpush1.msra.mxu0 0.0
  %1971 = vmatprep.subr.mxu0 0.0
  %1972 = vmatpush1.msra.mxu0 0.0
  %1973 = vmatprep.subr.mxu0 0.0
  %1974 = vmatpush1.msra.mxu0 0.0
  %1975 = vmatprep.subr.mxu0 0.0
  %1976 = vmatpush1.msra.mxu0 0.0
  %1977 = vmatprep.subr.mxu0 0.0
  %1978 = vmatpush1.msra.mxu0 0.0
  %1979 = vmatprep.subr.mxu0 0.0
  %1980 = vmatpush1.msra.mxu0 %v21
  %1981 = vmatprep.subr.mxu0 0.0
  %1982 = vmatpush1.msra.mxu0 %v20
  %1983 = vmatprep.subr.mxu0 0.0
  %1984 = vmatpush1.msra.mxu0 %v19
  %1985 = vmatprep.subr.mxu0 0.0
  %1986 = vmatpush1.msra.mxu0 %v18
  %1987 = vmatprep.subr.mxu0 0.0
  %1988 = vmatpush2.msra.mxu0 0.0
  %1989 = vmatprep.subr.mxu0 0.0
  %1990 = vmatpush2.msra.mxu0 0.0
  %1991 = vmatprep.subr.mxu0 0.0
  %1992 = vmatpush2.msra.mxu0 0.0
  %1993 = vmatprep.subr.mxu0 0.0
  %1994 = vmatpush2.msra.mxu0 0.0
  %1995 = vmatprep.subr.mxu0 0.0
  %1996 = vmatpush2.msra.mxu0 0.0
  %1997 = vmatprep.subr.mxu0 0.0
  %1998 = vmatpush2.msra.mxu0 0.0
  %1999 = vmatprep.subr.mxu0 0.0
  %2000 = vmatpush2.msra.mxu0 0.0
  %2001 = vmatprep.subr.mxu0 0.0
  %2002 = vmatpush2.msra.mxu0 0.0
  %2003 = vmatprep.subr.mxu0 0.0
  %2004 = vmatpush2.msra.mxu0 0.0
  %2005 = vmatprep.subr.mxu0 0.0
  %2006 = vmatpush2.msra.mxu0 0.0
  %2007 = vmatprep.subr.mxu0 0.0
  %2008 = vmatpush2.msra.mxu0 0.0
  %2009 = vmatprep.subr.mxu0 0.0
  %2010 = vmatpush2.msra.mxu0 0.0
  %2011 = vmatprep.subr.mxu0 0.0
  %2012 = vmatpush2.msra.mxu0 0.0
  %2013 = vmatprep.subr.mxu0 0.0
  %2014 = vmatpush2.msra.mxu0 0.0
  %2015 = vmatprep.subr.mxu0 0.0
  %2016 = vmatpush2.msra.mxu0 0.0
  %2017 = vmatprep.subr.mxu0 0.0
  %2018 = vmatpush2.msra.mxu0 0.0
  %2019 = vmatprep.mubr.f32.mxu0 0.0
  %2020 = vmatmul.mubr.f32.gmra.mxu0 %v1953
  %v2021 = vpop.f32.mrf.mxu0
  %v2022 = vadd.f32 0.0, %v2021
  %v2023 = vpop.f32.mrf.mxu0
  %2024 = vdwg.mxu0
  %v2025 = vadd.f32 %v1948, %v2022
  %2026 = vmatprep.subr.mxu0 0.0
  %2027 = vmatpush1.msra.mxu0 0.0
  %2028 = vmatprep.subr.mxu0 0.0
  %2029 = vmatpush1.msra.mxu0 0.0
  %2030 = vmatprep.subr.mxu0 0.0
  %2031 = vmatpush1.msra.mxu0 0.0
  %2032 = vmatprep.subr.mxu0 0.0
  %2033 = vmatpush1.msra.mxu0 0.0
  %2034 = vmatprep.subr.mxu0 0.0
  %2035 = vmatpush1.msra.mxu0 0.0
  %2036 = vmatprep.subr.mxu0 0.0
  %2037 = vmatpush1.msra.mxu0 0.0
  %2038 = vmatprep.subr.mxu0 0.0
  %2039 = vmatpush1.msra.mxu0 0.0
  %2040 = vmatprep.subr.mxu0 0.0
  %2041 = vmatpush1.msra.mxu0 0.0
  %2042 = vmatprep.subr.mxu0 0.0
  %2043 = vmatpush1.msra.mxu0 0.0
  %2044 = vmatprep.subr.mxu0 0.0
  %2045 = vmatpush1.msra.mxu0 0.0
  %2046 = vmatprep.subr.mxu0 0.0
  %2047 = vmatpush1.msra.mxu0 0.0
  %2048 = vmatprep.subr.mxu0 0.0
  %2049 = vmatpush1.msra.mxu0 0.0
  %2050 = vmatprep.subr.mxu0 0.0
  %2051 = vmatpush1.msra.mxu0 %v26
  %2052 = vmatprep.subr.mxu0 0.0
  %2053 = vmatpush1.msra.mxu0 %v25
  %2054 = vmatprep.subr.mxu0 0.0
  %2055 = vmatpush1.msra.mxu0 %v24
  %2056 = vmatprep.subr.mxu0 0.0
  %2057 = vmatpush1.msra.mxu0 %v23
  %2058 = vmatprep.subr.mxu0 0.0
  %2059 = vmatpush2.msra.mxu0 0.0
  %2060 = vmatprep.subr.mxu0 0.0
  %2061 = vmatpush2.msra.mxu0 0.0
  %2062 = vmatprep.subr.mxu0 0.0
  %2063 = vmatpush2.msra.mxu0 0.0
  %2064 = vmatprep.subr.mxu0 0.0
  %2065 = vmatpush2.msra.mxu0 0.0
  %2066 = vmatprep.subr.mxu0 0.0
  %2067 = vmatpush2.msra.mxu0 0.0
  %2068 = vmatprep.subr.mxu0 0.0
  %2069 = vmatpush2.msra.mxu0 0.0
  %2070 = vmatprep.subr.mxu0 0.0
  %2071 = vmatpush2.msra.mxu0 0.0
  %2072 = vmatprep.subr.mxu0 0.0
  %2073 = vmatpush2.msra.mxu0 0.0
  %2074 = vmatprep.subr.mxu0 0.0
  %2075 = vmatpush2.msra.mxu0 0.0
  %2076 = vmatprep.subr.mxu0 0.0
  %2077 = vmatpush2.msra.mxu0 0.0
  %2078 = vmatprep.subr.mxu0 0.0
  %2079 = vmatpush2.msra.mxu0 0.0
  %2080 = vmatprep.subr.mxu0 0.0
  %2081 = vmatpush2.msra.mxu0 0.0
  %2082 = vmatprep.subr.mxu0 0.0
  %2083 = vmatpush2.msra.mxu0 0.0
  %2084 = vmatprep.subr.mxu0 0.0
  %2085 = vmatpush2.msra.mxu0 0.0
  %2086 = vmatprep.subr.mxu0 0.0
  %2087 = vmatpush2.msra.mxu0 0.0
  %2088 = vmatprep.subr.mxu0 0.0
  %2089 = vmatpush2.msra.mxu0 0.0
  %2090 = vmatprep.mubr.f32.mxu0 0.0
  %2091 = vmatmul.mubr.f32.gmra.mxu0 %v1953
  %v2092 = vpop.f32.mrf.mxu0
  %v2093 = vadd.f32 0.0, %v2092
  %v2094 = vpop.f32.mrf.mxu0
  %2095 = vdwg.mxu0
  %v2096 = vadd.f32 %v1949, %v2093
  %2097 = vmatprep.subr.mxu0 0.0
  %2098 = vmatpush1.msra.mxu0 0.0
  %2099 = vmatprep.subr.mxu0 0.0
  %2100 = vmatpush1.msra.mxu0 0.0
  %2101 = vmatprep.subr.mxu0 0.0
  %2102 = vmatpush1.msra.mxu0 0.0
  %2103 = vmatprep.subr.mxu0 0.0
  %2104 = vmatpush1.msra.mxu0 0.0
  %2105 = vmatprep.subr.mxu0 0.0
  %2106 = vmatpush1.msra.mxu0 0.0
  %2107 = vmatprep.subr.mxu0 0.0
  %2108 = vmatpush1.msra.mxu0 0.0
  %2109 = vmatprep.subr.mxu0 0.0
  %2110 = vmatpush1.msra.mxu0 0.0
  %2111 = vmatprep.subr.mxu0 0.0
  %2112 = vmatpush1.msra.mxu0 0.0
  %2113 = vmatprep.subr.mxu0 0.0
  %2114 = vmatpush1.msra.mxu0 0.0
  %2115 = vmatprep.subr.mxu0 0.0
  %2116 = vmatpush1.msra.mxu0 0.0
  %2117 = vmatprep.subr.mxu0 0.0
  %2118 = vmatpush1.msra.mxu0 0.0
  %2119 = vmatprep.subr.mxu0 0.0
  %2120 = vmatpush1.msra.mxu0 0.0
  %2121 = vmatprep.subr.mxu0 0.0
  %2122 = vmatpush1.msra.mxu0 %v31
  %2123 = vmatprep.subr.mxu0 0.0
  %2124 = vmatpush1.msra.mxu0 %v30
  %2125 = vmatprep.subr.mxu0 0.0
  %2126 = vmatpush1.msra.mxu0 %v29
  %2127 = vmatprep.subr.mxu0 0.0
  %2128 = vmatpush1.msra.mxu0 %v28
  %2129 = vmatprep.subr.mxu0 0.0
  %2130 = vmatpush2.msra.mxu0 0.0
  %2131 = vmatprep.subr.mxu0 0.0
  %2132 = vmatpush2.msra.mxu0 0.0
  %2133 = vmatprep.subr.mxu0 0.0
  %2134 = vmatpush2.msra.mxu0 0.0
  %2135 = vmatprep.subr.mxu0 0.0
  %2136 = vmatpush2.msra.mxu0 0.0
  %2137 = vmatprep.subr.mxu0 0.0
  %2138 = vmatpush2.msra.mxu0 0.0
  %2139 = vmatprep.subr.mxu0 0.0
  %2140 = vmatpush2.msra.mxu0 0.0
  %2141 = vmatprep.subr.mxu0 0.0
  %2142 = vmatpush2.msra.mxu0 0.0
  %2143 = vmatprep.subr.mxu0 0.0
  %2144 = vmatpush2.msra.mxu0 0.0
  %2145 = vmatprep.subr.mxu0 0.0
  %2146 = vmatpush2.msra.mxu0 0.0
  %2147 = vmatprep.subr.mxu0 0.0
  %2148 = vmatpush2.msra.mxu0 0.0
  %2149 = vmatprep.subr.mxu0 0.0
  %2150 = vmatpush2.msra.mxu0 0.0
  %2151 = vmatprep.subr.mxu0 0.0
  %2152 = vmatpush2.msra.mxu0 0.0
  %2153 = vmatprep.subr.mxu0 0.0
  %2154 = vmatpush2.msra.mxu0 0.0
  %2155 = vmatprep.subr.mxu0 0.0
  %2156 = vmatpush2.msra.mxu0 0.0
  %2157 = vmatprep.subr.mxu0 0.0
  %2158 = vmatpush2.msra.mxu0 0.0
  %2159 = vmatprep.subr.mxu0 0.0
  %2160 = vmatpush2.msra.mxu0 0.0
  %2161 = vmatprep.mubr.f32.mxu0 0.0
  %2162 = vmatmul.mubr.f32.gmra.mxu0 %v1953
  %v2163 = vpop.f32.mrf.mxu0
  %v2164 = vadd.f32 0.0, %v2163
  %v2165 = vpop.f32.mrf.mxu0
  %2166 = vdwg.mxu0
  %v2167 = vadd.f32 %v1950, %v2164
  %2168 = vmatprep.subr.mxu0 0.0
  %2169 = vmatpush1.msra.mxu0 0.0
  %2170 = vmatprep.subr.mxu0 0.0
  %2171 = vmatpush1.msra.mxu0 0.0
  %2172 = vmatprep.subr.mxu0 0.0
  %2173 = vmatpush1.msra.mxu0 0.0
  %2174 = vmatprep.subr.mxu0 0.0
  %2175 = vmatpush1.msra.mxu0 0.0
  %2176 = vmatprep.subr.mxu0 0.0
  %2177 = vmatpush1.msra.mxu0 0.0
  %2178 = vmatprep.subr.mxu0 0.0
  %2179 = vmatpush1.msra.mxu0 0.0
  %2180 = vmatprep.subr.mxu0 0.0
  %2181 = vmatpush1.msra.mxu0 0.0
  %2182 = vmatprep.subr.mxu0 0.0
  %2183 = vmatpush1.msra.mxu0 0.0
  %2184 = vmatprep.subr.mxu0 0.0
  %2185 = vmatpush1.msra.mxu0 0.0
  %2186 = vmatprep.subr.mxu0 0.0
  %2187 = vmatpush1.msra.mxu0 0.0
  %2188 = vmatprep.subr.mxu0 0.0
  %2189 = vmatpush1.msra.mxu0 0.0
  %2190 = vmatprep.subr.mxu0 0.0
  %2191 = vmatpush1.msra.mxu0 0.0
  %2192 = vmatprep.subr.mxu0 0.0
  %2193 = vmatpush1.msra.mxu0 %v36
  %2194 = vmatprep.subr.mxu0 0.0
  %2195 = vmatpush1.msra.mxu0 %v35
  %2196 = vmatprep.subr.mxu0 0.0
  %2197 = vmatpush1.msra.mxu0 %v34
  %2198 = vmatprep.subr.mxu0 0.0
  %2199 = vmatpush1.msra.mxu0 %v33
  %2200 = vmatprep.subr.mxu0 0.0
  %2201 = vmatpush2.msra.mxu0 0.0
  %2202 = vmatprep.subr.mxu0 0.0
  %2203 = vmatpush2.msra.mxu0 0.0
  %2204 = vmatprep.subr.mxu0 0.0
  %2205 = vmatpush2.msra.mxu0 0.0
  %2206 = vmatprep.subr.mxu0 0.0
  %2207 = vmatpush2.msra.mxu0 0.0
  %2208 = vmatprep.subr.mxu0 0.0
  %2209 = vmatpush2.msra.mxu0 0.0
  %2210 = vmatprep.subr.mxu0 0.0
  %2211 = vmatpush2.msra.mxu0 0.0
  %2212 = vmatprep.subr.mxu0 0.0
  %2213 = vmatpush2.msra.mxu0 0.0
  %2214 = vmatprep.subr.mxu0 0.0
  %2215 = vmatpush2.msra.mxu0 0.0
  %2216 = vmatprep.subr.mxu0 0.0
  %2217 = vmatpush2.msra.mxu0 0.0
  %2218 = vmatprep.subr.mxu0 0.0
  %2219 = vmatpush2.msra.mxu0 0.0
  %2220 = vmatprep.subr.mxu0 0.0
  %2221 = vmatpush2.msra.mxu0 0.0
  %2222 = vmatprep.subr.mxu0 0.0
  %2223 = vmatpush2.msra.mxu0 0.0
  %2224 = vmatprep.subr.mxu0 0.0
  %2225 = vmatpush2.msra.mxu0 0.0
  %2226 = vmatprep.subr.mxu0 0.0
  %2227 = vmatpush2.msra.mxu0 0.0
  %2228 = vmatprep.subr.mxu0 0.0
  %2229 = vmatpush2.msra.mxu0 0.0
  %2230 = vmatprep.subr.mxu0 0.0
  %2231 = vmatpush2.msra.mxu0 0.0
  %2232 = vmatprep.mubr.f32.mxu0 0.0
  %2233 = vmatmul.mubr.f32.gmra.mxu0 %v1953
  %v2234 = vpop.f32.mrf.mxu0
  %v2235 = vadd.f32 0.0, %v2234
  %v2236 = vpop.f32.mrf.mxu0
  %2237 = vdwg.mxu0
  %v2238 = vadd.f32 %v1951, %v2235
  %v2239 = vxor.u32 %v2025, 2147483648
  %v2240 = vmul.f32 %v2239, 1.442695
  %v2241 = vpow.pop %v2240
  %v2242 = vadd.f32 %v2241, 1.0
  %v2243 = vrcp.pop %v2242
  %v2244 = vmul.f32 1.0, %v2243
  %v2245 = vxor.u32 %v2096, 2147483648
  %v2246 = vmul.f32 %v2245, 1.442695
  %v2247 = vpow.pop %v2246
  %v2248 = vadd.f32 %v2247, 1.0
  %v2249 = vrcp.pop %v2248
  %v2250 = vmul.f32 1.0, %v2249
  %v2251 = vtanh.pop %v2167
  %v2252 = vxor.u32 %v2238, 2147483648
  %v2253 = vmul.f32 %v2252, 1.442695
  %v2254 = vpow.pop %v2253
  %v2255 = vadd.f32 %v2254, 1.0
  %v2256 = vrcp.pop %v2255
  %v2257 = vmul.f32 1.0, %v2256
  %v2258 = vmul.f32 %v2250, %v1942
  %v2259 = vmul.f32 %v2244, %v2251
  %v2260 = vadd.f32 %v2258, %v2259
  %v2261 = vtanh.pop %v2260
  %v2262 = vmul.f32 %v2257, %v2261
  %s2263 = scalar_lea.vmem %s2, 12
  %2264 = vst.msk [vmem:[%s2263] sm:$0x3] %vm355, %v2262
  %s2265 = scalar_lea.vmem %s0, 56
  %v2266 = vld [vmem:[%s2265] sm:$0x3]
  %v2267 = vld [vmem:[%s2265 + $0x2] sm:$0x3]
  %v2268 = vld [vmem:[%s2265 + $0x4] sm:$0x3]
  %v2269 = vld [vmem:[%s2265 + $0x6] sm:$0x3]
  %v2271 = vsel %vm43, %v2262, 0
  %2273 = vmatprep.subr.mxu0 0.0
  %2274 = vmatpush1.msra.mxu0 0.0
  %2275 = vmatprep.subr.mxu0 0.0
  %2276 = vmatpush1.msra.mxu0 0.0
  %2277 = vmatprep.subr.mxu0 0.0
  %2278 = vmatpush1.msra.mxu0 0.0
  %2279 = vmatprep.subr.mxu0 0.0
  %2280 = vmatpush1.msra.mxu0 0.0
  %2281 = vmatprep.subr.mxu0 0.0
  %2282 = vmatpush1.msra.mxu0 0.0
  %2283 = vmatprep.subr.mxu0 0.0
  %2284 = vmatpush1.msra.mxu0 0.0
  %2285 = vmatprep.subr.mxu0 0.0
  %2286 = vmatpush1.msra.mxu0 0.0
  %2287 = vmatprep.subr.mxu0 0.0
  %2288 = vmatpush1.msra.mxu0 0.0
  %2289 = vmatprep.subr.mxu0 0.0
  %2290 = vmatpush1.msra.mxu0 0.0
  %2291 = vmatprep.subr.mxu0 0.0
  %2292 = vmatpush1.msra.mxu0 0.0
  %2293 = vmatprep.subr.mxu0 0.0
  %2294 = vmatpush1.msra.mxu0 0.0
  %2295 = vmatprep.subr.mxu0 0.0
  %2296 = vmatpush1.msra.mxu0 0.0
  %2297 = vmatprep.subr.mxu0 0.0
  %2298 = vmatpush1.msra.mxu0 %v21
  %2299 = vmatprep.subr.mxu0 0.0
  %2300 = vmatpush1.msra.mxu0 %v20
  %2301 = vmatprep.subr.mxu0 0.0
  %2302 = vmatpush1.msra.mxu0 %v19
  %2303 = vmatprep.subr.mxu0 0.0
  %2304 = vmatpush1.msra.mxu0 %v18
  %2305 = vmatprep.subr.mxu0 0.0
  %2306 = vmatpush2.msra.mxu0 0.0
  %2307 = vmatprep.subr.mxu0 0.0
  %2308 = vmatpush2.msra.mxu0 0.0
  %2309 = vmatprep.subr.mxu0 0.0
  %2310 = vmatpush2.msra.mxu0 0.0
  %2311 = vmatprep.subr.mxu0 0.0
  %2312 = vmatpush2.msra.mxu0 0.0
  %2313 = vmatprep.subr.mxu0 0.0
  %2314 = vmatpush2.msra.mxu0 0.0
  %2315 = vmatprep.subr.mxu0 0.0
  %2316 = vmatpush2.msra.mxu0 0.0
  %2317 = vmatprep.subr.mxu0 0.0
  %2318 = vmatpush2.msra.mxu0 0.0
  %2319 = vmatprep.subr.mxu0 0.0
  %2320 = vmatpush2.msra.mxu0 0.0
  %2321 = vmatprep.subr.mxu0 0.0
  %2322 = vmatpush2.msra.mxu0 0.0
  %2323 = vmatprep.subr.mxu0 0.0
  %2324 = vmatpush2.msra.mxu0 0.0
  %2325 = vmatprep.subr.mxu0 0.0
  %2326 = vmatpush2.msra.mxu0 0.0
  %2327 = vmatprep.subr.mxu0 0.0
  %2328 = vmatpush2.msra.mxu0 0.0
  %2329 = vmatprep.subr.mxu0 0.0
  %2330 = vmatpush2.msra.mxu0 0.0
  %2331 = vmatprep.subr.mxu0 0.0
  %2332 = vmatpush2.msra.mxu0 0.0
  %2333 = vmatprep.subr.mxu0 0.0
  %2334 = vmatpush2.msra.mxu0 0.0
  %2335 = vmatprep.subr.mxu0 0.0
  %2336 = vmatpush2.msra.mxu0 0.0
  %2337 = vmatprep.mubr.f32.mxu0 0.0
  %2338 = vmatmul.mubr.f32.gmra.mxu0 %v2271
  %v2339 = vpop.f32.mrf.mxu0
  %v2340 = vadd.f32 0.0, %v2339
  %v2341 = vpop.f32.mrf.mxu0
  %2342 = vdwg.mxu0
  %v2343 = vadd.f32 %v2266, %v2340
  %2344 = vmatprep.subr.mxu0 0.0
  %2345 = vmatpush1.msra.mxu0 0.0
  %2346 = vmatprep.subr.mxu0 0.0
  %2347 = vmatpush1.msra.mxu0 0.0
  %2348 = vmatprep.subr.mxu0 0.0
  %2349 = vmatpush1.msra.mxu0 0.0
  %2350 = vmatprep.subr.mxu0 0.0
  %2351 = vmatpush1.msra.mxu0 0.0
  %2352 = vmatprep.subr.mxu0 0.0
  %2353 = vmatpush1.msra.mxu0 0.0
  %2354 = vmatprep.subr.mxu0 0.0
  %2355 = vmatpush1.msra.mxu0 0.0
  %2356 = vmatprep.subr.mxu0 0.0
  %2357 = vmatpush1.msra.mxu0 0.0
  %2358 = vmatprep.subr.mxu0 0.0
  %2359 = vmatpush1.msra.mxu0 0.0
  %2360 = vmatprep.subr.mxu0 0.0
  %2361 = vmatpush1.msra.mxu0 0.0
  %2362 = vmatprep.subr.mxu0 0.0
  %2363 = vmatpush1.msra.mxu0 0.0
  %2364 = vmatprep.subr.mxu0 0.0
  %2365 = vmatpush1.msra.mxu0 0.0
  %2366 = vmatprep.subr.mxu0 0.0
  %2367 = vmatpush1.msra.mxu0 0.0
  %2368 = vmatprep.subr.mxu0 0.0
  %2369 = vmatpush1.msra.mxu0 %v26
  %2370 = vmatprep.subr.mxu0 0.0
  %2371 = vmatpush1.msra.mxu0 %v25
  %2372 = vmatprep.subr.mxu0 0.0
  %2373 = vmatpush1.msra.mxu0 %v24
  %2374 = vmatprep.subr.mxu0 0.0
  %2375 = vmatpush1.msra.mxu0 %v23
  %2376 = vmatprep.subr.mxu0 0.0
  %2377 = vmatpush2.msra.mxu0 0.0
  %2378 = vmatprep.subr.mxu0 0.0
  %2379 = vmatpush2.msra.mxu0 0.0
  %2380 = vmatprep.subr.mxu0 0.0
  %2381 = vmatpush2.msra.mxu0 0.0
  %2382 = vmatprep.subr.mxu0 0.0
  %2383 = vmatpush2.msra.mxu0 0.0
  %2384 = vmatprep.subr.mxu0 0.0
  %2385 = vmatpush2.msra.mxu0 0.0
  %2386 = vmatprep.subr.mxu0 0.0
  %2387 = vmatpush2.msra.mxu0 0.0
  %2388 = vmatprep.subr.mxu0 0.0
  %2389 = vmatpush2.msra.mxu0 0.0
  %2390 = vmatprep.subr.mxu0 0.0
  %2391 = vmatpush2.msra.mxu0 0.0
  %2392 = vmatprep.subr.mxu0 0.0
  %2393 = vmatpush2.msra.mxu0 0.0
  %2394 = vmatprep.subr.mxu0 0.0
  %2395 = vmatpush2.msra.mxu0 0.0
  %2396 = vmatprep.subr.mxu0 0.0
  %2397 = vmatpush2.msra.mxu0 0.0
  %2398 = vmatprep.subr.mxu0 0.0
  %2399 = vmatpush2.msra.mxu0 0.0
  %2400 = vmatprep.subr.mxu0 0.0
  %2401 = vmatpush2.msra.mxu0 0.0
  %2402 = vmatprep.subr.mxu0 0.0
  %2403 = vmatpush2.msra.mxu0 0.0
  %2404 = vmatprep.subr.mxu0 0.0
  %2405 = vmatpush2.msra.mxu0 0.0
  %2406 = vmatprep.subr.mxu0 0.0
  %2407 = vmatpush2.msra.mxu0 0.0
  %2408 = vmatprep.mubr.f32.mxu0 0.0
  %2409 = vmatmul.mubr.f32.gmra.mxu0 %v2271
  %v2410 = vpop.f32.mrf.mxu0
  %v2411 = vadd.f32 0.0, %v2410
  %v2412 = vpop.f32.mrf.mxu0
  %2413 = vdwg.mxu0
  %v2414 = vadd.f32 %v2267, %v2411
  %2415 = vmatprep.subr.mxu0 0.0
  %2416 = vmatpush1.msra.mxu0 0.0
  %2417 = vmatprep.subr.mxu0 0.0
  %2418 = vmatpush1.msra.mxu0 0.0
  %2419 = vmatprep.subr.mxu0 0.0
  %2420 = vmatpush1.msra.mxu0 0.0
  %2421 = vmatprep.subr.mxu0 0.0
  %2422 = vmatpush1.msra.mxu0 0.0
  %2423 = vmatprep.subr.mxu0 0.0
  %2424 = vmatpush1.msra.mxu0 0.0
  %2425 = vmatprep.subr.mxu0 0.0
  %2426 = vmatpush1.msra.mxu0 0.0
  %2427 = vmatprep.subr.mxu0 0.0
  %2428 = vmatpush1.msra.mxu0 0.0
  %2429 = vmatprep.subr.mxu0 0.0
  %2430 = vmatpush1.msra.mxu0 0.0
  %2431 = vmatprep.subr.mxu0 0.0
  %2432 = vmatpush1.msra.mxu0 0.0
  %2433 = vmatprep.subr.mxu0 0.0
  %2434 = vmatpush1.msra.mxu0 0.0
  %2435 = vmatprep.subr.mxu0 0.0
  %2436 = vmatpush1.msra.mxu0 0.0
  %2437 = vmatprep.subr.mxu0 0.0
  %2438 = vmatpush1.msra.mxu0 0.0
  %2439 = vmatprep.subr.mxu0 0.0
  %2440 = vmatpush1.msra.mxu0 %v31
  %2441 = vmatprep.subr.mxu0 0.0
  %2442 = vmatpush1.msra.mxu0 %v30
  %2443 = vmatprep.subr.mxu0 0.0
  %2444 = vmatpush1.msra.mxu0 %v29
  %2445 = vmatprep.subr.mxu0 0.0
  %2446 = vmatpush1.msra.mxu0 %v28
  %2447 = vmatprep.subr.mxu0 0.0
  %2448 = vmatpush2.msra.mxu0 0.0
  %2449 = vmatprep.subr.mxu0 0.0
  %2450 = vmatpush2.msra.mxu0 0.0
  %2451 = vmatprep.subr.mxu0 0.0
  %2452 = vmatpush2.msra.mxu0 0.0
  %2453 = vmatprep.subr.mxu0 0.0
  %2454 = vmatpush2.msra.mxu0 0.0
  %2455 = vmatprep.subr.mxu0 0.0
  %2456 = vmatpush2.msra.mxu0 0.0
  %2457 = vmatprep.subr.mxu0 0.0
  %2458 = vmatpush2.msra.mxu0 0.0
  %2459 = vmatprep.subr.mxu0 0.0
  %2460 = vmatpush2.msra.mxu0 0.0
  %2461 = vmatprep.subr.mxu0 0.0
  %2462 = vmatpush2.msra.mxu0 0.0
  %2463 = vmatprep.subr.mxu0 0.0
  %2464 = vmatpush2.msra.mxu0 0.0
  %2465 = vmatprep.subr.mxu0 0.0
  %2466 = vmatpush2.msra.mxu0 0.0
  %2467 = vmatprep.subr.mxu0 0.0
  %2468 = vmatpush2.msra.mxu0 0.0
  %2469 = vmatprep.subr.mxu0 0.0
  %2470 = vmatpush2.msra.mxu0 0.0
  %2471 = vmatprep.subr.mxu0 0.0
  %2472 = vmatpush2.msra.mxu0 0.0
  %2473 = vmatprep.subr.mxu0 0.0
  %2474 = vmatpush2.msra.mxu0 0.0
  %2475 = vmatprep.subr.mxu0 0.0
  %2476 = vmatpush2.msra.mxu0 0.0
  %2477 = vmatprep.subr.mxu0 0.0
  %2478 = vmatpush2.msra.mxu0 0.0
  %2479 = vmatprep.mubr.f32.mxu0 0.0
  %2480 = vmatmul.mubr.f32.gmra.mxu0 %v2271
  %v2481 = vpop.f32.mrf.mxu0
  %v2482 = vadd.f32 0.0, %v2481
  %v2483 = vpop.f32.mrf.mxu0
  %2484 = vdwg.mxu0
  %v2485 = vadd.f32 %v2268, %v2482
  %2486 = vmatprep.subr.mxu0 0.0
  %2487 = vmatpush1.msra.mxu0 0.0
  %2488 = vmatprep.subr.mxu0 0.0
  %2489 = vmatpush1.msra.mxu0 0.0
  %2490 = vmatprep.subr.mxu0 0.0
  %2491 = vmatpush1.msra.mxu0 0.0
  %2492 = vmatprep.subr.mxu0 0.0
  %2493 = vmatpush1.msra.mxu0 0.0
  %2494 = vmatprep.subr.mxu0 0.0
  %2495 = vmatpush1.msra.mxu0 0.0
  %2496 = vmatprep.subr.mxu0 0.0
  %2497 = vmatpush1.msra.mxu0 0.0
  %2498 = vmatprep.subr.mxu0 0.0
  %2499 = vmatpush1.msra.mxu0 0.0
  %2500 = vmatprep.subr.mxu0 0.0
  %2501 = vmatpush1.msra.mxu0 0.0
  %2502 = vmatprep.subr.mxu0 0.0
  %2503 = vmatpush1.msra.mxu0 0.0
  %2504 = vmatprep.subr.mxu0 0.0
  %2505 = vmatpush1.msra.mxu0 0.0
  %2506 = vmatprep.subr.mxu0 0.0
  %2507 = vmatpush1.msra.mxu0 0.0
  %2508 = vmatprep.subr.mxu0 0.0
  %2509 = vmatpush1.msra.mxu0 0.0
  %2510 = vmatprep.subr.mxu0 0.0
  %2511 = vmatpush1.msra.mxu0 %v36
  %2512 = vmatprep.subr.mxu0 0.0
  %2513 = vmatpush1.msra.mxu0 %v35
  %2514 = vmatprep.subr.mxu0 0.0
  %2515 = vmatpush1.msra.mxu0 %v34
  %2516 = vmatprep.subr.mxu0 0.0
  %2517 = vmatpush1.msra.mxu0 %v33
  %2518 = vmatprep.subr.mxu0 0.0
  %2519 = vmatpush2.msra.mxu0 0.0
  %2520 = vmatprep.subr.mxu0 0.0
  %2521 = vmatpush2.msra.mxu0 0.0
  %2522 = vmatprep.subr.mxu0 0.0
  %2523 = vmatpush2.msra.mxu0 0.0
  %2524 = vmatprep.subr.mxu0 0.0
  %2525 = vmatpush2.msra.mxu0 0.0
  %2526 = vmatprep.subr.mxu0 0.0
  %2527 = vmatpush2.msra.mxu0 0.0
  %2528 = vmatprep.subr.mxu0 0.0
  %2529 = vmatpush2.msra.mxu0 0.0
  %2530 = vmatprep.subr.mxu0 0.0
  %2531 = vmatpush2.msra.mxu0 0.0
  %2532 = vmatprep.subr.mxu0 0.0
  %2533 = vmatpush2.msra.mxu0 0.0
  %2534 = vmatprep.subr.mxu0 0.0
  %2535 = vmatpush2.msra.mxu0 0.0
  %2536 = vmatprep.subr.mxu0 0.0
  %2537 = vmatpush2.msra.mxu0 0.0
  %2538 = vmatprep.subr.mxu0 0.0
  %2539 = vmatpush2.msra.mxu0 0.0
  %2540 = vmatprep.subr.mxu0 0.0
  %2541 = vmatpush2.msra.mxu0 0.0
  %2542 = vmatprep.subr.mxu0 0.0
  %2543 = vmatpush2.msra.mxu0 0.0
  %2544 = vmatprep.subr.mxu0 0.0
  %2545 = vmatpush2.msra.mxu0 0.0
  %2546 = vmatprep.subr.mxu0 0.0
  %2547 = vmatpush2.msra.mxu0 0.0
  %2548 = vmatprep.subr.mxu0 0.0
  %2549 = vmatpush2.msra.mxu0 0.0
  %2550 = vmatprep.mubr.f32.mxu0 0.0
  %2551 = vmatmul.mubr.f32.gmra.mxu0 %v2271
  %v2552 = vpop.f32.mrf.mxu0
  %v2553 = vadd.f32 0.0, %v2552
  %v2554 = vpop.f32.mrf.mxu0
  %2555 = vdwg.mxu0
  %v2556 = vadd.f32 %v2269, %v2553
  %v2557 = vxor.u32 %v2343, 2147483648
  %v2558 = vmul.f32 %v2557, 1.442695
  %v2559 = vpow.pop %v2558
  %v2560 = vadd.f32 %v2559, 1.0
  %v2561 = vrcp.pop %v2560
  %v2562 = vmul.f32 1.0, %v2561
  %v2563 = vxor.u32 %v2414, 2147483648
  %v2564 = vmul.f32 %v2563, 1.442695
  %v2565 = vpow.pop %v2564
  %v2566 = vadd.f32 %v2565, 1.0
  %v2567 = vrcp.pop %v2566
  %v2568 = vmul.f32 1.0, %v2567
  %v2569 = vtanh.pop %v2485
  %v2570 = vxor.u32 %v2556, 2147483648
  %v2571 = vmul.f32 %v2570, 1.442695
  %v2572 = vpow.pop %v2571
  %v2573 = vadd.f32 %v2572, 1.0
  %v2574 = vrcp.pop %v2573
  %v2575 = vmul.f32 1.0, %v2574
  %v2576 = vmul.f32 %v2568, %v2260
  %v2577 = vmul.f32 %v2562, %v2569
  %v2578 = vadd.f32 %v2576, %v2577
  %v2579 = vtanh.pop %v2578
  %v2580 = vmul.f32 %v2575, %v2579
  %s2581 = scalar_lea.vmem %s2, 14
  %2582 = vst.msk [vmem:[%s2581] sm:$0x3] %vm355, %v2580
  %2583 = vst.msk [vmem:[#allocation2] sm:$0x3] %vm355, %v2580
  %2584 = vst.msk [vmem:[#allocation3] sm:$0x3] %vm355, %v2578
  // Predicated region
  $region14: #{encoder_forward.2} parent=0 // pred_check
    _
  $region15: #{encoder_forward.2} parent=0 // pred_check_branch
    %2586 = sbr.rel (0) target = $region17
  $region16: #{encoder_forward.2} parent=0 // pred_region
    _
  $region17: #{encoder_forward.2} parent=0 // pred_fallthru
    _
  // Predicated region
  $region18: #{encoder_forward.2} parent=0 // pred_check
    _
  $region19: #{encoder_forward.2} parent=0 // pred_check_branch
    %2588 = sbr.rel (0) target = $region21
  $region20: #{encoder_forward.2} parent=0 // pred_region
    _
  $region21: #{encoder_forward.2} parent=0 // pred_fallthru
    _

</llo_original>
